<compile_context>
chip_gen: v5e
topology: v5e:2x2
jax: 0.10.0
libtpu: 0.0.40
codegen_flags: <defaults>
</compile_context>

<pallas_src>
import functools

import jax
import jax.numpy as jnp
from jax import lax
from jax.experimental import pallas as pl
from jax.experimental.pallas import tpu as pltpu


# ---------------------------------------------------------------------------
# Helpers
# ---------------------------------------------------------------------------
def _pick_tile(n):
    """Largest lane-dense N tile (multiple of 128) dividing N, else the full N."""
    for t in (2048, 1024, 512, 256, 128):
        if n % t == 0:
            return t
    return n


def _vmem_limit(block_elems):
    """Scoped-VMEM request sized from the actual (double-buffered) f32 blocks."""
    byts = 4 * 2 * int(sum(block_elems)) + (8 << 20)   # blocks x2 + scratch headroom
    return int(min(max(byts, 8 << 20), 64 << 20))


# ---------------------------------------------------------------------------
# Kernel 1: gamma (responsibilities) + sufficient statistics.
#   gamma = softmax(tanh(x @ W1 + b1) @ W2 + b2)        (softmax over K)
#   gamma_sum[k] = sum_n gamma[n, k]
#   sgx[k, d]    = sum_n gamma[n, k] * x[n, d]
# Transposed layout: xt (D, TN), gamma_t (K, TN); gsum / sgx are grid
# accumulators (constant output block index across the N axis).
# ---------------------------------------------------------------------------
def _gamma_stats_kernel(xt_ref, w1t_ref, b1_ref, w2t_ref, b2_ref,
                        gammat_ref, gsum_ref, sgx_ref):
    i = pl.program_id(0)
    xt = xt_ref[...]                                                   # (D, TN)
    hid = jnp.tanh(
        jnp.dot(w1t_ref[...], xt, preferred_element_type=jnp.float32)
        + b1_ref[...])                                                 # (H, TN)
    # nn.Dropout is identity at inference (p irrelevant in eval).
    logits = (jnp.dot(w2t_ref[...], hid, preferred_element_type=jnp.float32)
              + b2_ref[...])                                           # (K, TN)
    # torch nn.Softmax() on a 2-D input defaults to the component axis.
    m = jnp.max(logits, axis=0, keepdims=True)                         # (1, TN)
    e = jnp.exp(logits - m)
    gamma_t = e / jnp.sum(e, axis=0, keepdims=True)                    # (K, TN)
    gammat_ref[...] = gamma_t

    @pl.when(i == 0)
    def _init():
        gsum_ref[...] = jnp.zeros_like(gsum_ref)
        sgx_ref[...] = jnp.zeros_like(sgx_ref)

    gsum_ref[...] += jnp.sum(gamma_t, axis=1, keepdims=True)           # (K, 1)
    # sum_n gamma[n,k] x[n,d]  == gamma_t @ xt^T  (contraction over the N tile)
    sgx_ref[...] += lax.dot_general(gamma_t, xt, (((1,), (1,)), ((), ())),
                                    preferred_element_type=jnp.float32)  # (K, D)


def gamma_stats(xt, W1, b1, W2, b2, tn):
    D, N = xt.shape
    H = W1.shape[1]
    K = W2.shape[1]
    w1t = jnp.transpose(W1)            # (H, D)
    w2t = jnp.transpose(W2)            # (K, H)
    b1c = b1.reshape(H, 1)
    b2c = b2.reshape(K, 1)
    blocks = (D * tn, H * D, H, K * H, K, K * tn, K, K * D)
    return pl.pallas_call(
        _gamma_stats_kernel,
        out_shape=(
            jax.ShapeDtypeStruct((K, N), jnp.float32),   # gamma (transposed)
            jax.ShapeDtypeStruct((K, 1), jnp.float32),   # gamma_sum
            jax.ShapeDtypeStruct((K, D), jnp.float32),   # sum_n gamma * x
        ),
        grid=(N // tn,),
        in_specs=[
            pl.BlockSpec((D, tn), lambda i: (0, i)),
            pl.BlockSpec((H, D), lambda i: (0, 0)),
            pl.BlockSpec((H, 1), lambda i: (0, 0)),
            pl.BlockSpec((K, H), lambda i: (0, 0)),
            pl.BlockSpec((K, 1), lambda i: (0, 0)),
        ],
        out_specs=(
            pl.BlockSpec((K, tn), lambda i: (0, i)),
            pl.BlockSpec((K, 1), lambda i: (0, 0)),
            pl.BlockSpec((K, D), lambda i: (0, 0)),
        ),
        compiler_params=pltpu.CompilerParams(
            dimension_semantics=("arbitrary",),          # accumulators over N tiles
            vmem_limit_bytes=_vmem_limit(blocks),
        ),
    )(xt, w1t, b1c, w2t, b2c)


# ---------------------------------------------------------------------------
# Kernel 2: weighted scatter matrices (numerator of sigma).
#   sig[k] = sum_n gamma[n,k] (x_n - mu_k)(x_n - mu_k)^T     (K*D, D) flat output
# ---------------------------------------------------------------------------
def _sigma_kernel(xt_ref, gammat_ref, mut_ref, sig_ref, *, K, D):
    i = pl.program_id(0)

    @pl.when(i == 0)
    def _init():
        sig_ref[...] = jnp.zeros_like(sig_ref)

    xt = xt_ref[...]                                                   # (D, TN)
    gamma_t = gammat_ref[...]                                          # (K, TN)
    for k in range(K):                                                 # K is tiny
        z = xt - mut_ref[:, k:k + 1]                                   # (D, TN)
        wz = z * gamma_t[k:k + 1, :]                                   # (D, TN)
        contrib = lax.dot_general(wz, z, (((1,), (1,)), ((), ())),
                                  preferred_element_type=jnp.float32)  # (D, D)
        sig_ref[k * D:(k + 1) * D, :] = sig_ref[k * D:(k + 1) * D, :] + contrib


def sigma_accum(xt, gamma_t, mut, tn):
    D, N = xt.shape
    K = gamma_t.shape[0]
    blocks = (D * tn, K * tn, D * K, K * D * D)
    return pl.pallas_call(
        functools.partial(_sigma_kernel, K=K, D=D),
        out_shape=jax.ShapeDtypeStruct((K * D, D), jnp.float32),
        grid=(N // tn,),
        in_specs=[
            pl.BlockSpec((D, tn), lambda i: (0, i)),
            pl.BlockSpec((K, tn), lambda i: (0, i)),
            pl.BlockSpec((D, K), lambda i: (0, 0)),
        ],
        out_specs=pl.BlockSpec((K * D, D), lambda i: (0, 0)),
        compiler_params=pltpu.CompilerParams(
            dimension_semantics=("arbitrary",),          # accumulator over N tiles
            vmem_limit_bytes=_vmem_limit(blocks),
        ),
    )(xt, gamma_t, mut)


# ---------------------------------------------------------------------------
# Kernel 3: sample energy + final loss (lane-dense (1, N) output).
#   quad[k, n]   = (x_n - mu_k)^T Sigma_k^{-1} (x_n - mu_k)
#   e[k, n]      = -0.5 * quad
#   max_val[n]   = max_k max(e, 0)
#   energy[n]    = -max_val - log(sum_k (phi_k / sqrt(det_k)) * exp(e - max_val) + eps)
#   out[n]       = lambda_energy * energy + lambda_sigma * sigma_diag
# ---------------------------------------------------------------------------
def _energy_kernel(xt_ref, mut_ref, inv_ref, coef_ref, bias_ref, out_ref,
                   *, K, D, eps, lam_e):
    xt = xt_ref[...]                                                   # (D, TN)
    quads = []
    for k in range(K):
        z = xt - mut_ref[:, k:k + 1]                                   # (D, TN)
        inv_k = inv_ref[k * D:(k + 1) * D, :]                          # (D, D)
        t = jnp.dot(inv_k, z, preferred_element_type=jnp.float32)      # (D, TN)
        quads.append(-0.5 * jnp.sum(t * z, axis=0, keepdims=True))     # (1, TN)

    # clamp(min=0) folded into the zero init of the running max
    max_val = jnp.zeros_like(quads[0])
    for q in quads:
        max_val = jnp.maximum(max_val, q)

    mix = jnp.zeros_like(max_val)
    for k in range(K):
        mix = mix + coef_ref[k:k + 1, :] * jnp.exp(quads[k] - max_val)

    energy = -max_val - jnp.log(mix + eps)
    out_ref[...] = lam_e * energy + bias_ref[...]


def energy_loss(xt, mut, inv2d, coef, bias, lam_e, eps, tn):
    D, N = xt.shape
    K = coef.shape[0]
    blocks = (D * tn, D * K, K * D * D, K, 1, tn)
    return pl.pallas_call(
        functools.partial(_energy_kernel, K=K, D=D, eps=eps, lam_e=lam_e),
        out_shape=jax.ShapeDtypeStruct((1, N), jnp.float32),
        grid=(N // tn,),
        in_specs=[
            pl.BlockSpec((D, tn), lambda i: (0, i)),
            pl.BlockSpec((D, K), lambda i: (0, 0)),
            pl.BlockSpec((K * D, D), lambda i: (0, 0)),
            pl.BlockSpec((K, 1), lambda i: (0, 0)),
            pl.BlockSpec((1, 1), lambda i: (0, 0)),
        ],
        out_specs=pl.BlockSpec((1, tn), lambda i: (0, i)),
        compiler_params=pltpu.CompilerParams(
            dimension_semantics=("parallel",),           # megacore-shardable on v7x
            vmem_limit_bytes=_vmem_limit(blocks),
        ),
    )(xt, mut, inv2d, coef, bias)


# ---------------------------------------------------------------------------
# Full GMMEstNetwork.forward
# ---------------------------------------------------------------------------
def gmm_est_forward(params, x, lambda_energy=0.2, lambda_sigma=0.02):
    """x: (N, latent_dim) float32 -> per-sample loss (N,)."""
    N, D = x.shape
    K = params["W2"].shape[1]
    eps = 1e-12
    tn = _pick_tile(N)
    xt = jnp.transpose(x)                                  # (D, N): samples in lanes

    # --- gamma + sufficient statistics (one streaming pass over x) ----------
    gamma_t, gsum, sgx = gamma_stats(xt, params["W1"], params["b1"],
                                     params["W2"], params["b2"], tn)
    gamma_sum = gsum[:, 0]                                 # (K,)
    phi = gamma_sum / N
    mu = sgx / gamma_sum[:, None]                          # (K, D)
    mut = jnp.transpose(mu)                                # (D, K)

    # --- covariance accumulation (second streaming pass) --------------------
    sigma = (sigma_accum(xt, gamma_t, mut, tn).reshape(K, D, D)
             / gamma_sum[:, None, None])                   # (K, D, D)

    # --- tiny per-component linear algebra (K x D x D) ----------------------
    # TODO(synk): torch.inverse / torch.cholesky on the (K, D, D) mixture
    # covariances have no Pallas equivalent; computed with jnp.linalg (XLA).
    sigma_k = sigma + eps * jnp.eye(D, dtype=jnp.float32)[None]
    cov_inv = jnp.linalg.inv(sigma_k)                                        # (K,D,D)
    chol = jnp.linalg.cholesky(sigma_k * (2.0 * jnp.pi))
    sigma_det = jnp.prod(jnp.diagonal(chol, axis1=-2, axis2=-1), axis=-1)    # (K,)
    sigma_diag = jnp.sum(1.0 / jnp.diagonal(sigma_k, axis1=-2, axis2=-1))    # scalar

    coef = (phi / jnp.sqrt(sigma_det)).reshape(K, 1).astype(jnp.float32)
    bias = (lambda_sigma * sigma_diag).reshape(1, 1).astype(jnp.float32)

    # --- per-sample energy + loss (third streaming pass, fully parallel) ----
    loss = energy_loss(xt, mut, cov_inv.reshape(K * D, D).astype(jnp.float32),
                       coef, bias, lambda_energy, eps, tn)  # (1, N)
    return loss.reshape(N)


# ---------------------------------------------------------------------------
# Pure-JAX reference (mirrors the PyTorch module op-for-op) and param init.
# ---------------------------------------------------------------------------
def gmm_est_reference(params, x, lambda_energy=0.2, lambda_sigma=0.02):
    W1, b1, W2, b2 = params["W1"], params["b1"], params["W2"], params["b2"]
    N, D = x.shape
    hid = jnp.tanh(x @ W1 + b1)
    gamma = jax.nn.softmax(hid @ W2 + b2, axis=1)                  # (N, K)

    gamma_sum = gamma.sum(axis=0)
    phi = gamma_sum / N
    mu = (gamma[:, :, None] * x[:, None, :]).sum(axis=0) / gamma_sum[:, None]
    z_mu = x[:, None, :] - mu[None]
    z_outer = z_mu[..., :, None] * z_mu[..., None, :]
    sigma = ((gamma[:, :, None, None] * z_outer).sum(axis=0)
             / gamma_sum[:, None, None])

    eps = 1e-12
    sigma_k = sigma + eps * jnp.eye(D, dtype=jnp.float32)[None]
    cov_inv = jnp.linalg.inv(sigma_k)
    chol = jnp.linalg.cholesky(sigma_k * (2.0 * jnp.pi))
    sigma_det = jnp.prod(jnp.diagonal(chol, axis1=-2, axis2=-1), axis=-1)
    sigma_diag = jnp.sum(1.0 / jnp.diagonal(sigma_k, axis1=-2, axis2=-1))

    quad = jnp.einsum("nkd,kde,nke->nk", z_mu, cov_inv, z_mu)
    exp_term_tmp = -0.5 * quad
    max_val = jnp.max(jnp.maximum(exp_term_tmp, 0.0), axis=1, keepdims=True)
    exp_term = jnp.exp(exp_term_tmp - max_val)
    mix = jnp.sum(phi[None, :] * exp_term / jnp.sqrt(sigma_det)[None, :], axis=1)
    energy = -max_val[:, 0] - jnp.log(mix + eps)
    return lambda_energy * energy + lambda_sigma * sigma_diag


def init_gmm_est(key, latent_dim, h_dim, gamma_dim):
    k1, k2, k3, k4 = jax.random.split(key, 4)
    s1 = float(latent_dim) ** -0.5
    s2 = float(h_dim) ** -0.5
    return dict(
        W1=jax.random.uniform(k1, (latent_dim, h_dim), jnp.float32, -s1, s1),
        b1=jax.random.uniform(k2, (h_dim,), jnp.float32, -s1, s1),
        W2=jax.random.uniform(k3, (h_dim, gamma_dim), jnp.float32, -s2, s2),
        b2=jax.random.uniform(k4, (gamma_dim,), jnp.float32, -s2, s2),
    )


if __name__ == "__main__":
    key = jax.random.PRNGKey(0)
    N, latent_dim, h_dim, gamma_dim = 384, 8, 32, 4   # N=384 -> 3 tiles of 128

    k_x, k_p = jax.random.split(key)
    x = jax.random.normal(k_x, (N, latent_dim), jnp.float32)
    params = init_gmm_est(k_p, latent_dim, h_dim, gamma_dim)

    forward = jax.jit(gmm_est_forward)
    loss = jax.block_until_ready(forward(params, x))

    with jax.default_matmul_precision("highest"):
        ref = jax.block_until_ready(gmm_est_reference(params, x))

    assert loss.shape == (N,)
    assert bool(jnp.all(jnp.isfinite(loss)))
    assert bool(jnp.allclose(loss, ref, rtol=5e-3, atol=5e-3)), (
        f"mismatch: max abs err {float(jnp.max(jnp.abs(loss - ref)))}")
    print("KERNEL_OK")
</pallas_src>

<mosaic_0001>
module attributes {stable_mosaic.version = 11 : i64} {
  func.func @_gamma_stats_kernel(%arg0: i32, %arg1: memref<8x128xf32, #tpu.memory_space<vmem>>, %arg2: memref<32x8xf32, #tpu.memory_space<vmem>>, %arg3: memref<32x1xf32, #tpu.memory_space<vmem>>, %arg4: memref<4x32xf32, #tpu.memory_space<vmem>>, %arg5: memref<4x1xf32, #tpu.memory_space<vmem>>, %arg6: memref<4x128xf32, #tpu.memory_space<vmem>>, %arg7: memref<4x1xf32, #tpu.memory_space<vmem>>, %arg8: memref<4x8xf32, #tpu.memory_space<vmem>>) attributes {dimension_semantics = [#tpu.dimension_semantics<arbitrary>], iteration_bounds = array<i64: 3>, scalar_prefetch = 0 : i64, scratch_operands = 0 : i64, tpu.core_type = #tpu.core_type<tc>, window_params = [{transform_indices = @transform_0, window_bounds = array<i64: 8, 128>}, {pipeline_mode = #tpu.pipeline_mode<synchronous>, transform_indices = @transform_1, window_bounds = array<i64: 32, 8>}, {pipeline_mode = #tpu.pipeline_mode<synchronous>, transform_indices = @transform_2, window_bounds = array<i64: 32, 1>}, {pipeline_mode = #tpu.pipeline_mode<synchronous>, transform_indices = @transform_3, window_bounds = array<i64: 4, 32>}, {pipeline_mode = #tpu.pipeline_mode<synchronous>, transform_indices = @transform_4, window_bounds = array<i64: 4, 1>}, {transform_indices = @transform_5, window_bounds = array<i64: 4, 128>}, {pipeline_mode = #tpu.pipeline_mode<synchronous>, transform_indices = @transform_6, window_bounds = array<i64: 4, 1>}, {pipeline_mode = #tpu.pipeline_mode<synchronous>, transform_indices = @transform_7, window_bounds = array<i64: 4, 8>}]} {
    %c0 = arith.constant 0 : index
    %c0_0 = arith.constant 0 : index
    %0 = vector.load %arg1[%c0, %c0_0] : memref<8x128xf32, #tpu.memory_space<vmem>>, vector<8x128xf32>
    %c0_1 = arith.constant 0 : index
    %c0_2 = arith.constant 0 : index
    %1 = vector.load %arg2[%c0_1, %c0_2] : memref<32x8xf32, #tpu.memory_space<vmem>>, vector<32x8xf32>
    %cst = arith.constant dense<0.000000e+00> : vector<32x128xf32>
    %2 = tpu.matmul %1, %0, %cst {dimension_numbers = #tpu.dot_dimension_numbers<[1], [0], [0], [1], [0, 0, 1, 1], [], []>} : vector<32x8xf32>, vector<8x128xf32>, vector<32x128xf32> -> vector<32x128xf32>
    %c0_3 = arith.constant 0 : index
    %c0_4 = arith.constant 0 : index
    %3 = vector.load %arg3[%c0_3, %c0_4] : memref<32x1xf32, #tpu.memory_space<vmem>>, vector<32x1xf32>
    %4 = vector.broadcast %3 : vector<32x1xf32> to vector<32x128xf32>
    %5 = arith.addf %2, %4 : vector<32x128xf32>
    %6 = math.tanh %5 : vector<32x128xf32>
    %c0_5 = arith.constant 0 : index
    %c0_6 = arith.constant 0 : index
    %7 = vector.load %arg4[%c0_5, %c0_6] : memref<4x32xf32, #tpu.memory_space<vmem>>, vector<4x32xf32>
    %cst_7 = arith.constant dense<0.000000e+00> : vector<4x128xf32>
    %8 = tpu.matmul %7, %6, %cst_7 {dimension_numbers = #tpu.dot_dimension_numbers<[1], [0], [0], [1], [0, 0, 1, 1], [], []>} : vector<4x32xf32>, vector<32x128xf32>, vector<4x128xf32> -> vector<4x128xf32>
    %c0_8 = arith.constant 0 : index
    %c0_9 = arith.constant 0 : index
    %9 = vector.load %arg5[%c0_8, %c0_9] : memref<4x1xf32, #tpu.memory_space<vmem>>, vector<4x1xf32>
    %10 = vector.broadcast %9 : vector<4x1xf32> to vector<4x128xf32>
    %11 = arith.addf %8, %10 : vector<4x128xf32>
    %cst_10 = arith.constant dense<0xFF800000> : vector<128xf32>
    %12 = vector.multi_reduction <maximumf>, %11, %cst_10 [0] : vector<4x128xf32> to vector<128xf32>
    %13 = vector.shape_cast %12 : vector<128xf32> to vector<1x128xf32>
    %14 = vector.broadcast %13 : vector<1x128xf32> to vector<4x128xf32>
    %15 = arith.subf %11, %14 : vector<4x128xf32>
    %16 = math.exp %15 : vector<4x128xf32>
    %cst_11 = arith.constant dense<0.000000e+00> : vector<128xf32>
    %17 = vector.multi_reduction <add>, %16, %cst_11 [0] : vector<4x128xf32> to vector<128xf32>
    %18 = vector.shape_cast %17 : vector<128xf32> to vector<1x128xf32>
    %19 = vector.broadcast %18 : vector<1x128xf32> to vector<4x128xf32>
    %20 = arith.divf %16, %19 : vector<4x128xf32>
    %c0_12 = arith.constant 0 : index
    %c0_13 = arith.constant 0 : index
    %21 = vector.load %arg6[%c0_12, %c0_13] : memref<4x128xf32, #tpu.memory_space<vmem>>, vector<4x128xf32>
    tpu.vector_store %arg6[%c0_12, %c0_13], %20 {strides = array<i32>} : memref<4x128xf32, #tpu.memory_space<vmem>>, vector<4x128xf32>,
    %c0_i32 = arith.constant 0 : i32
    %22 = arith.cmpi eq, %arg0, %c0_i32 : i32
    %23 = arith.extui %22 : i1 to i32
    %c0_i32_14 = arith.constant 0 : i32
    %24 = arith.cmpi ne, %23, %c0_i32_14 : i32
    scf.if %24 {
      %cst_25 = arith.constant 0.000000e+00 : f32
      %34 = vector.broadcast %cst_25 : f32 to vector<4x1xf32>
      %c0_26 = arith.constant 0 : index
      %c0_27 = arith.constant 0 : index
      %35 = vector.load %arg7[%c0_26, %c0_27] : memref<4x1xf32, #tpu.memory_space<vmem>>, vector<4x1xf32>
      tpu.vector_store %arg7[%c0_26, %c0_27], %34 {strides = array<i32>} : memref<4x1xf32, #tpu.memory_space<vmem>>, vector<4x1xf32>,
      %cst_28 = arith.constant 0.000000e+00 : f32
      %36 = vector.broadcast %cst_28 : f32 to vector<4x8xf32>
      %c0_29 = arith.constant 0 : index
      %c0_30 = arith.constant 0 : index
      %37 = vector.load %arg8[%c0_29, %c0_30] : memref<4x8xf32, #tpu.memory_space<vmem>>, vector<4x8xf32>
      tpu.vector_store %arg8[%c0_29, %c0_30], %36 {strides = array<i32>} : memref<4x8xf32, #tpu.memory_space<vmem>>, vector<4x8xf32>,
    } else {
    }
    %c0_15 = arith.constant 0 : index
    %c0_16 = arith.constant 0 : index
    %25 = vector.load %arg7[%c0_15, %c0_16] : memref<4x1xf32, #tpu.memory_space<vmem>>, vector<4x1xf32>
    %cst_17 = arith.constant dense<0.000000e+00> : vector<4xf32>
    %26 = vector.multi_reduction <add>, %20, %cst_17 [1] : vector<4x128xf32> to vector<4xf32>
    %27 = vector.shape_cast %26 : vector<4xf32> to vector<4x1xf32>
    %28 = arith.addf %25, %27 : vector<4x1xf32>
    %c0_18 = arith.constant 0 : index
    %c0_19 = arith.constant 0 : index
    %29 = vector.load %arg7[%c0_18, %c0_19] : memref<4x1xf32, #tpu.memory_space<vmem>>, vector<4x1xf32>
    tpu.vector_store %arg7[%c0_18, %c0_19], %28 {strides = array<i32>} : memref<4x1xf32, #tpu.memory_space<vmem>>, vector<4x1xf32>,
    %c0_20 = arith.constant 0 : index
    %c0_21 = arith.constant 0 : index
    %30 = vector.load %arg8[%c0_20, %c0_21] : memref<4x8xf32, #tpu.memory_space<vmem>>, vector<4x8xf32>
    %cst_22 = arith.constant dense<0.000000e+00> : vector<4x8xf32>
    %31 = tpu.matmul %20, %0, %cst_22 {dimension_numbers = #tpu.dot_dimension_numbers<[1], [1], [0], [0], [0, 0, 1, 0], [], []>} : vector<4x128xf32>, vector<8x128xf32>, vector<4x8xf32> -> vector<4x8xf32>
    %32 = arith.addf %30, %31 : vector<4x8xf32>
    %c0_23 = arith.constant 0 : index
    %c0_24 = arith.constant 0 : index
    %33 = vector.load %arg8[%c0_23, %c0_24] : memref<4x8xf32, #tpu.memory_space<vmem>>, vector<4x8xf32>
    tpu.vector_store %arg8[%c0_23, %c0_24], %32 {strides = array<i32>} : memref<4x8xf32, #tpu.memory_space<vmem>>, vector<4x8xf32>,
    return
  }
  func.func @transform_0(%arg0: i32) -> (i32, i32) {
    %c0_i32 = arith.constant 0 : i32
    %c0_i32_0 = arith.constant 0 : i32
    return %c0_i32, %arg0 : i32, i32
  }
  func.func @transform_1(%arg0: i32) -> (i32, i32) {
    %c0_i32 = arith.constant 0 : i32
    %c0_i32_0 = arith.constant 0 : i32
    %c0_i32_1 = arith.constant 0 : i32
    return %c0_i32, %c0_i32_0 : i32, i32
  }
  func.func @transform_2(%arg0: i32) -> (i32, i32) {
    %c0_i32 = arith.constant 0 : i32
    %c0_i32_0 = arith.constant 0 : i32
    %c0_i32_1 = arith.constant 0 : i32
    return %c0_i32, %c0_i32_0 : i32, i32
  }
  func.func @transform_3(%arg0: i32) -> (i32, i32) {
    %c0_i32 = arith.constant 0 : i32
    %c0_i32_0 = arith.constant 0 : i32
    %c0_i32_1 = arith.constant 0 : i32
    return %c0_i32, %c0_i32_0 : i32, i32
  }
  func.func @transform_4(%arg0: i32) -> (i32, i32) {
    %c0_i32 = arith.constant 0 : i32
    %c0_i32_0 = arith.constant 0 : i32
    %c0_i32_1 = arith.constant 0 : i32
    return %c0_i32, %c0_i32_0 : i32, i32
  }
  func.func @transform_5(%arg0: i32) -> (i32, i32) {
    %c0_i32 = arith.constant 0 : i32
    %c0_i32_0 = arith.constant 0 : i32
    return %c0_i32, %arg0 : i32, i32
  }
  func.func @transform_6(%arg0: i32) -> (i32, i32) {
    %c0_i32 = arith.constant 0 : i32
    %c0_i32_0 = arith.constant 0 : i32
    %c0_i32_1 = arith.constant 0 : i32
    return %c0_i32, %c0_i32_0 : i32, i32
  }
  func.func @transform_7(%arg0: i32) -> (i32, i32) {
    %c0_i32 = arith.constant 0 : i32
    %c0_i32_0 = arith.constant 0 : i32
    %c0_i32_1 = arith.constant 0 : i32
    return %c0_i32, %c0_i32_0 : i32, i32
  }
}

module attributes {stable_mosaic.version = 11 : i64} {
  func.func @_sigma_kernel(%arg0: i32, %arg1: memref<8x128xf32, #tpu.memory_space<vmem>>, %arg2: memref<4x128xf32, #tpu.memory_space<vmem>>, %arg3: memref<8x4xf32, #tpu.memory_space<vmem>>, %arg4: memref<32x8xf32, #tpu.memory_space<vmem>>) attributes {dimension_semantics = [#tpu.dimension_semantics<arbitrary>], iteration_bounds = array<i64: 3>, scalar_prefetch = 0 : i64, scratch_operands = 0 : i64, tpu.core_type = #tpu.core_type<tc>, window_params = [{transform_indices = @transform_0, window_bounds = array<i64: 8, 128>}, {transform_indices = @transform_1, window_bounds = array<i64: 4, 128>}, {pipeline_mode = #tpu.pipeline_mode<synchronous>, transform_indices = @transform_2, window_bounds = array<i64: 8, 4>}, {pipeline_mode = #tpu.pipeline_mode<synchronous>, transform_indices = @transform_3, window_bounds = array<i64: 32, 8>}]} {
    %c0_i32 = arith.constant 0 : i32
    %0 = arith.cmpi eq, %arg0, %c0_i32 : i32
    %1 = arith.extui %0 : i1 to i32
    %c0_i32_0 = arith.constant 0 : i32
    %2 = arith.cmpi ne, %1, %c0_i32_0 : i32
    scf.if %2 {
      %cst_25 = arith.constant 0.000000e+00 : f32
      %45 = vector.broadcast %cst_25 : f32 to vector<32x8xf32>
      %c0_26 = arith.constant 0 : index
      %c0_27 = arith.constant 0 : index
      %46 = vector.load %arg4[%c0_26, %c0_27] : memref<32x8xf32, #tpu.memory_space<vmem>>, vector<32x8xf32>
      tpu.vector_store %arg4[%c0_26, %c0_27], %45 {strides = array<i32>} : memref<32x8xf32, #tpu.memory_space<vmem>>, vector<32x8xf32>,
    } else {
    }
    %c0 = arith.constant 0 : index
    %c0_1 = arith.constant 0 : index
    %3 = vector.load %arg1[%c0, %c0_1] : memref<8x128xf32, #tpu.memory_space<vmem>>, vector<8x128xf32>
    %c0_2 = arith.constant 0 : index
    %c0_3 = arith.constant 0 : index
    %4 = vector.load %arg2[%c0_2, %c0_3] : memref<4x128xf32, #tpu.memory_space<vmem>>, vector<4x128xf32>
    %c0_4 = arith.constant 0 : index
    %c0_5 = arith.constant 0 : index
    %5 = vector.load %arg3[%c0_4, %c0_5] : memref<8x4xf32, #tpu.memory_space<vmem>>, vector<8x1xf32>
    %6 = vector.broadcast %5 : vector<8x1xf32> to vector<8x128xf32>
    %7 = arith.subf %3, %6 : vector<8x128xf32>
    %8 = vector.extract_strided_slice %4 {offsets = [0, 0], sizes = [1, 128], strides = [1, 1]} : vector<4x128xf32> to vector<1x128xf32>
    %9 = vector.broadcast %8 : vector<1x128xf32> to vector<8x128xf32>
    %10 = arith.mulf %7, %9 : vector<8x128xf32>
    %cst = arith.constant dense<0.000000e+00> : vector<8x8xf32>
    %11 = tpu.matmul %10, %7, %cst {dimension_numbers = #tpu.dot_dimension_numbers<[1], [1], [0], [0], [0, 0, 1, 0], [], []>} : vector<8x128xf32>, vector<8x128xf32>, vector<8x8xf32> -> vector<8x8xf32>
    %c0_6 = arith.constant 0 : index
    %c0_7 = arith.constant 0 : index
    %12 = vector.load %arg4[%c0_6, %c0_7] : memref<32x8xf32, #tpu.memory_space<vmem>>, vector<8x8xf32>
    %13 = arith.addf %12, %11 : vector<8x8xf32>
    %c0_8 = arith.constant 0 : index
    %c0_9 = arith.constant 0 : index
    %14 = vector.load %arg4[%c0_8, %c0_9] : memref<32x8xf32, #tpu.memory_space<vmem>>, vector<8x8xf32>
    tpu.vector_store %arg4[%c0_8, %c0_9], %13 {strides = array<i32>} : memref<32x8xf32, #tpu.memory_space<vmem>>, vector<8x8xf32>,
    %c0_10 = arith.constant 0 : index
    %c1 = arith.constant 1 : index
    %15 = vector.load %arg3[%c0_10, %c1] : memref<8x4xf32, #tpu.memory_space<vmem>>, vector<8x1xf32>
    %16 = vector.broadcast %15 : vector<8x1xf32> to vector<8x128xf32>
    %17 = arith.subf %3, %16 : vector<8x128xf32>
    %18 = vector.extract_strided_slice %4 {offsets = [1, 0], sizes = [1, 128], strides = [1, 1]} : vector<4x128xf32> to vector<1x128xf32>
    %19 = vector.broadcast %18 : vector<1x128xf32> to vector<8x128xf32>
    %20 = arith.mulf %17, %19 : vector<8x128xf32>
    %cst_11 = arith.constant dense<0.000000e+00> : vector<8x8xf32>
    %21 = tpu.matmul %20, %17, %cst_11 {dimension_numbers = #tpu.dot_dimension_numbers<[1], [1], [0], [0], [0, 0, 1, 0], [], []>} : vector<8x128xf32>, vector<8x128xf32>, vector<8x8xf32> -> vector<8x8xf32>
    %c8 = arith.constant 8 : index
    %c0_12 = arith.constant 0 : index
    %22 = vector.load %arg4[%c8, %c0_12] : memref<32x8xf32, #tpu.memory_space<vmem>>, vector<8x8xf32>
    %23 = arith.addf %22, %21 : vector<8x8xf32>
    %c8_13 = arith.constant 8 : index
    %c0_14 = arith.constant 0 : index
    %24 = vector.load %arg4[%c8_13, %c0_14] : memref<32x8xf32, #tpu.memory_space<vmem>>, vector<8x8xf32>
    tpu.vector_store %arg4[%c8_13, %c0_14], %23 {strides = array<i32>} : memref<32x8xf32, #tpu.memory_space<vmem>>, vector<8x8xf32>,
    %c0_15 = arith.constant 0 : index
    %c2 = arith.constant 2 : index
    %25 = vector.load %arg3[%c0_15, %c2] : memref<8x4xf32, #tpu.memory_space<vmem>>, vector<8x1xf32>
    %26 = vector.broadcast %25 : vector<8x1xf32> to vector<8x128xf32>
    %27 = arith.subf %3, %26 : vector<8x128xf32>
    %28 = vector.extract_strided_slice %4 {offsets = [2, 0], sizes = [1, 128], strides = [1, 1]} : vector<4x128xf32> to vector<1x128xf32>
    %29 = vector.broadcast %28 : vector<1x128xf32> to vector<8x128xf32>
    %30 = arith.mulf %27, %29 : vector<8x128xf32>
    %cst_16 = arith.constant dense<0.000000e+00> : vector<8x8xf32>
    %31 = tpu.matmul %30, %27, %cst_16 {dimension_numbers = #tpu.dot_dimension_numbers<[1], [1], [0], [0], [0, 0, 1, 0], [], []>} : vector<8x128xf32>, vector<8x128xf32>, vector<8x8xf32> -> vector<8x8xf32>
    %c16 = arith.constant 16 : index
    %c0_17 = arith.constant 0 : index
    %32 = vector.load %arg4[%c16, %c0_17] : memref<32x8xf32, #tpu.memory_space<vmem>>, vector<8x8xf32>
    %33 = arith.addf %32, %31 : vector<8x8xf32>
    %c16_18 = arith.constant 16 : index
    %c0_19 = arith.constant 0 : index
    %34 = vector.load %arg4[%c16_18, %c0_19] : memref<32x8xf32, #tpu.memory_space<vmem>>, vector<8x8xf32>
    tpu.vector_store %arg4[%c16_18, %c0_19], %33 {strides = array<i32>} : memref<32x8xf32, #tpu.memory_space<vmem>>, vector<8x8xf32>,
    %c0_20 = arith.constant 0 : index
    %c3 = arith.constant 3 : index
    %35 = vector.load %arg3[%c0_20, %c3] : memref<8x4xf32, #tpu.memory_space<vmem>>, vector<8x1xf32>
    %36 = vector.broadcast %35 : vector<8x1xf32> to vector<8x128xf32>
    %37 = arith.subf %3, %36 : vector<8x128xf32>
    %38 = vector.extract_strided_slice %4 {offsets = [3, 0], sizes = [1, 128], strides = [1, 1]} : vector<4x128xf32> to vector<1x128xf32>
    %39 = vector.broadcast %38 : vector<1x128xf32> to vector<8x128xf32>
    %40 = arith.mulf %37, %39 : vector<8x128xf32>
    %cst_21 = arith.constant dense<0.000000e+00> : vector<8x8xf32>
    %41 = tpu.matmul %40, %37, %cst_21 {dimension_numbers = #tpu.dot_dimension_numbers<[1], [1], [0], [0], [0, 0, 1, 0], [], []>} : vector<8x128xf32>, vector<8x128xf32>, vector<8x8xf32> -> vector<8x8xf32>
    %c24 = arith.constant 24 : index
    %c0_22 = arith.constant 0 : index
    %42 = vector.load %arg4[%c24, %c0_22] : memref<32x8xf32, #tpu.memory_space<vmem>>, vector<8x8xf32>
    %43 = arith.addf %42, %41 : vector<8x8xf32>
    %c24_23 = arith.constant 24 : index
    %c0_24 = arith.constant 0 : index
    %44 = vector.load %arg4[%c24_23, %c0_24] : memref<32x8xf32, #tpu.memory_space<vmem>>, vector<8x8xf32>
    tpu.vector_store %arg4[%c24_23, %c0_24], %43 {strides = array<i32>} : memref<32x8xf32, #tpu.memory_space<vmem>>, vector<8x8xf32>,
    return
  }
  func.func @transform_0(%arg0: i32) -> (i32, i32) {
    %c0_i32 = arith.constant 0 : i32
    %c0_i32_0 = arith.constant 0 : i32
    return %c0_i32, %arg0 : i32, i32
  }
  func.func @transform_1(%arg0: i32) -> (i32, i32) {
    %c0_i32 = arith.constant 0 : i32
    %c0_i32_0 = arith.constant 0 : i32
    return %c0_i32, %arg0 : i32, i32
  }
  func.func @transform_2(%arg0: i32) -> (i32, i32) {
    %c0_i32 = arith.constant 0 : i32
    %c0_i32_0 = arith.constant 0 : i32
    %c0_i32_1 = arith.constant 0 : i32
    return %c0_i32, %c0_i32_0 : i32, i32
  }
  func.func @transform_3(%arg0: i32) -> (i32, i32) {
    %c0_i32 = arith.constant 0 : i32
    %c0_i32_0 = arith.constant 0 : i32
    %c0_i32_1 = arith.constant 0 : i32
    return %c0_i32, %c0_i32_0 : i32, i32
  }
}

module attributes {stable_mosaic.version = 11 : i64} {
  func.func @_energy_kernel(%arg0: i32, %arg1: memref<8x128xf32, #tpu.memory_space<vmem>>, %arg2: memref<8x4xf32, #tpu.memory_space<vmem>>, %arg3: memref<32x8xf32, #tpu.memory_space<vmem>>, %arg4: memref<4x1xf32, #tpu.memory_space<vmem>>, %arg5: memref<1x1xf32, #tpu.memory_space<vmem>>, %arg6: memref<1x128xf32, #tpu.memory_space<vmem>>) attributes {dimension_semantics = [#tpu.dimension_semantics<parallel>], iteration_bounds = array<i64: 3>, scalar_prefetch = 0 : i64, scratch_operands = 0 : i64, tpu.core_type = #tpu.core_type<tc>, window_params = [{transform_indices = @transform_0, window_bounds = array<i64: 8, 128>}, {pipeline_mode = #tpu.pipeline_mode<synchronous>, transform_indices = @transform_1, window_bounds = array<i64: 8, 4>}, {pipeline_mode = #tpu.pipeline_mode<synchronous>, transform_indices = @transform_2, window_bounds = array<i64: 32, 8>}, {pipeline_mode = #tpu.pipeline_mode<synchronous>, transform_indices = @transform_3, window_bounds = array<i64: 4, 1>}, {pipeline_mode = #tpu.pipeline_mode<synchronous>, transform_indices = @transform_4, window_bounds = array<i64: 1, 1>}, {transform_indices = @transform_5, window_bounds = array<i64: 1, 128>}]} {
    %c0 = arith.constant 0 : index
    %c0_0 = arith.constant 0 : index
    %0 = vector.load %arg1[%c0, %c0_0] : memref<8x128xf32, #tpu.memory_space<vmem>>, vector<8x128xf32>
    %c0_1 = arith.constant 0 : index
    %c0_2 = arith.constant 0 : index
    %1 = vector.load %arg2[%c0_1, %c0_2] : memref<8x4xf32, #tpu.memory_space<vmem>>, vector<8x1xf32>
    %2 = vector.broadcast %1 : vector<8x1xf32> to vector<8x128xf32>
    %3 = arith.subf %0, %2 : vector<8x128xf32>
    %c0_3 = arith.constant 0 : index
    %c0_4 = arith.constant 0 : index
    %4 = vector.load %arg3[%c0_3, %c0_4] : memref<32x8xf32, #tpu.memory_space<vmem>>, vector<8x8xf32>
    %cst = arith.constant dense<0.000000e+00> : vector<8x128xf32>
    %5 = tpu.matmul %4, %3, %cst {dimension_numbers = #tpu.dot_dimension_numbers<[1], [0], [0], [1], [0, 0, 1, 1], [], []>} : vector<8x8xf32>, vector<8x128xf32>, vector<8x128xf32> -> vector<8x128xf32>
    %6 = arith.mulf %5, %3 : vector<8x128xf32>
    %cst_5 = arith.constant dense<0.000000e+00> : vector<128xf32>
    %7 = vector.multi_reduction <add>, %6, %cst_5 [0] : vector<8x128xf32> to vector<128xf32>
    %8 = vector.shape_cast %7 : vector<128xf32> to vector<1x128xf32>
    %cst_6 = arith.constant -5.000000e-01 : f32
    %9 = vector.broadcast %cst_6 : f32 to vector<1x128xf32>
    %10 = arith.mulf %9, %8 : vector<1x128xf32>
    %c0_7 = arith.constant 0 : index
    %c1 = arith.constant 1 : index
    %11 = vector.load %arg2[%c0_7, %c1] : memref<8x4xf32, #tpu.memory_space<vmem>>, vector<8x1xf32>
    %12 = vector.broadcast %11 : vector<8x1xf32> to vector<8x128xf32>
    %13 = arith.subf %0, %12 : vector<8x128xf32>
    %c8 = arith.constant 8 : index
    %c0_8 = arith.constant 0 : index
    %14 = vector.load %arg3[%c8, %c0_8] : memref<32x8xf32, #tpu.memory_space<vmem>>, vector<8x8xf32>
    %cst_9 = arith.constant dense<0.000000e+00> : vector<8x128xf32>
    %15 = tpu.matmul %14, %13, %cst_9 {dimension_numbers = #tpu.dot_dimension_numbers<[1], [0], [0], [1], [0, 0, 1, 1], [], []>} : vector<8x8xf32>, vector<8x128xf32>, vector<8x128xf32> -> vector<8x128xf32>
    %16 = arith.mulf %15, %13 : vector<8x128xf32>
    %cst_10 = arith.constant dense<0.000000e+00> : vector<128xf32>
    %17 = vector.multi_reduction <add>, %16, %cst_10 [0] : vector<8x128xf32> to vector<128xf32>
    %18 = vector.shape_cast %17 : vector<128xf32> to vector<1x128xf32>
    %cst_11 = arith.constant -5.000000e-01 : f32
    %19 = vector.broadcast %cst_11 : f32 to vector<1x128xf32>
    %20 = arith.mulf %19, %18 : vector<1x128xf32>
    %c0_12 = arith.constant 0 : index
    %c2 = arith.constant 2 : index
    %21 = vector.load %arg2[%c0_12, %c2] : memref<8x4xf32, #tpu.memory_space<vmem>>, vector<8x1xf32>
    %22 = vector.broadcast %21 : vector<8x1xf32> to vector<8x128xf32>
    %23 = arith.subf %0, %22 : vector<8x128xf32>
    %c16 = arith.constant 16 : index
    %c0_13 = arith.constant 0 : index
    %24 = vector.load %arg3[%c16, %c0_13] : memref<32x8xf32, #tpu.memory_space<vmem>>, vector<8x8xf32>
    %cst_14 = arith.constant dense<0.000000e+00> : vector<8x128xf32>
    %25 = tpu.matmul %24, %23, %cst_14 {dimension_numbers = #tpu.dot_dimension_numbers<[1], [0], [0], [1], [0, 0, 1, 1], [], []>} : vector<8x8xf32>, vector<8x128xf32>, vector<8x128xf32> -> vector<8x128xf32>
    %26 = arith.mulf %25, %23 : vector<8x128xf32>
    %cst_15 = arith.constant dense<0.000000e+00> : vector<128xf32>
    %27 = vector.multi_reduction <add>, %26, %cst_15 [0] : vector<8x128xf32> to vector<128xf32>
    %28 = vector.shape_cast %27 : vector<128xf32> to vector<1x128xf32>
    %cst_16 = arith.constant -5.000000e-01 : f32
    %29 = vector.broadcast %cst_16 : f32 to vector<1x128xf32>
    %30 = arith.mulf %29, %28 : vector<1x128xf32>
    %c0_17 = arith.constant 0 : index
    %c3 = arith.constant 3 : index
    %31 = vector.load %arg2[%c0_17, %c3] : memref<8x4xf32, #tpu.memory_space<vmem>>, vector<8x1xf32>
    %32 = vector.broadcast %31 : vector<8x1xf32> to vector<8x128xf32>
    %33 = arith.subf %0, %32 : vector<8x128xf32>
    %c24 = arith.constant 24 : index
    %c0_18 = arith.constant 0 : index
    %34 = vector.load %arg3[%c24, %c0_18] : memref<32x8xf32, #tpu.memory_space<vmem>>, vector<8x8xf32>
    %cst_19 = arith.constant dense<0.000000e+00> : vector<8x128xf32>
    %35 = tpu.matmul %34, %33, %cst_19 {dimension_numbers = #tpu.dot_dimension_numbers<[1], [0], [0], [1], [0, 0, 1, 1], [], []>} : vector<8x8xf32>, vector<8x128xf32>, vector<8x128xf32> -> vector<8x128xf32>
    %36 = arith.mulf %35, %33 : vector<8x128xf32>
    %cst_20 = arith.constant dense<0.000000e+00> : vector<128xf32>
    %37 = vector.multi_reduction <add>, %36, %cst_20 [0] : vector<8x128xf32> to vector<128xf32>
    %38 = vector.shape_cast %37 : vector<128xf32> to vector<1x128xf32>
    %cst_21 = arith.constant -5.000000e-01 : f32
    %39 = vector.broadcast %cst_21 : f32 to vector<1x128xf32>
    %40 = arith.mulf %39, %38 : vector<1x128xf32>
    %cst_22 = arith.constant 0.000000e+00 : f32
    %41 = vector.broadcast %cst_22 : f32 to vector<1x128xf32>
    %42 = arith.maximumf %41, %10 : vector<1x128xf32>
    %43 = arith.maximumf %42, %20 : vector<1x128xf32>
    %44 = arith.maximumf %43, %30 : vector<1x128xf32>
    %45 = arith.maximumf %44, %40 : vector<1x128xf32>
    %cst_23 = arith.constant 0.000000e+00 : f32
    %46 = vector.broadcast %cst_23 : f32 to vector<1x128xf32>
    %c0_24 = arith.constant 0 : index
    %c0_25 = arith.constant 0 : index
    %47 = vector.load %arg4[%c0_24, %c0_25] : memref<4x1xf32, #tpu.memory_space<vmem>>, vector<1x1xf32>
    %48 = arith.subf %10, %45 : vector<1x128xf32>
    %49 = math.exp %48 : vector<1x128xf32>
    %50 = vector.broadcast %47 : vector<1x1xf32> to vector<1x128xf32>
    %51 = arith.mulf %50, %49 : vector<1x128xf32>
    %52 = arith.addf %46, %51 : vector<1x128xf32>
    %c1_26 = arith.constant 1 : index
    %c0_27 = arith.constant 0 : index
    %53 = vector.load %arg4[%c1_26, %c0_27] : memref<4x1xf32, #tpu.memory_space<vmem>>, vector<1x1xf32>
    %54 = arith.subf %20, %45 : vector<1x128xf32>
    %55 = math.exp %54 : vector<1x128xf32>
    %56 = vector.broadcast %53 : vector<1x1xf32> to vector<1x128xf32>
    %57 = arith.mulf %56, %55 : vector<1x128xf32>
    %58 = arith.addf %52, %57 : vector<1x128xf32>
    %c2_28 = arith.constant 2 : index
    %c0_29 = arith.constant 0 : index
    %59 = vector.load %arg4[%c2_28, %c0_29] : memref<4x1xf32, #tpu.memory_space<vmem>>, vector<1x1xf32>
    %60 = arith.subf %30, %45 : vector<1x128xf32>
    %61 = math.exp %60 : vector<1x128xf32>
    %62 = vector.broadcast %59 : vector<1x1xf32> to vector<1x128xf32>
    %63 = arith.mulf %62, %61 : vector<1x128xf32>
    %64 = arith.addf %58, %63 : vector<1x128xf32>
    %c3_30 = arith.constant 3 : index
    %c0_31 = arith.constant 0 : index
    %65 = vector.load %arg4[%c3_30, %c0_31] : memref<4x1xf32, #tpu.memory_space<vmem>>, vector<1x1xf32>
    %66 = arith.subf %40, %45 : vector<1x128xf32>
    %67 = math.exp %66 : vector<1x128xf32>
    %68 = vector.broadcast %65 : vector<1x1xf32> to vector<1x128xf32>
    %69 = arith.mulf %68, %67 : vector<1x128xf32>
    %70 = arith.addf %64, %69 : vector<1x128xf32>
    %cst_32 = arith.constant 0.000000e+00 : f32
    %71 = vector.broadcast %cst_32 : f32 to vector<1x128xf32>
    %72 = arith.subf %71, %45 : vector<1x128xf32>
    %cst_33 = arith.constant 9.99999996E-13 : f32
    %73 = vector.broadcast %cst_33 : f32 to vector<1x128xf32>
    %74 = arith.addf %70, %73 : vector<1x128xf32>
    %75 = math.log %74 : vector<1x128xf32>
    %76 = arith.subf %72, %75 : vector<1x128xf32>
    %cst_34 = arith.constant 2.000000e-01 : f32
    %77 = vector.broadcast %cst_34 : f32 to vector<1x128xf32>
    %78 = arith.mulf %77, %76 : vector<1x128xf32>
    %c0_35 = arith.constant 0 : index
    %c0_36 = arith.constant 0 : index
    %79 = vector.load %arg5[%c0_35, %c0_36] : memref<1x1xf32, #tpu.memory_space<vmem>>, vector<1x1xf32>
    %80 = vector.broadcast %79 : vector<1x1xf32> to vector<1x128xf32>
    %81 = arith.addf %78, %80 : vector<1x128xf32>
    %c0_37 = arith.constant 0 : index
    %c0_38 = arith.constant 0 : index
    %82 = vector.load %arg6[%c0_37, %c0_38] : memref<1x128xf32, #tpu.memory_space<vmem>>, vector<1x128xf32>
    tpu.vector_store %arg6[%c0_37, %c0_38], %81 {strides = array<i32>} : memref<1x128xf32, #tpu.memory_space<vmem>>, vector<1x128xf32>,
    return
  }
  func.func @transform_0(%arg0: i32) -> (i32, i32) {
    %c0_i32 = arith.constant 0 : i32
    %c0_i32_0 = arith.constant 0 : i32
    return %c0_i32, %arg0 : i32, i32
  }
  func.func @transform_1(%arg0: i32) -> (i32, i32) {
    %c0_i32 = arith.constant 0 : i32
    %c0_i32_0 = arith.constant 0 : i32
    %c0_i32_1 = arith.constant 0 : i32
    return %c0_i32, %c0_i32_0 : i32, i32
  }
  func.func @transform_2(%arg0: i32) -> (i32, i32) {
    %c0_i32 = arith.constant 0 : i32
    %c0_i32_0 = arith.constant 0 : i32
    %c0_i32_1 = arith.constant 0 : i32
    return %c0_i32, %c0_i32_0 : i32, i32
  }
  func.func @transform_3(%arg0: i32) -> (i32, i32) {
    %c0_i32 = arith.constant 0 : i32
    %c0_i32_0 = arith.constant 0 : i32
    %c0_i32_1 = arith.constant 0 : i32
    return %c0_i32, %c0_i32_0 : i32, i32
  }
  func.func @transform_4(%arg0: i32) -> (i32, i32) {
    %c0_i32 = arith.constant 0 : i32
    %c0_i32_0 = arith.constant 0 : i32
    %c0_i32_1 = arith.constant 0 : i32
    return %c0_i32, %c0_i32_0 : i32, i32
  }
  func.func @transform_5(%arg0: i32) -> (i32, i32) {
    %c0_i32 = arith.constant 0 : i32
    %c0_i32_0 = arith.constant 0 : i32
    return %c0_i32, %arg0 : i32, i32
  }
}

</mosaic_0001>

<llo_original>
// kernel: custom-call.16
$region0: #{custom-call.16}
  %s0 = inlined_call_operand.vmem [shape: f32[4,8,8], index: 0, kind: input, shape index: {}]
  %s1 = inlined_call_operand.vmem [shape: f32[4,8,8], index: 1, kind: output, shape index: {}]
  $region1: #{custom-call.16} parent=0
    #allocation0 [shape = 'u8[8192]{0}', space=vmem, size = 0x2000, scoped, tag = 'operand span for operand 0']
    #allocation1 [shape = 'u8[8192]{0}', space=vmem, size = 0x2000, scoped, tag = 'operand span for operand 1']
    loop: start=0, step=1, limit=6
    $region2: #{custom-call.16} parent=1 // loop_pre_header
      _
    $region3: #{custom-call.16} parent=1 // loop_header
      %s3 = sphi 0, %s7
      %p4 = scmp.ge.s32.totalorder %s3, 6
      %s10 = sphi 0, %s29
      %s11 = sphi 0, %s25
      %s12 = sphi 0, %s21
      %s13 = sphi 0, %s10
      %s14 = sphi 0, %s11
      %s15 = sphi 0, %s12
      %s16 = sphi 0, %s13
      %s17 = sphi 0, %s14
      %s18 = sphi 0, %s15
    $region4: #{custom-call.16} parent=1 // loop_header_branch
      %6 = sbr.rel (%p4) target = $region8
    $region5: #{custom-call.16} parent=1 // loop_body
      %s8 = ssub.s32 %s3, 1
      %s9 = ssub.s32 %s3, 2
      %s19 = sadd.s32 1, %s12
      %p20 = scmp.ge.s32.totalorder %s19, 1
      %s21 = scalar_select %p20, 0, %s19
      %s22 = sadd.s32 1, %s11
      %s23 = scalar_select %p20, %s22, %s11
      %p24 = scmp.ge.s32.totalorder %s23, 1
      %s25 = scalar_select %p24, 0, %s23
      %s26 = sadd.s32 1, %s10
      %s27 = scalar_select %p24, %s26, %s10
      %p28 = scmp.ge.s32.totalorder %s27, 4
      %s29 = scalar_select %p28, 0, %s27
      %p30 = scmp.le.s32.totalorder 1, %s3
      %p31 = scmp.lt.s32.totalorder %s3, 5
      %p32 = pnand %p30, %p31
      %p33 = pneg %p32
      // Predicated region
      $region9: #{custom-call.16} parent=5 // pred_check
        _
      $region10: #{custom-call.16} parent=5 // pred_check_branch
        %35 = sbr.rel (%p32) target = $region12
      $region11: #{custom-call.16} parent=5 // pred_region
        %s36 = ssub.s32 %s3, 1
      $region12: #{custom-call.16} parent=5 // pred_fallthru
        _
      %p37 = scmp.lt.s32.totalorder %s3, 4
      // Predicated region
      $region13: #{custom-call.16} parent=5 // pred_check
        %p38 = pneg %p37
      $region14: #{custom-call.16} parent=5 // pred_check_branch
        %40 = sbr.rel (%p38) target = $region16
      $region15: #{custom-call.16} parent=5 // pred_region
        %s41 = sand.u32 %s3, 1
        %s42 = sand.u32 %s3, 1
        %s43 = smul.addr %s42, 8
        %s44 = scalar_lea.vmem [#allocation0], %s43
        %s45 = sadd.s32 %s12, %s11
        %s46 = sadd.s32 %s45, %s10
        %s47 = smul.addr %s46, 8
        %s48 = scalar_lea.vmem %s0, %s47
        // Predicated region
        $region17: #{custom-call.16} parent=15 // pred_check
          _
        $region18: #{custom-call.16} parent=15 // pred_check_branch
          %50 = sbr.rel (0) target = $region20
        $region19: #{custom-call.16} parent=15 // pred_region
          // Predicated region
          $region21: #{custom-call.16} parent=19 // pred_check
            _
          $region22: #{custom-call.16} parent=19 // pred_check_branch
            %52 = sbr.rel (0) target = $region24
          $region23: #{custom-call.16} parent=19 // pred_region
            // Predicated region
            $region36: #{custom-call.16} parent=23 // pred_check
              _
            $region37: #{custom-call.16} parent=23 // pred_check_branch
              %68 = sbr.rel (0) target = $region39
            $region38: #{custom-call.16} parent=23 // pred_region
              loop: start=0, step=1, limit=1
              $region40: #{custom-call.16} parent=38 // loop_pre_header
                _
              $region41: #{custom-call.16} parent=38 // loop_header
                %s70 = sphi 0, %s74
                %p71 = scmp.ge.s32.totalorder %s70, 1
                %s75 = sphi %s48, %s48
                %s76 = sphi %s44, %s44
              $region42: #{custom-call.16} parent=38 // loop_header_branch
                %73 = sbr.rel (%p71) target = $region46
              $region43: #{custom-call.16} parent=38 // loop_body
                %v77 = vld [vmem:[%s75] sm:$0xff]
                %78 = vst [vmem:[%s76] sm:$0xff] %v77
              $region44: #{custom-call.16} parent=38 // loop_footer
                %s74 = sadd.s32 1, %s70
              $region45: #{custom-call.16} parent=38 // loop_footer_branch
                %69 = sbr.rel target = $region41
              $region46: #{custom-call.16} parent=38 // loop_exit
                _
            $region39: #{custom-call.16} parent=23 // pred_fallthru
              _
            // Predicated region
            $region47: #{custom-call.16} parent=23 // pred_check
              _
            $region48: #{custom-call.16} parent=23 // pred_check_branch
              %80 = sbr.rel target = $region50
            $region49: #{custom-call.16} parent=23 // pred_region
              _
            $region50: #{custom-call.16} parent=23 // pred_fallthru
              _
          $region24: #{custom-call.16} parent=19 // pred_fallthru
            _
          // Predicated region
          $region25: #{custom-call.16} parent=19 // pred_check
            _
          $region26: #{custom-call.16} parent=19 // pred_check_branch
            %54 = sbr.rel target = $region28
          $region27: #{custom-call.16} parent=19 // pred_region
            %s56 = ssub.s32 256, 1
            loop: start=0, step=1, limit=1
            $region29: #{custom-call.16} parent=27 // loop_pre_header
              _
            $region30: #{custom-call.16} parent=27 // loop_header
              %s58 = sphi 0, %s62
              %p59 = scmp.ge.s32.totalorder %s58, 1
              %s63 = sphi %s48, %s48
              %s64 = sphi %s44, %s44
            $region31: #{custom-call.16} parent=27 // loop_header_branch
              %61 = sbr.rel (%p59) target = $region35
            $region32: #{custom-call.16} parent=27 // loop_body
              %v65 = vld [vmem:[%s63] sm:%s56]
              %66 = vst [vmem:[%s64] sm:%s56] %v65
            $region33: #{custom-call.16} parent=27 // loop_footer
              %s62 = sadd.s32 1, %s58
            $region34: #{custom-call.16} parent=27 // loop_footer_branch
              %57 = sbr.rel target = $region30
            $region35: #{custom-call.16} parent=27 // loop_exit
              _
          $region28: #{custom-call.16} parent=19 // pred_fallthru
            _
        $region20: #{custom-call.16} parent=15 // pred_fallthru
          _
        %81 = vnop
      $region16: #{custom-call.16} parent=5 // pred_fallthru
        _
      %p82 = scmp.le.s32.totalorder 1, %s3
      %p83 = scmp.lt.s32.totalorder %s3, 5
      %p84 = pnand %p82, %p83
      %p85 = pneg %p84
      // Predicated region
      $region51: #{custom-call.16} parent=5 // pred_check
        _
      $region52: #{custom-call.16} parent=5 // pred_check_branch
        %87 = sbr.rel (%p84) target = $region54
      $region53: #{custom-call.16} parent=5 // pred_region
        %s88 = ssub.s32 %s3, 1
        %s89 = sand.u32 %s8, 1
        %s90 = sand.u32 %s8, 1
        %s91 = smul.addr %s90, 8
        %s92 = scalar_lea.vmem [#allocation0], %s91
        %s93 = sand.u32 %s8, 1
        %s94 = sand.u32 %s8, 1
        %s95 = smul.addr %s94, 8
        %s96 = scalar_lea.vmem [#allocation0], %s95
        %s97 = sand.u32 %s8, 1
        %s98 = sand.u32 %s8, 1
        %s99 = smul.addr %s98, 8
        %s100 = scalar_lea.vmem [#allocation1], %s99
        %101 = vst [vmem:[%s100] sm:$0xff] 0.0
        %vm102 = vcmask 7168
        %v103 = vld [vmem:[%s100] ss:$0 sm:$0xff]
        %v104 = vld [vmem:[%s92] ss:$0 sm:$0xff]
        %v105 = vmul.f32 %v103, %v103
        %106 = vadd.xlane.f32.xlu0 %v105
        %v107 = vpop.xlane.xlu0 %106
        %v108 = vsub.f32 %v104, %v107
        %v109 = vrsqrt.pop %v108
        %v110 = vmul.f32 %v109, %v108
        %v111 = vmul.f32 %v110, %v109
        %v112 = vmul.f32 0.5, %v111
        %v113 = vsub.f32 1.5, %v112
        %v114 = vmul.f32 %v109, %v113
        %vm115 = vweird.f32 %v108
        %vm116 = vweird.f32 %v109
        %vm117 = vmor %vm115, %vm116
        %v118 = vsel %vm117, %v109, %v114
        %v119 = vld [vmem:[%s92] sm:$0xff]
        %v120 = vld [vmem:[%s100] sm:$0xff]
        %v121 = vmul.f32 %v120, %v103
        %122 = vadd.xlane.f32.xlu0 %v121
        %v123 = vpop.xlane.xlu0 %122
        %v124 = vsub.f32 %v119, %v123
        %v125 = vmul.f32 %v124, %v118
        %v126 = vsel %vm102, %v125, 0.0
        %v127 = vadd.f32 %v120, %v126
        %128 = vst [vmem:[%s100] sm:$0xff] %v127
        %vm129 = vcmask 15368
        %s130 = scalar_lea.vmem %s100, 1 [#allocation1]
        %v131 = vld [vmem:[%s130] ss:$0 sm:$0xff]
        %s132 = scalar_lea.vmem %s92, 1 [#allocation0]
        %v133 = vld [vmem:[%s132] ss:$0 sm:$0xff]
        %v134 = vmul.f32 %v131, %v131
        %135 = vadd.xlane.f32.xlu0 %v134
        %v136 = vpop.xlane.xlu0 %135
        %v137 = vsub.f32 %v133, %v136
        %v138 = vrsqrt.pop %v137
        %v139 = vmul.f32 %v138, %v137
        %v140 = vmul.f32 %v139, %v138
        %v141 = vmul.f32 0.5, %v140
        %v142 = vsub.f32 1.5, %v141
        %v143 = vmul.f32 %v138, %v142
        %vm144 = vweird.f32 %v137
        %vm145 = vweird.f32 %v138
        %vm146 = vmor %vm144, %vm145
        %v147 = vsel %vm146, %v138, %v143
        %v148 = vld [vmem:[%s92] sm:$0xff]
        %v149 = vld [vmem:[%s100] sm:$0xff]
        %v150 = vmul.f32 %v149, %v131
        %151 = vadd.xlane.f32.xlu0 %v150
        %v152 = vpop.xlane.xlu0 %151
        %v153 = vsub.f32 %v148, %v152
        %v154 = vmul.f32 %v153, %v147
        %vm155 = vcmask 1047553
        %vm156 = vmand %vm129, %vm155
        %v157 = vsel %vm156, %v154, 0.0
        %v158 = vadd.f32 %v149, %v157
        %159 = vst [vmem:[%s100] sm:$0xff] %v158
        %vm160 = vcmask 23568
        %s161 = scalar_lea.vmem %s100, 2 [#allocation1]
        %v162 = vld [vmem:[%s161] ss:$0 sm:$0xff]
        %s163 = scalar_lea.vmem %s92, 2 [#allocation0]
        %v164 = vld [vmem:[%s163] ss:$0 sm:$0xff]
        %v165 = vmul.f32 %v162, %v162
        %166 = vadd.xlane.f32.xlu0 %v165
        %v167 = vpop.xlane.xlu0 %166
        %v168 = vsub.f32 %v164, %v167
        %v169 = vrsqrt.pop %v168
        %v170 = vmul.f32 %v169, %v168
        %v171 = vmul.f32 %v170, %v169
        %v172 = vmul.f32 0.5, %v171
        %v173 = vsub.f32 1.5, %v172
        %v174 = vmul.f32 %v169, %v173
        %vm175 = vweird.f32 %v168
        %vm176 = vweird.f32 %v169
        %vm177 = vmor %vm175, %vm176
        %v178 = vsel %vm177, %v169, %v174
        %v179 = vld [vmem:[%s92] sm:$0xff]
        %v180 = vld [vmem:[%s100] sm:$0xff]
        %v181 = vmul.f32 %v180, %v162
        %182 = vadd.xlane.f32.xlu0 %v181
        %v183 = vpop.xlane.xlu0 %182
        %v184 = vsub.f32 %v179, %v183
        %v185 = vmul.f32 %v184, %v178
        %vm186 = vcmask 1047554
        %vm187 = vmand %vm160, %vm186
        %v188 = vsel %vm187, %v185, 0.0
        %v189 = vadd.f32 %v180, %v188
        %190 = vst [vmem:[%s100] sm:$0xff] %v189
        %vm191 = vcmask 31768
        %s192 = scalar_lea.vmem %s100, 3 [#allocation1]
        %v193 = vld [vmem:[%s192] ss:$0 sm:$0xff]
        %s194 = scalar_lea.vmem %s92, 3 [#allocation0]
        %v195 = vld [vmem:[%s194] ss:$0 sm:$0xff]
        %v196 = vmul.f32 %v193, %v193
        %197 = vadd.xlane.f32.xlu0 %v196
        %v198 = vpop.xlane.xlu0 %197
        %v199 = vsub.f32 %v195, %v198
        %v200 = vrsqrt.pop %v199
        %v201 = vmul.f32 %v200, %v199
        %v202 = vmul.f32 %v201, %v200
        %v203 = vmul.f32 0.5, %v202
        %v204 = vsub.f32 1.5, %v203
        %v205 = vmul.f32 %v200, %v204
        %vm206 = vweird.f32 %v199
        %vm207 = vweird.f32 %v200
        %vm208 = vmor %vm206, %vm207
        %v209 = vsel %vm208, %v200, %v205
        %v210 = vld [vmem:[%s92] sm:$0xff]
        %v211 = vld [vmem:[%s100] sm:$0xff]
        %v212 = vmul.f32 %v211, %v193
        %213 = vadd.xlane.f32.xlu0 %v212
        %v214 = vpop.xlane.xlu0 %213
        %v215 = vsub.f32 %v210, %v214
        %v216 = vmul.f32 %v215, %v209
        %vm217 = vcmask 1047555
        %vm218 = vmand %vm191, %vm217
        %v219 = vsel %vm218, %v216, 0.0
        %v220 = vadd.f32 %v211, %v219
        %221 = vst [vmem:[%s100] sm:$0xff] %v220
        %vm222 = vcmask 39968
        %s223 = scalar_lea.vmem %s100, 4 [#allocation1]
        %v224 = vld [vmem:[%s223] ss:$0 sm:$0xff]
        %s225 = scalar_lea.vmem %s92, 4 [#allocation0]
        %v226 = vld [vmem:[%s225] ss:$0 sm:$0xff]
        %v227 = vmul.f32 %v224, %v224
        %228 = vadd.xlane.f32.xlu0 %v227
        %v229 = vpop.xlane.xlu0 %228
        %v230 = vsub.f32 %v226, %v229
        %v231 = vrsqrt.pop %v230
        %v232 = vmul.f32 %v231, %v230
        %v233 = vmul.f32 %v232, %v231
        %v234 = vmul.f32 0.5, %v233
        %v235 = vsub.f32 1.5, %v234
        %v236 = vmul.f32 %v231, %v235
        %vm237 = vweird.f32 %v230
        %vm238 = vweird.f32 %v231
        %vm239 = vmor %vm237, %vm238
        %v240 = vsel %vm239, %v231, %v236
        %v241 = vld [vmem:[%s92] sm:$0xff]
        %v242 = vld [vmem:[%s100] sm:$0xff]
        %v243 = vmul.f32 %v242, %v224
        %244 = vadd.xlane.f32.xlu0 %v243
        %v245 = vpop.xlane.xlu0 %244
        %v246 = vsub.f32 %v241, %v245
        %v247 = vmul.f32 %v246, %v240
        %vm248 = vcmask 1047556
        %vm249 = vmand %vm222, %vm248
        %v250 = vsel %vm249, %v247, 0.0
        %v251 = vadd.f32 %v242, %v250
        %252 = vst [vmem:[%s100] sm:$0xff] %v251
        %vm253 = vcmask 48168
        %s254 = scalar_lea.vmem %s100, 5 [#allocation1]
        %v255 = vld [vmem:[%s254] ss:$0 sm:$0xff]
        %s256 = scalar_lea.vmem %s92, 5 [#allocation0]
        %v257 = vld [vmem:[%s256] ss:$0 sm:$0xff]
        %v258 = vmul.f32 %v255, %v255
        %259 = vadd.xlane.f32.xlu0 %v258
        %v260 = vpop.xlane.xlu0 %259
        %v261 = vsub.f32 %v257, %v260
        %v262 = vrsqrt.pop %v261
        %v263 = vmul.f32 %v262, %v261
        %v264 = vmul.f32 %v263, %v262
        %v265 = vmul.f32 0.5, %v264
        %v266 = vsub.f32 1.5, %v265
        %v267 = vmul.f32 %v262, %v266
        %vm268 = vweird.f32 %v261
        %vm269 = vweird.f32 %v262
        %vm270 = vmor %vm268, %vm269
        %v271 = vsel %vm270, %v262, %v267
        %v272 = vld [vmem:[%s92] sm:$0xff]
        %v273 = vld [vmem:[%s100] sm:$0xff]
        %v274 = vmul.f32 %v273, %v255
        %275 = vadd.xlane.f32.xlu0 %v274
        %v276 = vpop.xlane.xlu0 %275
        %v277 = vsub.f32 %v272, %v276
        %v278 = vmul.f32 %v277, %v271
        %vm279 = vcmask 1047557
        %vm280 = vmand %vm253, %vm279
        %v281 = vsel %vm280, %v278, 0.0
        %v282 = vadd.f32 %v273, %v281
        %283 = vst [vmem:[%s100] sm:$0xff] %v282
        %vm284 = vcmask 56368
        %s285 = scalar_lea.vmem %s100, 6 [#allocation1]
        %v286 = vld [vmem:[%s285] ss:$0 sm:$0xff]
        %s287 = scalar_lea.vmem %s92, 6 [#allocation0]
        %v288 = vld [vmem:[%s287] ss:$0 sm:$0xff]
        %v289 = vmul.f32 %v286, %v286
        %290 = vadd.xlane.f32.xlu0 %v289
        %v291 = vpop.xlane.xlu0 %290
        %v292 = vsub.f32 %v288, %v291
        %v293 = vrsqrt.pop %v292
        %v294 = vmul.f32 %v293, %v292
        %v295 = vmul.f32 %v294, %v293
        %v296 = vmul.f32 0.5, %v295
        %v297 = vsub.f32 1.5, %v296
        %v298 = vmul.f32 %v293, %v297
        %vm299 = vweird.f32 %v292
        %vm300 = vweird.f32 %v293
        %vm301 = vmor %vm299, %vm300
        %v302 = vsel %vm301, %v293, %v298
        %v303 = vld [vmem:[%s92] sm:$0xff]
        %v304 = vld [vmem:[%s100] sm:$0xff]
        %v305 = vmul.f32 %v304, %v286
        %306 = vadd.xlane.f32.xlu0 %v305
        %v307 = vpop.xlane.xlu0 %306
        %v308 = vsub.f32 %v303, %v307
        %v309 = vmul.f32 %v308, %v302
        %vm310 = vcmask 1047558
        %vm311 = vmand %vm284, %vm310
        %v312 = vsel %vm311, %v309, 0.0
        %v313 = vadd.f32 %v304, %v312
        %314 = vst [vmem:[%s100] sm:$0xff] %v313
        %vm315 = vcmask 64568
        %s316 = scalar_lea.vmem %s100, 7 [#allocation1]
        %v317 = vld [vmem:[%s316] ss:$0 sm:$0xff]
        %s318 = scalar_lea.vmem %s92, 7 [#allocation0]
        %v319 = vld [vmem:[%s318] ss:$0 sm:$0xff]
        %v320 = vmul.f32 %v317, %v317
        %321 = vadd.xlane.f32.xlu0 %v320
        %v322 = vpop.xlane.xlu0 %321
        %v323 = vsub.f32 %v319, %v322
        %v324 = vrsqrt.pop %v323
        %v325 = vmul.f32 %v324, %v323
        %v326 = vmul.f32 %v325, %v324
        %v327 = vmul.f32 0.5, %v326
        %v328 = vsub.f32 1.5, %v327
        %v329 = vmul.f32 %v324, %v328
        %vm330 = vweird.f32 %v323
        %vm331 = vweird.f32 %v324
        %vm332 = vmor %vm330, %vm331
        %v333 = vsel %vm332, %v324, %v329
        %v334 = vld [vmem:[%s92] sm:$0xff]
        %v335 = vld [vmem:[%s100] sm:$0xff]
        %v336 = vmul.f32 %v335, %v317
        %337 = vadd.xlane.f32.xlu0 %v336
        %v338 = vpop.xlane.xlu0 %337
        %v339 = vsub.f32 %v334, %v338
        %v340 = vmul.f32 %v339, %v333
        %vm341 = vcmask 1047559
        %vm342 = vmand %vm315, %vm341
        %v343 = vsel %vm342, %v340, 0.0
        %v344 = vadd.f32 %v335, %v343
        %345 = vst [vmem:[%s100] sm:$0xff] %v344
        %s346 = sand.u32 %s8, 1
        %s347 = sand.u32 %s8, 1
        %s348 = smul.addr %s347, 8
        %s349 = scalar_lea.vmem [#allocation1], %s348
        %s350 = sadd.s32 %s15, %s14
        %s351 = sadd.s32 %s350, %s13
        %s352 = smul.addr %s351, 8
        %s353 = scalar_lea.vmem %s1, %s352
        // Predicated region
        $region55: #{custom-call.16} parent=53 // pred_check
          _
        $region56: #{custom-call.16} parent=53 // pred_check_branch
          %355 = sbr.rel (0) target = $region58
        $region57: #{custom-call.16} parent=53 // pred_region
          // Predicated region
          $region59: #{custom-call.16} parent=57 // pred_check
            _
          $region60: #{custom-call.16} parent=57 // pred_check_branch
            %357 = sbr.rel (0) target = $region62
          $region61: #{custom-call.16} parent=57 // pred_region
            // Predicated region
            $region74: #{custom-call.16} parent=61 // pred_check
              _
            $region75: #{custom-call.16} parent=61 // pred_check_branch
              %373 = sbr.rel (0) target = $region77
            $region76: #{custom-call.16} parent=61 // pred_region
              loop: start=0, step=1, limit=1
              $region78: #{custom-call.16} parent=76 // loop_pre_header
                _
              $region79: #{custom-call.16} parent=76 // loop_header
                %s375 = sphi 0, %s379
                %p376 = scmp.ge.s32.totalorder %s375, 1
                %s380 = sphi %s349, %s349
                %s381 = sphi %s353, %s353
              $region80: #{custom-call.16} parent=76 // loop_header_branch
                %378 = sbr.rel (%p376) target = $region84
              $region81: #{custom-call.16} parent=76 // loop_body
                %v382 = vld [vmem:[%s380] sm:$0xff]
                %383 = vst [vmem:[%s381] sm:$0xff] %v382
              $region82: #{custom-call.16} parent=76 // loop_footer
                %s379 = sadd.s32 1, %s375
              $region83: #{custom-call.16} parent=76 // loop_footer_branch
                %374 = sbr.rel target = $region79
              $region84: #{custom-call.16} parent=76 // loop_exit
                _
            $region77: #{custom-call.16} parent=61 // pred_fallthru
              _
            // Predicated region
            $region85: #{custom-call.16} parent=61 // pred_check
              _
            $region86: #{custom-call.16} parent=61 // pred_check_branch
              %385 = sbr.rel target = $region88
            $region87: #{custom-call.16} parent=61 // pred_region
              _
            $region88: #{custom-call.16} parent=61 // pred_fallthru
              _
          $region62: #{custom-call.16} parent=57 // pred_fallthru
            _
          // Predicated region
          $region63: #{custom-call.16} parent=57 // pred_check
            _
          $region64: #{custom-call.16} parent=57 // pred_check_branch
            %359 = sbr.rel target = $region66
          $region65: #{custom-call.16} parent=57 // pred_region
            %s361 = ssub.s32 256, 1
            loop: start=0, step=1, limit=1
            $region67: #{custom-call.16} parent=65 // loop_pre_header
              _
            $region68: #{custom-call.16} parent=65 // loop_header
              %s363 = sphi 0, %s367
              %p364 = scmp.ge.s32.totalorder %s363, 1
              %s368 = sphi %s349, %s349
              %s369 = sphi %s353, %s353
            $region69: #{custom-call.16} parent=65 // loop_header_branch
              %366 = sbr.rel (%p364) target = $region73
            $region70: #{custom-call.16} parent=65 // loop_body
              %v370 = vld [vmem:[%s368] sm:%s361]
              %371 = vst [vmem:[%s369] sm:%s361] %v370
            $region71: #{custom-call.16} parent=65 // loop_footer
              %s367 = sadd.s32 1, %s363
            $region72: #{custom-call.16} parent=65 // loop_footer_branch
              %362 = sbr.rel target = $region68
            $region73: #{custom-call.16} parent=65 // loop_exit
              _
          $region66: #{custom-call.16} parent=57 // pred_fallthru
            _
        $region58: #{custom-call.16} parent=53 // pred_fallthru
          _
        %386 = vnop
      $region54: #{custom-call.16} parent=5 // pred_fallthru
        _
      %p387 = scmp.le.s32.totalorder 2, %s3
      // Predicated region
      $region89: #{custom-call.16} parent=5 // pred_check
        %p388 = pneg %p387
      $region90: #{custom-call.16} parent=5 // pred_check_branch
        %390 = sbr.rel (%p388) target = $region92
      $region91: #{custom-call.16} parent=5 // pred_region
        %s391 = ssub.s32 %s3, 2
        %s392 = sand.u32 %s9, 1
        %s393 = sand.u32 %s9, 1
        %s394 = smul.addr %s393, 8
        %s395 = scalar_lea.vmem [#allocation1], %s394
      $region92: #{custom-call.16} parent=5 // pred_fallthru
        _
    $region6: #{custom-call.16} parent=1 // loop_footer
      %s7 = sadd.s32 1, %s3
    $region7: #{custom-call.16} parent=1 // loop_footer_branch
      %2 = sbr.rel target = $region3
    $region8: #{custom-call.16} parent=1 // loop_exit
      _

// kernel: gmm_est_forward.3
$region0: #{gmm_est_forward.3}
  #allocation0 [shape = 'u32[]', space=smem, size = 0x4, offset = 0x4, fixed_abs, tag = 'smem constant byte address 0x4 - core index']
  #allocation1 [shape = 'u32[72,128]{1,0:T(1,128)}', space=vmem, size = 0x9000, scoped, tag = 'internal scratch']
  %s0 = inlined_call_operand.vmem [shape: f32[8,384], index: 0, kind: input, shape index: {}]
  %s1 = inlined_call_operand.vmem [shape: f32[32,8], index: 1, kind: input, shape index: {}]
  %s2 = inlined_call_operand.vmem [shape: f32[32,1], index: 2, kind: input, shape index: {}]
  %s3 = inlined_call_operand.vmem [shape: f32[4,32], index: 3, kind: input, shape index: {}]
  %s4 = inlined_call_operand.vmem [shape: f32[4,1], index: 4, kind: input, shape index: {}]
  %s5 = inlined_call_operand.vmem [shape: f32[4,384], index: 5, kind: output, shape index: {0}]
  %s6 = inlined_call_operand.vmem [shape: f32[4,1], index: 6, kind: output, shape index: {1}]
  %s7 = inlined_call_operand.vmem [shape: f32[4,8], index: 7, kind: output, shape index: {2}]
  %8 = xla_tuple %s5, %s6, %s7
  %s9 = sld [smem:[#allocation0]]
  $region73: #{gmm_est_forward.3} parent=0
    _
  %s11 = ssub.s32 1, %s9
  %s12 = scalar_select 0, %s11, %s9
  loop: start=0, step=1, limit=5
  $region2: #{gmm_est_forward.3} parent=0 // loop_pre_header
    _
  $region3: #{gmm_est_forward.3} parent=0 // loop_header
    %s14 = sphi 0, %s18
    %p15 = scmp.ge.s32.totalorder %s14, 5
    %s24 = sphi 0, %s26
    %s27 = sphi 0, %s24
    %s28 = sphi 0, %s27
    %s44 = sphi 0, %s28
    %s48 = sphi 0, %s48
    %s50 = sphi 0, %s48
    %s51 = sphi 0, %s50
    %s65 = sphi 0, %s51
    %s69 = sphi 0, %s69
    %s71 = sphi 0, %s69
    %s72 = sphi 0, %s71
    %s86 = sphi 0, %s72
    %s90 = sphi 0, %s90
    %s92 = sphi 0, %s90
    %s93 = sphi 0, %s92
    %s107 = sphi 0, %s93
    %s111 = sphi 0, %s111
    %s113 = sphi 0, %s111
    %s114 = sphi 0, %s113
    %s128 = sphi 0, %s114
    %s134 = sphi 0, %s136
    %s137 = sphi 0, %s134
    %s138 = sphi 0, %s137
    %s154 = sphi 0, %s138
    %s158 = sphi 0, %s158
    %s160 = sphi 0, %s158
    %s161 = sphi 0, %s160
    %s175 = sphi 0, %s161
    %s179 = sphi 0, %s179
    %s181 = sphi 0, %s179
    %s182 = sphi 0, %s181
    %s196 = sphi 0, %s182
  $region4: #{gmm_est_forward.3} parent=0 // loop_header_branch
    %17 = sbr.rel (%p15) target = $region8
  $region5: #{gmm_est_forward.3} parent=0 // loop_body
    %s19 = ssub.s32 %s14, 1
    %s20 = ssub.s32 %s14, 2
    %s21 = sadd.s32 %s14, 1
    %s22 = ssub.s32 %s14, %s21
    %p23 = scmp.eq.s32.totalorder %s22, 0
    %s25 = sadd.s32 %s24, 1
    %s26 = scalar_select %p23, %s24, %s25
    %p29 = pneg %p23
    %p30 = scmp.eq.s32.totalorder %s14, 2
    %p31 = por %p29, %p30
    %p32 = scmp.ne.s32.totalorder %s24, %s27
    %p33 = scmp.eq.s32.totalorder %s14, 0
    %p34 = por %p32, %p33
    %p35 = scmp.ne.s32.totalorder %s24, %s27
    %p36 = scmp.eq.s32.totalorder %s19, 2
    %p37 = por %p35, %p36
    %p38 = scmp.ne.s32.totalorder %s27, %s28
    %p39 = scmp.eq.s32.totalorder %s19, 0
    %p40 = por %p38, %p39
    %p41 = scmp.ne.s32.totalorder %s27, %s28
    %p42 = scmp.eq.s32.totalorder %s20, 2
    %p43 = por %p41, %p42
    %p45 = scmp.ne.s32.totalorder %s28, %s44
    %p46 = scmp.eq.s32.totalorder %s20, 0
    %p47 = por %p45, %p46
    %s49 = sadd.s32 %s48, 1
    %p52 = scmp.eq.s32.totalorder %s14, 2
    %p53 = scmp.ne.s32.totalorder %s48, %s50
    %p54 = scmp.eq.s32.totalorder %s14, 0
    %p55 = por %p53, %p54
    %p56 = scmp.ne.s32.totalorder %s48, %s50
    %p57 = scmp.eq.s32.totalorder %s19, 2
    %p58 = por %p56, %p57
    %p59 = scmp.ne.s32.totalorder %s50, %s51
    %p60 = scmp.eq.s32.totalorder %s19, 0
    %p61 = por %p59, %p60
    %p62 = scmp.ne.s32.totalorder %s50, %s51
    %p63 = scmp.eq.s32.totalorder %s20, 2
    %p64 = por %p62, %p63
    %p66 = scmp.ne.s32.totalorder %s51, %s65
    %p67 = scmp.eq.s32.totalorder %s20, 0
    %p68 = por %p66, %p67
    %s70 = sadd.s32 %s69, 1
    %p73 = scmp.eq.s32.totalorder %s14, 2
    %p74 = scmp.ne.s32.totalorder %s69, %s71
    %p75 = scmp.eq.s32.totalorder %s14, 0
    %p76 = por %p74, %p75
    %p77 = scmp.ne.s32.totalorder %s69, %s71
    %p78 = scmp.eq.s32.totalorder %s19, 2
    %p79 = por %p77, %p78
    %p80 = scmp.ne.s32.totalorder %s71, %s72
    %p81 = scmp.eq.s32.totalorder %s19, 0
    %p82 = por %p80, %p81
    %p83 = scmp.ne.s32.totalorder %s71, %s72
    %p84 = scmp.eq.s32.totalorder %s20, 2
    %p85 = por %p83, %p84
    %p87 = scmp.ne.s32.totalorder %s72, %s86
    %p88 = scmp.eq.s32.totalorder %s20, 0
    %p89 = por %p87, %p88
    %s91 = sadd.s32 %s90, 1
    %p94 = scmp.eq.s32.totalorder %s14, 2
    %p95 = scmp.ne.s32.totalorder %s90, %s92
    %p96 = scmp.eq.s32.totalorder %s14, 0
    %p97 = por %p95, %p96
    %p98 = scmp.ne.s32.totalorder %s90, %s92
    %p99 = scmp.eq.s32.totalorder %s19, 2
    %p100 = por %p98, %p99
    %p101 = scmp.ne.s32.totalorder %s92, %s93
    %p102 = scmp.eq.s32.totalorder %s19, 0
    %p103 = por %p101, %p102
    %p104 = scmp.ne.s32.totalorder %s92, %s93
    %p105 = scmp.eq.s32.totalorder %s20, 2
    %p106 = por %p104, %p105
    %p108 = scmp.ne.s32.totalorder %s93, %s107
    %p109 = scmp.eq.s32.totalorder %s20, 0
    %p110 = por %p108, %p109
    %s112 = sadd.s32 %s111, 1
    %p115 = scmp.eq.s32.totalorder %s14, 2
    %p116 = scmp.ne.s32.totalorder %s111, %s113
    %p117 = scmp.eq.s32.totalorder %s14, 0
    %p118 = por %p116, %p117
    %p119 = scmp.ne.s32.totalorder %s111, %s113
    %p120 = scmp.eq.s32.totalorder %s19, 2
    %p121 = por %p119, %p120
    %p122 = scmp.ne.s32.totalorder %s113, %s114
    %p123 = scmp.eq.s32.totalorder %s19, 0
    %p124 = por %p122, %p123
    %p125 = scmp.ne.s32.totalorder %s113, %s114
    %p126 = scmp.eq.s32.totalorder %s20, 2
    %p127 = por %p125, %p126
    %p129 = scmp.ne.s32.totalorder %s114, %s128
    %p130 = scmp.eq.s32.totalorder %s20, 0
    %p131 = por %p129, %p130
    %s132 = ssub.s32 %s14, %s21
    %p133 = scmp.eq.s32.totalorder %s132, 0
    %s135 = sadd.s32 %s134, 1
    %s136 = scalar_select %p133, %s134, %s135
    %p139 = pneg %p133
    %p140 = scmp.eq.s32.totalorder %s14, 2
    %p141 = por %p139, %p140
    %p142 = scmp.ne.s32.totalorder %s134, %s137
    %p143 = scmp.eq.s32.totalorder %s14, 0
    %p144 = por %p142, %p143
    %p145 = scmp.ne.s32.totalorder %s134, %s137
    %p146 = scmp.eq.s32.totalorder %s19, 2
    %p147 = por %p145, %p146
    %p148 = scmp.ne.s32.totalorder %s137, %s138
    %p149 = scmp.eq.s32.totalorder %s19, 0
    %p150 = por %p148, %p149
    %p151 = scmp.ne.s32.totalorder %s137, %s138
    %p152 = scmp.eq.s32.totalorder %s20, 2
    %p153 = por %p151, %p152
    %p155 = scmp.ne.s32.totalorder %s138, %s154
    %p156 = scmp.eq.s32.totalorder %s20, 0
    %p157 = por %p155, %p156
    %s159 = sadd.s32 %s158, 1
    %p162 = scmp.eq.s32.totalorder %s14, 2
    %p163 = scmp.ne.s32.totalorder %s158, %s160
    %p164 = scmp.eq.s32.totalorder %s14, 0
    %p165 = por %p163, %p164
    %p166 = scmp.ne.s32.totalorder %s158, %s160
    %p167 = scmp.eq.s32.totalorder %s19, 2
    %p168 = por %p166, %p167
    %p169 = scmp.ne.s32.totalorder %s160, %s161
    %p170 = scmp.eq.s32.totalorder %s19, 0
    %p171 = por %p169, %p170
    %p172 = scmp.ne.s32.totalorder %s160, %s161
    %p173 = scmp.eq.s32.totalorder %s20, 2
    %p174 = por %p172, %p173
    %p176 = scmp.ne.s32.totalorder %s161, %s175
    %p177 = scmp.eq.s32.totalorder %s20, 0
    %p178 = por %p176, %p177
    %s180 = sadd.s32 %s179, 1
    %p183 = scmp.eq.s32.totalorder %s14, 2
    %p184 = scmp.ne.s32.totalorder %s179, %s181
    %p185 = scmp.eq.s32.totalorder %s14, 0
    %p186 = por %p184, %p185
    %p187 = scmp.ne.s32.totalorder %s179, %s181
    %p188 = scmp.eq.s32.totalorder %s19, 2
    %p189 = por %p187, %p188
    %p190 = scmp.ne.s32.totalorder %s181, %s182
    %p191 = scmp.eq.s32.totalorder %s19, 0
    %p192 = por %p190, %p191
    %p193 = scmp.ne.s32.totalorder %s181, %s182
    %p194 = scmp.eq.s32.totalorder %s20, 2
    %p195 = por %p193, %p194
    %p197 = scmp.ne.s32.totalorder %s182, %s196
    %p198 = scmp.eq.s32.totalorder %s20, 0
    %p199 = por %p197, %p198
    %p200 = scmp.le.s32.totalorder 1, %s14
    %p201 = scmp.lt.s32.totalorder %s14, 4
    %p202 = pnand %p200, %p201
    %p203 = pneg %p202
    // Predicated region
    $region9: #{gmm_est_forward.3} parent=5 // pred_check
      _
    $region10: #{gmm_est_forward.3} parent=5 // pred_check_branch
      %205 = sbr.rel (%p202) target = $region12
    $region11: #{gmm_est_forward.3} parent=5 // pred_region
      %s206 = ssub.s32 %s14, 1
      // Predicated region
      $region13: #{gmm_est_forward.3} parent=11 // pred_check
        %p207 = pneg %p61
      $region14: #{gmm_est_forward.3} parent=11 // pred_check_branch
        %209 = sbr.rel (%p207) target = $region16
      $region15: #{gmm_est_forward.3} parent=11 // pred_region
        _
      $region16: #{gmm_est_forward.3} parent=11 // pred_fallthru
        _
      // Predicated region
      $region17: #{gmm_est_forward.3} parent=11 // pred_check
        %p210 = pneg %p82
      $region18: #{gmm_est_forward.3} parent=11 // pred_check_branch
        %212 = sbr.rel (%p210) target = $region20
      $region19: #{gmm_est_forward.3} parent=11 // pred_region
        _
      $region20: #{gmm_est_forward.3} parent=11 // pred_fallthru
        _
      // Predicated region
      $region21: #{gmm_est_forward.3} parent=11 // pred_check
        %p213 = pneg %p103
      $region22: #{gmm_est_forward.3} parent=11 // pred_check_branch
        %215 = sbr.rel (%p213) target = $region24
      $region23: #{gmm_est_forward.3} parent=11 // pred_region
        _
      $region24: #{gmm_est_forward.3} parent=11 // pred_fallthru
        _
      // Predicated region
      $region25: #{gmm_est_forward.3} parent=11 // pred_check
        %p216 = pneg %p124
      $region26: #{gmm_est_forward.3} parent=11 // pred_check_branch
        %218 = sbr.rel (%p216) target = $region28
      $region27: #{gmm_est_forward.3} parent=11 // pred_region
        _
      $region28: #{gmm_est_forward.3} parent=11 // pred_fallthru
        _
    $region12: #{gmm_est_forward.3} parent=5 // pred_fallthru
      _
    %p219 = scmp.lt.s32.totalorder %s14, 3
    // Predicated region
    $region29: #{gmm_est_forward.3} parent=5 // pred_check
      %p220 = pneg %p219
    $region30: #{gmm_est_forward.3} parent=5 // pred_check_branch
      %222 = sbr.rel (%p220) target = $region32
    $region31: #{gmm_est_forward.3} parent=5 // pred_region
      // Predicated region
      $region33: #{gmm_est_forward.3} parent=31 // pred_check
        %p223 = pneg %p34
      $region34: #{gmm_est_forward.3} parent=31 // pred_check_branch
        %225 = sbr.rel (%p223) target = $region36
      $region35: #{gmm_est_forward.3} parent=31 // pred_region
        %p226 = scmp.lt.s32.totalorder %s14, 2
        %s227 = scalar_select %p226, %s14, 2
        %s228 = smul.addr %s227, 8
        %s229 = scalar_lea.vmem %s0, %s228
      $region36: #{gmm_est_forward.3} parent=31 // pred_fallthru
        _
    $region32: #{gmm_est_forward.3} parent=5 // pred_fallthru
      _
    %p230 = scmp.le.s32.totalorder 1, %s14
    %p231 = scmp.lt.s32.totalorder %s14, 4
    %p232 = pnand %p230, %p231
    %p233 = pneg %p232
    // Predicated region
    $region37: #{gmm_est_forward.3} parent=5 // pred_check
      _
    $region38: #{gmm_est_forward.3} parent=5 // pred_check_branch
      %235 = sbr.rel (%p232) target = $region40
    $region39: #{gmm_est_forward.3} parent=5 // pred_region
      %s236 = ssub.s32 %s14, 1
      %p237 = scmp.lt.s32.totalorder %s19, 2
      %s238 = scalar_select %p237, %s19, 2
      %s239 = smul.addr %s238, 8
      %s240 = scalar_lea.vmem %s0, %s239
      %p241 = pneg %p40
      %p242 = pneg %p37
      %p243 = pneg %p61
      %p244 = pneg %p58
      %p245 = pneg %p82
      %p246 = pneg %p79
      %p247 = pneg %p103
      %p248 = pneg %p100
      %p249 = pneg %p124
      %p250 = pneg %p121
      %p251 = pneg %p150
      %p252 = pneg %p147
      %p253 = scmp.lt.s32.totalorder %s19, 2
      %s254 = scalar_select %p253, %s19, 2
      %s255 = smul.addr %s254, 4
      %s256 = scalar_lea.vmem %s5, %s255
      %p257 = pneg %p171
      %p258 = pneg %p168
      %p259 = pneg %p192
      %p260 = pneg %p189
      %p261 = scmp.lt.s32.totalorder %s19, 2
      %s262 = scalar_select %p261, %s19, 2
      %s263 = smul.addr %s262, 8
      %s264 = scalar_lea.vmem %s0, %s263
      %p265 = scmp.lt.s32.totalorder %s19, 2
      %s266 = scalar_select %p265, %s19, 2
      %s267 = smul.addr %s266, 4
      %s268 = scalar_lea.vmem %s5, %s267
      %v269 = vld [vmem:[%s264] sm:$0xff]
      %v270 = vld [vmem:[%s1] sm:$0xff]
      %v271 = vld [vmem:[%s1 + $0x8] sm:$0xff]
      %v272 = vld [vmem:[%s1 + $0x10] sm:$0xff]
      %v273 = vld [vmem:[%s1 + $0x18] sm:$0xff]
      %v274 = vld [vmem:[%s2] sm:$0xff]
      %v275 = vld [vmem:[%s2 + $0x8] sm:$0xff]
      %v276 = vld [vmem:[%s2 + $0x10] sm:$0xff]
      %v277 = vld [vmem:[%s2 + $0x18] sm:$0xff]
      %279 = vset.pattern.permute.xlu0 0
      %280 = vperm.xlu0 %279, %v274
      %v281 = vpop.permute.xlu0 %280
      %284 = vset.pattern.permute.xlu0 0
      %285 = vperm.xlu0 %284, %v275
      %v286 = vpop.permute.xlu0 %285
      %289 = vset.pattern.permute.xlu0 0
      %290 = vperm.xlu0 %289, %v276
      %v291 = vpop.permute.xlu0 %290
      %294 = vset.pattern.permute.xlu0 0
      %295 = vperm.xlu0 %294, %v277
      %v296 = vpop.permute.xlu0 %295
      %vm298 = vcmask 64512
      %v300 = vsel %vm298, %v270, 0
      %v303 = vsel %vm298, %v271, 0
      %v306 = vsel %vm298, %v272, 0
      %v309 = vsel %vm298, %v273, 0
      %311 = vmatpush.msra.mxu0 0.0
      %312 = vmatpush.msra.mxu0 0.0
      %313 = vmatpush.msra.mxu0 0.0
      %314 = vmatpush.msra.mxu0 0.0
      %315 = vmatpush.msra.mxu0 0.0
      %316 = vmatpush.msra.mxu0 0.0
      %317 = vmatpush.msra.mxu0 0.0
      %318 = vmatpush.msra.mxu0 0.0
      %319 = vmatpush.msra.mxu0 0.0
      %320 = vmatpush.msra.mxu0 0.0
      %321 = vmatpush.msra.mxu0 0.0
      %322 = vmatpush.msra.mxu0 0.0
      %323 = vmatpush.msra.mxu0 0.0
      %324 = vmatpush.msra.mxu0 0.0
      %325 = vmatpush.msra.mxu0 0.0
      %326 = vmatpush.msra.mxu0 %v269
      %327 = vmatmul.f32.gmra.mxu0 %v300
      %v328 = vpop.f32.mrf.mxu0
      %v329 = vadd.f32 %v281, %v328
      %330 = vmatmul.f32.gmra.mxu0 %v303
      %v331 = vpop.f32.mrf.mxu0
      %v332 = vadd.f32 %v286, %v331
      %333 = vmatmul.f32.gmra.mxu0 %v306
      %v334 = vpop.f32.mrf.mxu0
      %v335 = vadd.f32 %v291, %v334
      %336 = vmatmul.f32.gmra.mxu0 %v309
      %v337 = vpop.f32.mrf.mxu0
      %v338 = vadd.f32 %v296, %v337
      %339 = vdwg.mxu0
      %v340 = vtanh.pop %v329
      %v341 = vtanh.pop %v332
      %v342 = vtanh.pop %v335
      %v343 = vtanh.pop %v338
      %v344 = vld [vmem:[%s3] sm:$0xf]
      %v345 = vld [vmem:[%s4] sm:$0xf]
      %347 = vset.pattern.permute.xlu0 0
      %348 = vperm.xlu0 %347, %v345
      %v349 = vpop.permute.xlu0 %348
      %vm351 = vcmask 261120
      %v353 = vsel %vm351, %v344, 0
      %355 = vmatpush.msra.mxu0 0.0
      %356 = vmatpush.msra.mxu0 0.0
      %357 = vmatpush.msra.mxu0 0.0
      %358 = vmatpush.msra.mxu0 0.0
      %359 = vmatpush.msra.mxu0 0.0
      %360 = vmatpush.msra.mxu0 0.0
      %361 = vmatpush.msra.mxu0 0.0
      %362 = vmatpush.msra.mxu0 0.0
      %363 = vmatpush.msra.mxu0 0.0
      %364 = vmatpush.msra.mxu0 0.0
      %365 = vmatpush.msra.mxu0 0.0
      %366 = vmatpush.msra.mxu0 0.0
      %367 = vmatpush.msra.mxu0 %v343
      %368 = vmatpush.msra.mxu0 %v342
      %369 = vmatpush.msra.mxu0 %v341
      %370 = vmatpush.msra.mxu0 %v340
      %371 = vmatmul.f32.gmra.mxu0 %v353
      %v372 = vpop.f32.mrf.mxu0
      %v373 = vadd.f32 %v349, %v372
      %374 = vdwg.mxu0
      %vm375 = vcmask 1043456
      %v376 = vsel %vm375, %v373, -inf
      %v377 = vrot.slane %v376, 4
      %v378 = vmax.f32 %v376, %v377
      %v379 = vrot.slane %v378, 2
      %v380 = vmax.f32 %v378, %v379
      %v381 = vrot.slane %v380, 1
      %v382 = vmax.f32 %v380, %v381
      %v383 = vsub.f32 %v373, %v382
      %v384 = vmul.f32 %v383, 1.442695
      %v385 = vpow.pop %v384
      %v386 = vsel %vm375, %v385, 0.0
      %v387 = vrot.slane %v386, 4
      %v388 = vadd.f32 %v386, %v387
      %v389 = vrot.slane %v388, 2
      %v390 = vadd.f32 %v388, %v389
      %v391 = vrot.slane %v390, 1
      %v392 = vadd.f32 %v390, %v391
      %v393 = vrcp.pop %v392
      %v394 = vmul.f32 %v392, %v393
      %v395 = vsub.f32 1.0, %v394
      %v396 = vmul.f32 %v393, %v395
      %v397 = vadd.f32 %v393, %v396
      %vm398 = vweird.f32 %v392
      %vm399 = vweird.f32 %v393
      %vm400 = vmor %vm398, %vm399
      %v401 = vsel %vm400, %v393, %v397
      %v402 = vand.u32 2147483647, %v392
      %vm403 = vcmp.eq.f32.partialorder %v402, 8.507059e+37
      %v404 = vand.u32 %v392, 2147483648
      %v405 = vor.u32 1.1754944e-38, %v404
      %v406 = vsel %vm403, %v405, %v401
      %v407 = vmul.f32 %v385, %v406
      %408 = vst [vmem:[%s268] sm:$0xf] %v407
      %p409 = scmp.eq.s32.totalorder %s19, 0
      // Predicated region
      $region41: #{gmm_est_forward.3} parent=39 // pred_check
        %p410 = pneg %p409
      $region42: #{gmm_est_forward.3} parent=39 // pred_check_branch
        %412 = sbr.rel (%p410) target = $region44
      $region43: #{gmm_est_forward.3} parent=39 // pred_region
        %vm413 = vcmask 3072
        %414 = vst.msk [vmem:[%s6] sm:$0xf] %vm413, 0.0
        %vm415 = vcmask 60416
        %416 = vst.msk [vmem:[%s7] sm:$0xf] %vm415, 0.0
      $region44: #{gmm_est_forward.3} parent=39 // pred_fallthru
        _
      %v417 = vld [vmem:[%s6] sm:$0xf]
      %v418 = vsel %vm375, %v407, 0.0
      %419 = vadd.xlane.f32.xlu0 %v418
      %v420 = vpop.xlane.xlu0 %419
      %v421 = vadd.f32 %v417, %v420
      %vm422 = vcmask 3072
      %423 = vst.msk [vmem:[%s6] sm:$0xf] %vm422, %v421
      %v424 = vld [vmem:[%s7] sm:$0xf]
      %425 = vmatpush.xpose.msra.mxu0 0.0
      %426 = vmatpush.xpose.msra.mxu0 0.0
      %427 = vmatpush.xpose.msra.mxu0 0.0
      %428 = vmatpush.xpose.msra.mxu0 0.0
      %429 = vmatpush.xpose.msra.mxu0 0.0
      %430 = vmatpush.xpose.msra.mxu0 0.0
      %431 = vmatpush.xpose.msra.mxu0 0.0
      %432 = vmatpush.xpose.msra.mxu0 0.0
      %433 = vmatpush.xpose.msra.mxu0 0.0
      %434 = vmatpush.xpose.msra.mxu0 0.0
      %435 = vmatpush.xpose.msra.mxu0 0.0
      %436 = vmatpush.xpose.msra.mxu0 0.0
      %437 = vmatpush.xpose.msra.mxu0 0.0
      %438 = vmatpush.xpose.msra.mxu0 0.0
      %439 = vmatpush.xpose.msra.mxu0 0.0
      %440 = vmatpush.xpose.msra.mxu0 %v269
      %441 = vmatmul.f32.gmra.mxu0 %v407
      %v442 = vpop.f32.mrf.mxu0
      %v443 = vadd.f32 0.0, %v442
      %444 = vdwg.mxu0
      %v445 = vadd.f32 %v424, %v443
      %vm446 = vcmask 60416
      %447 = vst.msk [vmem:[%s7] sm:$0xf] %vm446, %v445
      %p448 = scmp.lt.s32.totalorder %s19, 2
      %s449 = scalar_select %p448, %s19, 2
      %s450 = smul.addr %s449, 4
      %s451 = scalar_lea.vmem %s5, %s450
      // Predicated region
      $region45: #{gmm_est_forward.3} parent=39 // pred_check
        %p452 = pneg %p147
      $region46: #{gmm_est_forward.3} parent=39 // pred_check_branch
        %454 = sbr.rel (%p452) target = $region48
      $region47: #{gmm_est_forward.3} parent=39 // pred_region
        _
      $region48: #{gmm_est_forward.3} parent=39 // pred_fallthru
        _
      // Predicated region
      $region49: #{gmm_est_forward.3} parent=39 // pred_check
        %p455 = pneg %p168
      $region50: #{gmm_est_forward.3} parent=39 // pred_check_branch
        %457 = sbr.rel (%p455) target = $region52
      $region51: #{gmm_est_forward.3} parent=39 // pred_region
        _
      $region52: #{gmm_est_forward.3} parent=39 // pred_fallthru
        _
      // Predicated region
      $region53: #{gmm_est_forward.3} parent=39 // pred_check
        %p458 = pneg %p189
      $region54: #{gmm_est_forward.3} parent=39 // pred_check_branch
        %460 = sbr.rel (%p458) target = $region56
      $region55: #{gmm_est_forward.3} parent=39 // pred_region
        _
      $region56: #{gmm_est_forward.3} parent=39 // pred_fallthru
        _
      // Predicated region
      $region57: #{gmm_est_forward.3} parent=39 // pred_check
        %p461 = pneg %p168
      $region58: #{gmm_est_forward.3} parent=39 // pred_check_branch
        %463 = sbr.rel (%p461) target = $region60
      $region59: #{gmm_est_forward.3} parent=39 // pred_region
        _
      $region60: #{gmm_est_forward.3} parent=39 // pred_fallthru
        _
      // Predicated region
      $region61: #{gmm_est_forward.3} parent=39 // pred_check
        %p464 = pneg %p189
      $region62: #{gmm_est_forward.3} parent=39 // pred_check_branch
        %466 = sbr.rel (%p464) target = $region64
      $region63: #{gmm_est_forward.3} parent=39 // pred_region
        _
      $region64: #{gmm_est_forward.3} parent=39 // pred_fallthru
        _
    $region40: #{gmm_est_forward.3} parent=5 // pred_fallthru
      _
    %p467 = scmp.le.s32.totalorder 2, %s14
    // Predicated region
    $region65: #{gmm_est_forward.3} parent=5 // pred_check
      %p468 = pneg %p467
    $region66: #{gmm_est_forward.3} parent=5 // pred_check_branch
      %470 = sbr.rel (%p468) target = $region68
    $region67: #{gmm_est_forward.3} parent=5 // pred_region
      %s471 = ssub.s32 %s14, 2
      // Predicated region
      $region69: #{gmm_est_forward.3} parent=67 // pred_check
        %p472 = pneg %p153
      $region70: #{gmm_est_forward.3} parent=67 // pred_check_branch
        %474 = sbr.rel (%p472) target = $region72
      $region71: #{gmm_est_forward.3} parent=67 // pred_region
        %p475 = scmp.lt.s32.totalorder %s20, 2
        %s476 = scalar_select %p475, %s20, 2
        %s477 = smul.addr %s476, 4
        %s478 = scalar_lea.vmem %s5, %s477
      $region72: #{gmm_est_forward.3} parent=67 // pred_fallthru
        _
    $region68: #{gmm_est_forward.3} parent=5 // pred_fallthru
      _
  $region6: #{gmm_est_forward.3} parent=0 // loop_footer
    %s18 = sadd.s32 1, %s14
  $region7: #{gmm_est_forward.3} parent=0 // loop_footer_branch
    %13 = sbr.rel target = $region3
  $region8: #{gmm_est_forward.3} parent=0 // loop_exit
    _

// kernel: custom-call.13
$region0: #{custom-call.13}
  %s0 = inlined_call_operand.vmem [shape: f32[4,8,8], index: 0, kind: input, shape index: {}]
  %s1 = inlined_call_operand.vmem [shape: f32[4,8,8], index: 1, kind: output, shape index: {0}]
  %s2 = inlined_call_operand.hbm [shape: s32[4,8], index: 2, kind: output, shape index: {1}]
  %s3 = inlined_call_operand.vmem [shape: s32[4,8], index: 3, kind: output, shape index: {2}]
  %4 = xla_tuple %s1, %s2, %s3
  $region1: #{custom-call.13} parent=0
    #allocation0 [shape = 'u8[8192]{0}', space=vmem, size = 0x2000, scoped, tag = 'operand span for operand 0']
    #allocation1 [shape = 'u8[8192]{0}', space=vmem, size = 0x2000, scoped, tag = 'operand span for operand 1']
    #allocation2 [shape = 'u8[4096]{0}', space=vmem, size = 0x1000, scoped, tag = 'operand span for operand 2']
    #allocation3 [shape = 'u8[4096]{0}', space=vmem, size = 0x1000, scoped, tag = 'packed  for operand 2']
    #allocation4 [shape = 's32[2]{0}', space=sflag, size = 0x8, scoped, tag = 'scoped memory for custom-call.13']
    #allocation5 [shape = 'u8[4096]{0}', space=vmem, size = 0x1000, scoped, tag = 'operand span for operand 3']
    #allocation6 [shape = 'u8[4096]{0}', space=vmem, size = 0x1000, scoped, tag = 'packed  for operand 3']
    %5 = vsyncpa [#allocation4], 0
    %s6 = scalar_lea.sflag [#allocation4], 1
    %7 = vsyncpa %s6, 0
    loop: start=0, step=1, limit=6
    $region2: #{custom-call.13} parent=1 // loop_pre_header
      _
    $region3: #{custom-call.13} parent=1 // loop_header
      %s9 = sphi 0, %s13
      %p10 = scmp.ge.s32.totalorder %s9, 6
      %s21 = sphi 0, %s23
      %s24 = sphi 0, %s21
      %s25 = sphi 0, %s24
      %s41 = sphi 0, %s25
      %s49 = sphi 0, %s51
      %s52 = sphi 0, %s49
      %s53 = sphi 0, %s52
      %s69 = sphi 0, %s53
    $region4: #{custom-call.13} parent=1 // loop_header_branch
      %12 = sbr.rel (%p10) target = $region8
    $region5: #{custom-call.13} parent=1 // loop_body
      %s14 = ssub.s32 %s9, 1
      %s15 = ssub.s32 %s9, 2
      %s16 = sadd.s32 %s9, 1
      %s17 = sshrl.u32 %s9, 3
      %s18 = sshrl.u32 %s16, 3
      %s19 = ssub.s32 %s17, %s18
      %p20 = scmp.eq.s32.totalorder %s19, 0
      %s22 = sadd.s32 %s21, 1
      %s23 = scalar_select %p20, %s21, %s22
      %p26 = pneg %p20
      %p27 = scmp.eq.s32.totalorder %s9, 3
      %p28 = por %p26, %p27
      %p29 = scmp.ne.s32.totalorder %s21, %s24
      %p30 = scmp.eq.s32.totalorder %s9, 0
      %p31 = por %p29, %p30
      %p32 = scmp.ne.s32.totalorder %s21, %s24
      %p33 = scmp.eq.s32.totalorder %s14, 3
      %p34 = por %p32, %p33
      %p35 = scmp.ne.s32.totalorder %s24, %s25
      %p36 = scmp.eq.s32.totalorder %s14, 0
      %p37 = por %p35, %p36
      %p38 = scmp.ne.s32.totalorder %s24, %s25
      %p39 = scmp.eq.s32.totalorder %s15, 3
      %p40 = por %p38, %p39
      %p42 = scmp.ne.s32.totalorder %s25, %s41
      %p43 = scmp.eq.s32.totalorder %s15, 0
      %p44 = por %p42, %p43
      %s45 = sshrl.u32 %s9, 3
      %s46 = sshrl.u32 %s16, 3
      %s47 = ssub.s32 %s45, %s46
      %p48 = scmp.eq.s32.totalorder %s47, 0
      %s50 = sadd.s32 %s49, 1
      %s51 = scalar_select %p48, %s49, %s50
      %p54 = pneg %p48
      %p55 = scmp.eq.s32.totalorder %s9, 3
      %p56 = por %p54, %p55
      %p57 = scmp.ne.s32.totalorder %s49, %s52
      %p58 = scmp.eq.s32.totalorder %s9, 0
      %p59 = por %p57, %p58
      %p60 = scmp.ne.s32.totalorder %s49, %s52
      %p61 = scmp.eq.s32.totalorder %s14, 3
      %p62 = por %p60, %p61
      %p63 = scmp.ne.s32.totalorder %s52, %s53
      %p64 = scmp.eq.s32.totalorder %s14, 0
      %p65 = por %p63, %p64
      %p66 = scmp.ne.s32.totalorder %s52, %s53
      %p67 = scmp.eq.s32.totalorder %s15, 3
      %p68 = por %p66, %p67
      %p70 = scmp.ne.s32.totalorder %s53, %s69
      %p71 = scmp.eq.s32.totalorder %s15, 0
      %p72 = por %p70, %p71
      %p73 = scmp.le.s32.totalorder 1, %s9
      %p74 = scmp.lt.s32.totalorder %s9, 5
      %p75 = pnand %p73, %p74
      %p76 = pneg %p75
      // Predicated region
      $region9: #{custom-call.13} parent=5 // pred_check
        _
      $region10: #{custom-call.13} parent=5 // pred_check_branch
        %78 = sbr.rel (%p75) target = $region12
      $region11: #{custom-call.13} parent=5 // pred_region
        %s79 = ssub.s32 %s9, 1
      $region12: #{custom-call.13} parent=5 // pred_fallthru
        _
      %p80 = scmp.lt.s32.totalorder %s9, 4
      // Predicated region
      $region13: #{custom-call.13} parent=5 // pred_check
        %p81 = pneg %p80
      $region14: #{custom-call.13} parent=5 // pred_check_branch
        %83 = sbr.rel (%p81) target = $region16
      $region15: #{custom-call.13} parent=5 // pred_region
        %s84 = sand.u32 %s9, 1
        %s85 = sand.u32 %s9, 1
        %s86 = smul.addr %s85, 8
        %s87 = scalar_lea.vmem [#allocation0], %s86
        %s88 = smul.addr %s9, 8
        %s89 = scalar_lea.vmem %s0, %s88
        // Predicated region
        $region17: #{custom-call.13} parent=15 // pred_check
          _
        $region18: #{custom-call.13} parent=15 // pred_check_branch
          %91 = sbr.rel (0) target = $region20
        $region19: #{custom-call.13} parent=15 // pred_region
          // Predicated region
          $region21: #{custom-call.13} parent=19 // pred_check
            _
          $region22: #{custom-call.13} parent=19 // pred_check_branch
            %93 = sbr.rel (0) target = $region24
          $region23: #{custom-call.13} parent=19 // pred_region
            // Predicated region
            $region36: #{custom-call.13} parent=23 // pred_check
              _
            $region37: #{custom-call.13} parent=23 // pred_check_branch
              %109 = sbr.rel (0) target = $region39
            $region38: #{custom-call.13} parent=23 // pred_region
              loop: start=0, step=1, limit=1
              $region40: #{custom-call.13} parent=38 // loop_pre_header
                _
              $region41: #{custom-call.13} parent=38 // loop_header
                %s111 = sphi 0, %s115
                %p112 = scmp.ge.s32.totalorder %s111, 1
                %s116 = sphi %s89, %s89
                %s117 = sphi %s87, %s87
              $region42: #{custom-call.13} parent=38 // loop_header_branch
                %114 = sbr.rel (%p112) target = $region46
              $region43: #{custom-call.13} parent=38 // loop_body
                %v118 = vld [vmem:[%s116] sm:$0xff]
                %119 = vst [vmem:[%s117] sm:$0xff] %v118
              $region44: #{custom-call.13} parent=38 // loop_footer
                %s115 = sadd.s32 1, %s111
              $region45: #{custom-call.13} parent=38 // loop_footer_branch
                %110 = sbr.rel target = $region41
              $region46: #{custom-call.13} parent=38 // loop_exit
                _
            $region39: #{custom-call.13} parent=23 // pred_fallthru
              _
            // Predicated region
            $region47: #{custom-call.13} parent=23 // pred_check
              _
            $region48: #{custom-call.13} parent=23 // pred_check_branch
              %121 = sbr.rel target = $region50
            $region49: #{custom-call.13} parent=23 // pred_region
              _
            $region50: #{custom-call.13} parent=23 // pred_fallthru
              _
          $region24: #{custom-call.13} parent=19 // pred_fallthru
            _
          // Predicated region
          $region25: #{custom-call.13} parent=19 // pred_check
            _
          $region26: #{custom-call.13} parent=19 // pred_check_branch
            %95 = sbr.rel target = $region28
          $region27: #{custom-call.13} parent=19 // pred_region
            %s97 = ssub.s32 256, 1
            loop: start=0, step=1, limit=1
            $region29: #{custom-call.13} parent=27 // loop_pre_header
              _
            $region30: #{custom-call.13} parent=27 // loop_header
              %s99 = sphi 0, %s103
              %p100 = scmp.ge.s32.totalorder %s99, 1
              %s104 = sphi %s89, %s89
              %s105 = sphi %s87, %s87
            $region31: #{custom-call.13} parent=27 // loop_header_branch
              %102 = sbr.rel (%p100) target = $region35
            $region32: #{custom-call.13} parent=27 // loop_body
              %v106 = vld [vmem:[%s104] sm:%s97]
              %107 = vst [vmem:[%s105] sm:%s97] %v106
            $region33: #{custom-call.13} parent=27 // loop_footer
              %s103 = sadd.s32 1, %s99
            $region34: #{custom-call.13} parent=27 // loop_footer_branch
              %98 = sbr.rel target = $region30
            $region35: #{custom-call.13} parent=27 // loop_exit
              _
          $region28: #{custom-call.13} parent=19 // pred_fallthru
            _
        $region20: #{custom-call.13} parent=15 // pred_fallthru
          _
        %122 = vnop
      $region16: #{custom-call.13} parent=5 // pred_fallthru
        _
      %p123 = scmp.le.s32.totalorder 1, %s9
      %p124 = scmp.lt.s32.totalorder %s9, 5
      %p125 = pnand %p123, %p124
      %p126 = pneg %p125
      // Predicated region
      $region51: #{custom-call.13} parent=5 // pred_check
        _
      $region52: #{custom-call.13} parent=5 // pred_check_branch
        %128 = sbr.rel (%p125) target = $region54
      $region53: #{custom-call.13} parent=5 // pred_region
        #allocation7 [shape = 's32[8,128]{1,0}', space=vmem, size = 0x1000, scoped, tag = 'scratch for permutations']
        %s129 = ssub.s32 %s9, 1
        %s130 = sand.u32 %s14, 1
        %s131 = sand.u32 %s14, 1
        %s132 = smul.addr %s131, 8
        %s133 = scalar_lea.vmem [#allocation0], %s132
        %s134 = sand.u32 %s14, 1
        %s135 = sand.u32 %s14, 1
        %s136 = smul.addr %s135, 8
        %s137 = scalar_lea.vmem [#allocation0], %s136
        %s138 = sand.u32 %s14, 1
        %s139 = sand.u32 %s14, 1
        %s140 = smul.addr %s139, 8
        %s141 = scalar_lea.vmem [#allocation1], %s140
        %p142 = pneg %p37
        %p143 = pneg %p34
        %s144 = sand.u32 %s24, 1
        %s145 = scalar_lea.sflag [#allocation4], %s144
        %s146 = sand.u32 %s24, 1
        %s147 = smul.addr %s146, 4
        %s148 = scalar_lea.vmem [#allocation3], %s147
        %p149 = pneg %p65
        %p150 = pneg %p62
        %s151 = sand.u32 %s52, 1
        %s152 = sand.u32 %s52, 1
        %s153 = smul.addr %s152, 4
        %s154 = scalar_lea.vmem [#allocation6], %s153
        %s155 = sshrl.u32 %s14, 3
        %s156 = sshrl.u32 %s14, 3
        %v157 = vld [vmem:[%s133] sm:$0xff]
        %158 = vst [vmem:[%s141] sm:$0xff] %v157
        %s159 = sand.u32 %s14, 7
        %s160 = scalar_lea.vmem [#allocation2], %s159
        %s161 = sand.u32 %s14, 7
        %s162 = scalar_lea.vmem [#allocation5], %s161
        %163 = vst [vmem:[%s160] sm:$0x1] 0
        %v164 = vlaneseq
        %v165 = vshrl.u32 %v164, 7
        %v166 = vmov %v165
        %168 = vst [vmem:[#allocation7] sm:$0xff] %v166
        loop: start=0, step=1, limit=8
        $region56: #{custom-call.13} parent=53 // loop_pre_header
          _
        $region57: #{custom-call.13} parent=53 // loop_header
          %s170 = sphi 0, %s174
          %p171 = scmp.ge.s32.totalorder %s170, 8
        $region58: #{custom-call.13} parent=53 // loop_header_branch
          %173 = sbr.rel (%p171) target = $region62
        $region59: #{custom-call.13} parent=53 // loop_body
          %v175 = vstv %s170
          %v176 = vlaneseq
          %v177 = vshrl.u32 %v176, 7
          %v178 = vmov %v177
          %v179 = vld [vmem:[%s141] sm:$0xff]
          %v180 = vand.u32 2147483647, %v179
          %v182 = vstv %s170
          %vm183 = vcmp.ge.s32.totalorder %v178, %v182
          %vm184 = vcmp.lt.s32.totalorder %v178, 8
          %vm185 = vmand %vm183, %vm184
          %vm186 = vcmp.lt.f32.partialorder -inf, %v180
          %vm187 = vmand %vm185, %vm186
          %v188 = vsel %vm187, %v178, %v175
          %v189 = vsel %vm187, %v180, -inf
          %v190 = vrot.slane %v189, 1
          %v191 = vrot.slane %v188, 1
          %vm192 = vcmp.ge.f32.partialorder %v190, %v189
          %v193 = vsel %vm192, %v190, %v189
          %v194 = vsel %vm192, %v191, %v188
          %v195 = vrot.slane %v190, 1
          %v196 = vrot.slane %v191, 1
          %vm197 = vcmp.ge.f32.partialorder %v195, %v193
          %v198 = vsel %vm197, %v195, %v193
          %v199 = vsel %vm197, %v196, %v194
          %v200 = vrot.slane %v195, 1
          %v201 = vrot.slane %v196, 1
          %vm202 = vcmp.ge.f32.partialorder %v200, %v198
          %v203 = vsel %vm202, %v200, %v198
          %v204 = vsel %vm202, %v201, %v199
          %v205 = vrot.slane %v200, 1
          %v206 = vrot.slane %v201, 1
          %vm207 = vcmp.ge.f32.partialorder %v205, %v203
          %v208 = vsel %vm207, %v205, %v203
          %v209 = vsel %vm207, %v206, %v204
          %v210 = vrot.slane %v205, 1
          %v211 = vrot.slane %v206, 1
          %vm212 = vcmp.ge.f32.partialorder %v210, %v208
          %v213 = vsel %vm212, %v210, %v208
          %v214 = vsel %vm212, %v211, %v209
          %v215 = vrot.slane %v210, 1
          %v216 = vrot.slane %v211, 1
          %vm217 = vcmp.ge.f32.partialorder %v215, %v213
          %v218 = vsel %vm217, %v215, %v213
          %v219 = vsel %vm217, %v216, %v214
          %v220 = vrot.slane %v215, 1
          %v221 = vrot.slane %v216, 1
          %vm222 = vcmp.ge.f32.partialorder %v220, %v218
          %v223 = vsel %vm222, %v220, %v218
          %v224 = vsel %vm222, %v221, %v219
          %s225 = ssub.s32 128, %s170
          %226 = vrot.lane.b32.xlu0 %v224, %s225
          %v227 = vpop.permute.xlu0 %226
          %s228 = vtos %v227
          %v229 = vstv %s170
          %v230 = vlaneseq
          %v231 = vand.u32 %v230, 127
          %vm232 = vcmp.eq.s32.totalorder %v231, %v229
          %v233 = vstv %s228
          %v234 = vld [vmem:[%s160] ss:$0 sm:$0xff]
          %v235 = vsel %vm232, %v233, %v234
          %236 = vst [vmem:[%s160] sm:$0x1] %v235
          %s237 = scalar_lea.vmem %s141, %s170 [#allocation1]
          %s238 = scalar_lea.vmem %s141, %s228 [#allocation1]
          %v239 = vld [vmem:[%s237] ss:$0 sm:$0xff]
          %v240 = vld [vmem:[%s238] ss:$0 sm:$0xff]
          %241 = vst [vmem:[%s238] sm:$0x1] %v239
          %242 = vst [vmem:[%s237] sm:$0x1] %v240
          %s243 = scalar_lea.vmem [#allocation7], %s170
          %s244 = scalar_lea.vmem [#allocation7], %s228
          %v245 = vld [vmem:[%s243] ss:$0 sm:$0xff]
          %v246 = vld [vmem:[%s244] ss:$0 sm:$0xff]
          %247 = vst [vmem:[%s244] sm:$0x1] %v245
          %248 = vst [vmem:[%s243] sm:$0x1] %v246
          %vm249 = vcmp.ne.f32.partialorder %v240, 0.0
          %vm250 = vmand %vm232, %vm249
          %v251 = vsel %vm250, %v240, 1.0
          %v252 = vlaneseq
          %v253 = vand.u32 %v252, 127
          %v254 = vstv %s170
          %vm255 = vcmp.gt.s32.totalorder %v253, %v254
          %v256 = vsel %vm255, %v240, 0.0
          %v257 = vlaneseq
          %v258 = vshrl.u32 %v257, 7
          %v259 = vmov %v258
          %v260 = vld [vmem:[%s141] sm:$0xff]
          %v262 = vstv %s170
          %vm263 = vcmp.gt.s32.totalorder %v259, %v262
          %v264 = vsel %vm263, %v251, 1.0
          %v265 = vrcp.pop %v264
          %v266 = vmul.f32 %v264, %v265
          %v267 = vsub.f32 1.0, %v266
          %v268 = vmul.f32 %v265, %v267
          %v269 = vadd.f32 %v265, %v268
          %vm270 = vweird.f32 %v264
          %vm271 = vweird.f32 %v265
          %vm272 = vmor %vm270, %vm271
          %v273 = vsel %vm272, %v265, %v269
          %v274 = vand.u32 2147483647, %v264
          %vm275 = vcmp.eq.f32.partialorder %v274, 8.507059e+37
          %v276 = vand.u32 %v264, 2147483648
          %v277 = vor.u32 1.1754944e-38, %v276
          %v278 = vsel %vm275, %v277, %v273
          %v279 = vmul.f32 %v260, %v278
          %vm280 = vmand %vm263, %vm232
          %v281 = vsel %vm280, %v279, 0.0
          %282 = vadd.xlane.f32.xlu0 %v281
          %v283 = vpop.xlane.xlu0 %282
          %v284 = vmul.f32 %v283, %v256
          %v285 = vsub.f32 %v279, %v284
          %286 = vst [vmem:[%s141] sm:$0xff] %v285
        $region60: #{custom-call.13} parent=53 // loop_footer
          %s174 = sadd.s32 1, %s170
        $region61: #{custom-call.13} parent=53 // loop_footer_branch
          %169 = sbr.rel target = $region57
        $region62: #{custom-call.13} parent=53 // loop_exit
          _
        %v287 = vld [vmem:[#allocation7] sm:$0xff]
        %s288 = scalar_lea.vmem [#allocation7], 8
        %s289 = scalar_lea.vmem [#allocation7], 16
        %s290 = scalar_lea.vmem [#allocation7], 24
        %s291 = scalar_lea.vmem [#allocation7], 32
        %s292 = scalar_lea.vmem [#allocation7], 40
        %s293 = scalar_lea.vmem [#allocation7], 48
        %s294 = scalar_lea.vmem [#allocation7], 56
        %s295 = scalar_lea.vmem [#allocation7], 64
        %s296 = scalar_lea.vmem [#allocation7], 72
        %s297 = scalar_lea.vmem [#allocation7], 80
        %s298 = scalar_lea.vmem [#allocation7], 88
        %s299 = scalar_lea.vmem [#allocation7], 96
        %s300 = scalar_lea.vmem [#allocation7], 104
        %s301 = scalar_lea.vmem [#allocation7], 112
        %s302 = scalar_lea.vmem [#allocation7], 120
        %303 = vxpose.xlu0.b32.start [1/16] %v287, 128
        %304 = vxpose.xlu0.b32.cont [2/16] 0, 128
        %305 = vxpose.xlu0.b32.cont [3/16] 0, 128
        %306 = vxpose.xlu0.b32.cont [4/16] 0, 128
        %307 = vxpose.xlu0.b32.cont [5/16] 0, 128
        %308 = vxpose.xlu0.b32.cont [6/16] 0, 128
        %309 = vxpose.xlu0.b32.cont [7/16] 0, 128
        %310 = vxpose.xlu0.b32.cont [8/16] 0, 128
        %311 = vxpose.xlu0.b32.cont [9/16] 0, 128
        %312 = vxpose.xlu0.b32.cont [10/16] 0, 128
        %313 = vxpose.xlu0.b32.cont [11/16] 0, 128
        %314 = vxpose.xlu0.b32.cont [12/16] 0, 128
        %315 = vxpose.xlu0.b32.cont [13/16] 0, 128
        %316 = vxpose.xlu0.b32.cont [14/16] 0, 128
        %317 = vxpose.xlu0.b32.cont [15/16] 0, 128
        %318 = vxpose.xlu0.b32.end [16/16] 0, 128
        %v319 = vpop.trf.xlu0
        %v320 = vpop.trf.xlu0
        %v321 = vpop.trf.xlu0
        %v322 = vpop.trf.xlu0
        %v323 = vpop.trf.xlu0
        %v324 = vpop.trf.xlu0
        %v325 = vpop.trf.xlu0
        %v326 = vpop.trf.xlu0
        %v327 = vpop.trf.xlu0
        %v328 = vpop.trf.xlu0
        %v329 = vpop.trf.xlu0
        %v330 = vpop.trf.xlu0
        %v331 = vpop.trf.xlu0
        %v332 = vpop.trf.xlu0
        %v333 = vpop.trf.xlu0
        %v334 = vpop.trf.xlu0
        %335 = vst [vmem:[%s162] sm:$0x1] %v319
        %s337 = ssub.s32 16, 1
        %v338 = vld [vmem:[#allocation2] sm:%s337]
        %s340 = ssub.s32 16, 1
        %341 = vst [vmem:[%s148] sm:%s340] %v338
        %s343 = ssub.s32 16, 1
        %v344 = vld [vmem:[#allocation5] sm:%s343]
        %s346 = ssub.s32 16, 1
        %347 = vst [vmem:[%s154] sm:%s346] %v344
        %s348 = sand.u32 %s14, 1
        %s349 = sand.u32 %s14, 1
        %s350 = smul.addr %s349, 8
        %s351 = scalar_lea.vmem [#allocation1], %s350
        %s352 = sand.u32 %s24, 1
        %s353 = scalar_lea.sflag [#allocation4], %s352
        %s354 = sand.u32 %s24, 1
        %s355 = smul.addr %s354, 4
        %s356 = scalar_lea.vmem [#allocation3], %s355
        %s357 = sand.u32 %s52, 1
        %s358 = sand.u32 %s52, 1
        %s359 = smul.addr %s358, 4
        %s360 = scalar_lea.vmem [#allocation6], %s359
        %s361 = smul.addr %s14, 8
        %s362 = scalar_lea.vmem %s1, %s361
        // Predicated region
        $region63: #{custom-call.13} parent=53 // pred_check
          _
        $region64: #{custom-call.13} parent=53 // pred_check_branch
          %364 = sbr.rel (0) target = $region66
        $region65: #{custom-call.13} parent=53 // pred_region
          // Predicated region
          $region67: #{custom-call.13} parent=65 // pred_check
            _
          $region68: #{custom-call.13} parent=65 // pred_check_branch
            %366 = sbr.rel (0) target = $region70
          $region69: #{custom-call.13} parent=65 // pred_region
            // Predicated region
            $region82: #{custom-call.13} parent=69 // pred_check
              _
            $region83: #{custom-call.13} parent=69 // pred_check_branch
              %382 = sbr.rel (0) target = $region85
            $region84: #{custom-call.13} parent=69 // pred_region
              loop: start=0, step=1, limit=1
              $region86: #{custom-call.13} parent=84 // loop_pre_header
                _
              $region87: #{custom-call.13} parent=84 // loop_header
                %s384 = sphi 0, %s388
                %p385 = scmp.ge.s32.totalorder %s384, 1
                %s389 = sphi %s351, %s351
                %s390 = sphi %s362, %s362
              $region88: #{custom-call.13} parent=84 // loop_header_branch
                %387 = sbr.rel (%p385) target = $region92
              $region89: #{custom-call.13} parent=84 // loop_body
                %v391 = vld [vmem:[%s389] sm:$0xff]
                %392 = vst [vmem:[%s390] sm:$0xff] %v391
              $region90: #{custom-call.13} parent=84 // loop_footer
                %s388 = sadd.s32 1, %s384
              $region91: #{custom-call.13} parent=84 // loop_footer_branch
                %383 = sbr.rel target = $region87
              $region92: #{custom-call.13} parent=84 // loop_exit
                _
            $region85: #{custom-call.13} parent=69 // pred_fallthru
              _
            // Predicated region
            $region93: #{custom-call.13} parent=69 // pred_check
              _
            $region94: #{custom-call.13} parent=69 // pred_check_branch
              %394 = sbr.rel target = $region96
            $region95: #{custom-call.13} parent=69 // pred_region
              _
            $region96: #{custom-call.13} parent=69 // pred_fallthru
              _
          $region70: #{custom-call.13} parent=65 // pred_fallthru
            _
          // Predicated region
          $region71: #{custom-call.13} parent=65 // pred_check
            _
          $region72: #{custom-call.13} parent=65 // pred_check_branch
            %368 = sbr.rel target = $region74
          $region73: #{custom-call.13} parent=65 // pred_region
            %s370 = ssub.s32 256, 1
            loop: start=0, step=1, limit=1
            $region75: #{custom-call.13} parent=73 // loop_pre_header
              _
            $region76: #{custom-call.13} parent=73 // loop_header
              %s372 = sphi 0, %s376
              %p373 = scmp.ge.s32.totalorder %s372, 1
              %s377 = sphi %s351, %s351
              %s378 = sphi %s362, %s362
            $region77: #{custom-call.13} parent=73 // loop_header_branch
              %375 = sbr.rel (%p373) target = $region81
            $region78: #{custom-call.13} parent=73 // loop_body
              %v379 = vld [vmem:[%s377] sm:%s370]
              %380 = vst [vmem:[%s378] sm:%s370] %v379
            $region79: #{custom-call.13} parent=73 // loop_footer
              %s376 = sadd.s32 1, %s372
            $region80: #{custom-call.13} parent=73 // loop_footer_branch
              %371 = sbr.rel target = $region76
            $region81: #{custom-call.13} parent=73 // loop_exit
              _
          $region74: #{custom-call.13} parent=65 // pred_fallthru
            _
        $region66: #{custom-call.13} parent=53 // pred_fallthru
          _
        %395 = vnop
        // Predicated region
        $region97: #{custom-call.13} parent=53 // pred_check
          %p396 = pneg %p34
        $region98: #{custom-call.13} parent=53 // pred_check_branch
          %398 = sbr.rel (%p396) target = $region100
        $region99: #{custom-call.13} parent=53 // pred_region
          %s399 = sshrl.u32 %s14, 3
          %401 = vsyncadd %s353, 0
          %s402 = smul.addr %s399, 4
          %s403 = scalar_lea.hbm %s2, %s402
          %s405 = sshll.u32 %s356, 4
          %s406 = int_to_ptr.vmem [resolvable:$true] %s405
          %s407 = sshll.u32 %s403, 4
          %s408 = int_to_ptr.hbm [resolvable:$true] %s407
          %410 = dma.vmem_to_hbm [thread:$0]  %s406, 64, %s408, %s353
        $region100: #{custom-call.13} parent=53 // pred_fallthru
          _
        // Predicated region
        $region101: #{custom-call.13} parent=53 // pred_check
          %p411 = pneg %p62
        $region102: #{custom-call.13} parent=53 // pred_check_branch
          %413 = sbr.rel (%p411) target = $region104
        $region103: #{custom-call.13} parent=53 // pred_region
          %s414 = sshrl.u32 %s14, 3
          %s415 = smul.addr %s414, 4
          %s416 = scalar_lea.vmem %s3, %s415
          // Predicated region
          $region105: #{custom-call.13} parent=103 // pred_check
            _
          $region106: #{custom-call.13} parent=103 // pred_check_branch
            %418 = sbr.rel (0) target = $region108
          $region107: #{custom-call.13} parent=103 // pred_region
            // Predicated region
            $region109: #{custom-call.13} parent=107 // pred_check
              _
            $region110: #{custom-call.13} parent=107 // pred_check_branch
              %420 = sbr.rel target = $region112
            $region111: #{custom-call.13} parent=107 // pred_region
              // Predicated region
              $region124: #{custom-call.13} parent=111 // pred_check
                _
              $region125: #{custom-call.13} parent=111 // pred_check_branch
                %436 = sbr.rel (0) target = $region127
              $region126: #{custom-call.13} parent=111 // pred_region
                %s438 = ssub.s32 16, 1
                loop: start=0, step=1, limit=1
                $region128: #{custom-call.13} parent=126 // loop_pre_header
                  _
                $region129: #{custom-call.13} parent=126 // loop_header
                  %s440 = sphi 0, %s444
                  %p441 = scmp.ge.s32.totalorder %s440, 1
                  %s445 = sphi %s360, %s360
                  %s446 = sphi %s416, %s416
                $region130: #{custom-call.13} parent=126 // loop_header_branch
                  %443 = sbr.rel (%p441) target = $region134
                $region131: #{custom-call.13} parent=126 // loop_body
                  %v447 = vld [vmem:[%s445] sm:%s438]
                  %448 = vst [vmem:[%s446] sm:%s438] %v447
                $region132: #{custom-call.13} parent=126 // loop_footer
                  %s444 = sadd.s32 1, %s440
                $region133: #{custom-call.13} parent=126 // loop_footer_branch
                  %439 = sbr.rel target = $region129
                $region134: #{custom-call.13} parent=126 // loop_exit
                  _
              $region127: #{custom-call.13} parent=111 // pred_fallthru
                _
            $region112: #{custom-call.13} parent=107 // pred_fallthru
              _
            // Predicated region
            $region113: #{custom-call.13} parent=107 // pred_check
              _
            $region114: #{custom-call.13} parent=107 // pred_check_branch
              %422 = sbr.rel (0) target = $region116
            $region115: #{custom-call.13} parent=107 // pred_region
              %s424 = ssub.s32 16, 1
              loop: start=0, step=1, limit=1
              $region117: #{custom-call.13} parent=115 // loop_pre_header
                _
              $region118: #{custom-call.13} parent=115 // loop_header
                %s426 = sphi 0, %s430
                %p427 = scmp.ge.s32.totalorder %s426, 1
                %s431 = sphi %s360, %s360
                %s432 = sphi %s416, %s416
              $region119: #{custom-call.13} parent=115 // loop_header_branch
                %429 = sbr.rel (%p427) target = $region123
              $region120: #{custom-call.13} parent=115 // loop_body
                %v433 = vld [vmem:[%s431] sm:%s424]
                %434 = vst [vmem:[%s432] sm:%s424] %v433
              $region121: #{custom-call.13} parent=115 // loop_footer
                %s430 = sadd.s32 1, %s426
              $region122: #{custom-call.13} parent=115 // loop_footer_branch
                %425 = sbr.rel target = $region118
              $region123: #{custom-call.13} parent=115 // loop_exit
                _
            $region116: #{custom-call.13} parent=107 // pred_fallthru
              _
          $region108: #{custom-call.13} parent=103 // pred_fallthru
            _
          %449 = vnop
        $region104: #{custom-call.13} parent=53 // pred_fallthru
          _
      $region54: #{custom-call.13} parent=5 // pred_fallthru
        _
      %p450 = scmp.le.s32.totalorder 2, %s9
      // Predicated region
      $region135: #{custom-call.13} parent=5 // pred_check
        %p451 = pneg %p450
      $region136: #{custom-call.13} parent=5 // pred_check_branch
        %453 = sbr.rel (%p451) target = $region138
      $region137: #{custom-call.13} parent=5 // pred_region
        %s454 = ssub.s32 %s9, 2
        %s455 = sand.u32 %s15, 1
        %s456 = sand.u32 %s15, 1
        %s457 = smul.addr %s456, 8
        %s458 = scalar_lea.vmem [#allocation1], %s457
        // Predicated region
        $region139: #{custom-call.13} parent=137 // pred_check
          %p459 = pneg %p40
        $region140: #{custom-call.13} parent=137 // pred_check_branch
          %461 = sbr.rel (%p459) target = $region142
        $region141: #{custom-call.13} parent=137 // pred_region
          %s462 = sand.u32 %s25, 1
          %s463 = scalar_lea.sflag [#allocation4], %s462
          %s464 = sand.u32 %s25, 1
          %s465 = smul.addr %s464, 4
          %s466 = scalar_lea.vmem [#allocation3], %s465
          %468 = dma.done %s463, 64
        $region142: #{custom-call.13} parent=137 // pred_fallthru
          _
        // Predicated region
        $region143: #{custom-call.13} parent=137 // pred_check
          %p469 = pneg %p68
        $region144: #{custom-call.13} parent=137 // pred_check_branch
          %471 = sbr.rel (%p469) target = $region146
        $region145: #{custom-call.13} parent=137 // pred_region
          %s472 = sand.u32 %s53, 1
          %s473 = sand.u32 %s53, 1
          %s474 = smul.addr %s473, 4
          %s475 = scalar_lea.vmem [#allocation6], %s474
        $region146: #{custom-call.13} parent=137 // pred_fallthru
          _
      $region138: #{custom-call.13} parent=5 // pred_fallthru
        _
    $region6: #{custom-call.13} parent=1 // loop_footer
      %s13 = sadd.s32 1, %s9
    $region7: #{custom-call.13} parent=1 // loop_footer_branch
      %8 = sbr.rel target = $region3
    $region8: #{custom-call.13} parent=1 // loop_exit
      _
    %476 = vsyncpa [#allocation4], 1
    %s477 = scalar_lea.sflag [#allocation4], 1
    %478 = vsyncpa %s477, 1

// kernel: gmm_est_forward.4
$region0: #{gmm_est_forward.4}
  #allocation0 [shape = 'u32[]', space=smem, size = 0x4, offset = 0x4, fixed_abs, tag = 'smem constant byte address 0x4 - core index']
  #allocation1 [shape = 'u32[72,128]{1,0:T(1,128)}', space=vmem, size = 0x9000, scoped, tag = 'internal scratch']
  %s0 = inlined_call_operand.vmem [shape: f32[8,384], index: 0, kind: input, shape index: {}]
  %s1 = inlined_call_operand.vmem [shape: f32[4,384], index: 1, kind: input, shape index: {}]
  %s2 = inlined_call_operand.vmem [shape: f32[8,4], index: 2, kind: input, shape index: {}]
  %s3 = inlined_call_operand.vmem [shape: f32[32,8], index: 3, kind: output, shape index: {}]
  %s4 = sld [smem:[#allocation0]]
  $region49: #{gmm_est_forward.4} parent=0
    _
  %s6 = ssub.s32 1, %s4
  %s7 = scalar_select 0, %s6, %s4
  loop: start=0, step=1, limit=5
  $region2: #{gmm_est_forward.4} parent=0 // loop_pre_header
    _
  $region3: #{gmm_est_forward.4} parent=0 // loop_header
    %s9 = sphi 0, %s13
    %p10 = scmp.ge.s32.totalorder %s9, 5
    %s19 = sphi 0, %s21
    %s22 = sphi 0, %s19
    %s23 = sphi 0, %s22
    %s39 = sphi 0, %s23
    %s45 = sphi 0, %s47
    %s48 = sphi 0, %s45
    %s49 = sphi 0, %s48
    %s65 = sphi 0, %s49
    %s69 = sphi 0, %s69
    %s71 = sphi 0, %s69
    %s72 = sphi 0, %s71
    %s86 = sphi 0, %s72
    %s90 = sphi 0, %s90
    %s92 = sphi 0, %s90
    %s93 = sphi 0, %s92
    %s107 = sphi 0, %s93
  $region4: #{gmm_est_forward.4} parent=0 // loop_header_branch
    %12 = sbr.rel (%p10) target = $region8
  $region5: #{gmm_est_forward.4} parent=0 // loop_body
    %s14 = ssub.s32 %s9, 1
    %s15 = ssub.s32 %s9, 2
    %s16 = sadd.s32 %s9, 1
    %s17 = ssub.s32 %s9, %s16
    %p18 = scmp.eq.s32.totalorder %s17, 0
    %s20 = sadd.s32 %s19, 1
    %s21 = scalar_select %p18, %s19, %s20
    %p24 = pneg %p18
    %p25 = scmp.eq.s32.totalorder %s9, 2
    %p26 = por %p24, %p25
    %p27 = scmp.ne.s32.totalorder %s19, %s22
    %p28 = scmp.eq.s32.totalorder %s9, 0
    %p29 = por %p27, %p28
    %p30 = scmp.ne.s32.totalorder %s19, %s22
    %p31 = scmp.eq.s32.totalorder %s14, 2
    %p32 = por %p30, %p31
    %p33 = scmp.ne.s32.totalorder %s22, %s23
    %p34 = scmp.eq.s32.totalorder %s14, 0
    %p35 = por %p33, %p34
    %p36 = scmp.ne.s32.totalorder %s22, %s23
    %p37 = scmp.eq.s32.totalorder %s15, 2
    %p38 = por %p36, %p37
    %p40 = scmp.ne.s32.totalorder %s23, %s39
    %p41 = scmp.eq.s32.totalorder %s15, 0
    %p42 = por %p40, %p41
    %s43 = ssub.s32 %s9, %s16
    %p44 = scmp.eq.s32.totalorder %s43, 0
    %s46 = sadd.s32 %s45, 1
    %s47 = scalar_select %p44, %s45, %s46
    %p50 = pneg %p44
    %p51 = scmp.eq.s32.totalorder %s9, 2
    %p52 = por %p50, %p51
    %p53 = scmp.ne.s32.totalorder %s45, %s48
    %p54 = scmp.eq.s32.totalorder %s9, 0
    %p55 = por %p53, %p54
    %p56 = scmp.ne.s32.totalorder %s45, %s48
    %p57 = scmp.eq.s32.totalorder %s14, 2
    %p58 = por %p56, %p57
    %p59 = scmp.ne.s32.totalorder %s48, %s49
    %p60 = scmp.eq.s32.totalorder %s14, 0
    %p61 = por %p59, %p60
    %p62 = scmp.ne.s32.totalorder %s48, %s49
    %p63 = scmp.eq.s32.totalorder %s15, 2
    %p64 = por %p62, %p63
    %p66 = scmp.ne.s32.totalorder %s49, %s65
    %p67 = scmp.eq.s32.totalorder %s15, 0
    %p68 = por %p66, %p67
    %s70 = sadd.s32 %s69, 1
    %p73 = scmp.eq.s32.totalorder %s9, 2
    %p74 = scmp.ne.s32.totalorder %s69, %s71
    %p75 = scmp.eq.s32.totalorder %s9, 0
    %p76 = por %p74, %p75
    %p77 = scmp.ne.s32.totalorder %s69, %s71
    %p78 = scmp.eq.s32.totalorder %s14, 2
    %p79 = por %p77, %p78
    %p80 = scmp.ne.s32.totalorder %s71, %s72
    %p81 = scmp.eq.s32.totalorder %s14, 0
    %p82 = por %p80, %p81
    %p83 = scmp.ne.s32.totalorder %s71, %s72
    %p84 = scmp.eq.s32.totalorder %s15, 2
    %p85 = por %p83, %p84
    %p87 = scmp.ne.s32.totalorder %s72, %s86
    %p88 = scmp.eq.s32.totalorder %s15, 0
    %p89 = por %p87, %p88
    %s91 = sadd.s32 %s90, 1
    %p94 = scmp.eq.s32.totalorder %s9, 2
    %p95 = scmp.ne.s32.totalorder %s90, %s92
    %p96 = scmp.eq.s32.totalorder %s9, 0
    %p97 = por %p95, %p96
    %p98 = scmp.ne.s32.totalorder %s90, %s92
    %p99 = scmp.eq.s32.totalorder %s14, 2
    %p100 = por %p98, %p99
    %p101 = scmp.ne.s32.totalorder %s92, %s93
    %p102 = scmp.eq.s32.totalorder %s14, 0
    %p103 = por %p101, %p102
    %p104 = scmp.ne.s32.totalorder %s92, %s93
    %p105 = scmp.eq.s32.totalorder %s15, 2
    %p106 = por %p104, %p105
    %p108 = scmp.ne.s32.totalorder %s93, %s107
    %p109 = scmp.eq.s32.totalorder %s15, 0
    %p110 = por %p108, %p109
    %p111 = scmp.le.s32.totalorder 1, %s9
    %p112 = scmp.lt.s32.totalorder %s9, 4
    %p113 = pnand %p111, %p112
    %p114 = pneg %p113
    // Predicated region
    $region9: #{gmm_est_forward.4} parent=5 // pred_check
      _
    $region10: #{gmm_est_forward.4} parent=5 // pred_check_branch
      %116 = sbr.rel (%p113) target = $region12
    $region11: #{gmm_est_forward.4} parent=5 // pred_region
      %s117 = ssub.s32 %s9, 1
      // Predicated region
      $region13: #{gmm_est_forward.4} parent=11 // pred_check
        %p118 = pneg %p82
      $region14: #{gmm_est_forward.4} parent=11 // pred_check_branch
        %120 = sbr.rel (%p118) target = $region16
      $region15: #{gmm_est_forward.4} parent=11 // pred_region
        _
      $region16: #{gmm_est_forward.4} parent=11 // pred_fallthru
        _
    $region12: #{gmm_est_forward.4} parent=5 // pred_fallthru
      _
    %p121 = scmp.lt.s32.totalorder %s9, 3
    // Predicated region
    $region17: #{gmm_est_forward.4} parent=5 // pred_check
      %p122 = pneg %p121
    $region18: #{gmm_est_forward.4} parent=5 // pred_check_branch
      %124 = sbr.rel (%p122) target = $region20
    $region19: #{gmm_est_forward.4} parent=5 // pred_region
      // Predicated region
      $region21: #{gmm_est_forward.4} parent=19 // pred_check
        %p125 = pneg %p29
      $region22: #{gmm_est_forward.4} parent=19 // pred_check_branch
        %127 = sbr.rel (%p125) target = $region24
      $region23: #{gmm_est_forward.4} parent=19 // pred_region
        %p128 = scmp.lt.s32.totalorder %s9, 2
        %s129 = scalar_select %p128, %s9, 2
        %s130 = smul.addr %s129, 8
        %s131 = scalar_lea.vmem %s0, %s130
      $region24: #{gmm_est_forward.4} parent=19 // pred_fallthru
        _
      // Predicated region
      $region25: #{gmm_est_forward.4} parent=19 // pred_check
        %p132 = pneg %p55
      $region26: #{gmm_est_forward.4} parent=19 // pred_check_branch
        %134 = sbr.rel (%p132) target = $region28
      $region27: #{gmm_est_forward.4} parent=19 // pred_region
        %p135 = scmp.lt.s32.totalorder %s9, 2
        %s136 = scalar_select %p135, %s9, 2
        %s137 = smul.addr %s136, 4
        %s138 = scalar_lea.vmem %s1, %s137
      $region28: #{gmm_est_forward.4} parent=19 // pred_fallthru
        _
    $region20: #{gmm_est_forward.4} parent=5 // pred_fallthru
      _
    %p139 = scmp.le.s32.totalorder 1, %s9
    %p140 = scmp.lt.s32.totalorder %s9, 4
    %p141 = pnand %p139, %p140
    %p142 = pneg %p141
    // Predicated region
    $region29: #{gmm_est_forward.4} parent=5 // pred_check
      _
    $region30: #{gmm_est_forward.4} parent=5 // pred_check_branch
      %144 = sbr.rel (%p141) target = $region32
    $region31: #{gmm_est_forward.4} parent=5 // pred_region
      %s145 = ssub.s32 %s9, 1
      %p146 = scmp.lt.s32.totalorder %s14, 2
      %s147 = scalar_select %p146, %s14, 2
      %s148 = smul.addr %s147, 8
      %s149 = scalar_lea.vmem %s0, %s148
      %p150 = pneg %p35
      %p151 = pneg %p32
      %p152 = scmp.lt.s32.totalorder %s14, 2
      %s153 = scalar_select %p152, %s14, 2
      %s154 = smul.addr %s153, 4
      %s155 = scalar_lea.vmem %s1, %s154
      %p156 = pneg %p61
      %p157 = pneg %p58
      %p158 = pneg %p82
      %p159 = pneg %p79
      %p160 = pneg %p103
      %p161 = pneg %p100
      %p162 = scmp.lt.s32.totalorder %s14, 2
      %s163 = scalar_select %p162, %s14, 2
      %s164 = smul.addr %s163, 8
      %s165 = scalar_lea.vmem %s0, %s164
      %p166 = scmp.lt.s32.totalorder %s14, 2
      %s167 = scalar_select %p166, %s14, 2
      %s168 = smul.addr %s167, 4
      %s169 = scalar_lea.vmem %s1, %s168
      %p170 = scmp.eq.s32.totalorder %s14, 0
      // Predicated region
      $region33: #{gmm_est_forward.4} parent=31 // pred_check
        %p171 = pneg %p170
      $region34: #{gmm_est_forward.4} parent=31 // pred_check_branch
        %173 = sbr.rel (%p171) target = $region36
      $region35: #{gmm_est_forward.4} parent=31 // pred_region
        %vm174 = vcmask 64512
        %175 = vst.msk [vmem:[%s3] sm:$0xff] %vm174, 0.0
        %176 = vst.msk [vmem:[%s3 + $0x8] sm:$0xff] %vm174, 0.0
        %177 = vst.msk [vmem:[%s3 + $0x10] sm:$0xff] %vm174, 0.0
        %178 = vst.msk [vmem:[%s3 + $0x18] sm:$0xff] %vm174, 0.0
      $region36: #{gmm_est_forward.4} parent=31 // pred_fallthru
        _
      %v179 = vld [vmem:[%s165] sm:$0xff]
      %v180 = vld [vmem:[%s169] sm:$0xf]
      %v181 = vld [vmem:[%s2] sm:$0xff]
      %183 = vset.pattern.permute.xlu0 0
      %184 = vperm.xlu0 %183, %v181
      %v185 = vpop.permute.xlu0 %184
      %v187 = vsub.f32 %v179, %v185
      %v188 = vperm.slane %v180, 0
      %v189 = vmul.f32 %v187, %v188
      %190 = vmatpush.xpose.msra.mxu0 0.0
      %191 = vmatpush.xpose.msra.mxu0 0.0
      %192 = vmatpush.xpose.msra.mxu0 0.0
      %193 = vmatpush.xpose.msra.mxu0 0.0
      %194 = vmatpush.xpose.msra.mxu0 0.0
      %195 = vmatpush.xpose.msra.mxu0 0.0
      %196 = vmatpush.xpose.msra.mxu0 0.0
      %197 = vmatpush.xpose.msra.mxu0 0.0
      %198 = vmatpush.xpose.msra.mxu0 0.0
      %199 = vmatpush.xpose.msra.mxu0 0.0
      %200 = vmatpush.xpose.msra.mxu0 0.0
      %201 = vmatpush.xpose.msra.mxu0 0.0
      %202 = vmatpush.xpose.msra.mxu0 0.0
      %203 = vmatpush.xpose.msra.mxu0 0.0
      %204 = vmatpush.xpose.msra.mxu0 0.0
      %205 = vmatpush.xpose.msra.mxu0 %v187
      %206 = vmatmul.f32.gmra.mxu0 %v189
      %v207 = vpop.f32.mrf.mxu0
      %v208 = vadd.f32 0.0, %v207
      %209 = vdwg.mxu0
      %v210 = vld [vmem:[%s3] sm:$0xff]
      %v211 = vadd.f32 %v210, %v208
      %vm212 = vcmask 64512
      %213 = vst.msk [vmem:[%s3] sm:$0xff] %vm212, %v211
      %v214 = vld [vmem:[%s2] sm:$0xff]
      %216 = vset.pattern.permute.xlu0 1
      %217 = vperm.xlu0 %216, %v214
      %v218 = vpop.permute.xlu0 %217
      %v220 = vsub.f32 %v179, %v218
      %v221 = vperm.slane %v180, 1
      %v222 = vmul.f32 %v220, %v221
      %223 = vmatpush.xpose.msra.mxu0 0.0
      %224 = vmatpush.xpose.msra.mxu0 0.0
      %225 = vmatpush.xpose.msra.mxu0 0.0
      %226 = vmatpush.xpose.msra.mxu0 0.0
      %227 = vmatpush.xpose.msra.mxu0 0.0
      %228 = vmatpush.xpose.msra.mxu0 0.0
      %229 = vmatpush.xpose.msra.mxu0 0.0
      %230 = vmatpush.xpose.msra.mxu0 0.0
      %231 = vmatpush.xpose.msra.mxu0 0.0
      %232 = vmatpush.xpose.msra.mxu0 0.0
      %233 = vmatpush.xpose.msra.mxu0 0.0
      %234 = vmatpush.xpose.msra.mxu0 0.0
      %235 = vmatpush.xpose.msra.mxu0 0.0
      %236 = vmatpush.xpose.msra.mxu0 0.0
      %237 = vmatpush.xpose.msra.mxu0 0.0
      %238 = vmatpush.xpose.msra.mxu0 %v220
      %239 = vmatmul.f32.gmra.mxu0 %v222
      %v240 = vpop.f32.mrf.mxu0
      %v241 = vadd.f32 0.0, %v240
      %242 = vdwg.mxu0
      %v243 = vld [vmem:[%s3 + $0x8] sm:$0xff]
      %v244 = vadd.f32 %v243, %v241
      %245 = vst.msk [vmem:[%s3 + $0x8] sm:$0xff] %vm212, %v244
      %v246 = vld [vmem:[%s2] sm:$0xff]
      %248 = vset.pattern.permute.xlu0 2
      %249 = vperm.xlu0 %248, %v246
      %v250 = vpop.permute.xlu0 %249
      %v252 = vsub.f32 %v179, %v250
      %v253 = vperm.slane %v180, 2
      %v254 = vmul.f32 %v252, %v253
      %255 = vmatpush.xpose.msra.mxu0 0.0
      %256 = vmatpush.xpose.msra.mxu0 0.0
      %257 = vmatpush.xpose.msra.mxu0 0.0
      %258 = vmatpush.xpose.msra.mxu0 0.0
      %259 = vmatpush.xpose.msra.mxu0 0.0
      %260 = vmatpush.xpose.msra.mxu0 0.0
      %261 = vmatpush.xpose.msra.mxu0 0.0
      %262 = vmatpush.xpose.msra.mxu0 0.0
      %263 = vmatpush.xpose.msra.mxu0 0.0
      %264 = vmatpush.xpose.msra.mxu0 0.0
      %265 = vmatpush.xpose.msra.mxu0 0.0
      %266 = vmatpush.xpose.msra.mxu0 0.0
      %267 = vmatpush.xpose.msra.mxu0 0.0
      %268 = vmatpush.xpose.msra.mxu0 0.0
      %269 = vmatpush.xpose.msra.mxu0 0.0
      %270 = vmatpush.xpose.msra.mxu0 %v252
      %271 = vmatmul.f32.gmra.mxu0 %v254
      %v272 = vpop.f32.mrf.mxu0
      %v273 = vadd.f32 0.0, %v272
      %274 = vdwg.mxu0
      %v275 = vld [vmem:[%s3 + $0x10] sm:$0xff]
      %v276 = vadd.f32 %v275, %v273
      %277 = vst.msk [vmem:[%s3 + $0x10] sm:$0xff] %vm212, %v276
      %v278 = vld [vmem:[%s2] sm:$0xff]
      %280 = vset.pattern.permute.xlu0 3
      %281 = vperm.xlu0 %280, %v278
      %v282 = vpop.permute.xlu0 %281
      %v284 = vsub.f32 %v179, %v282
      %v285 = vperm.slane %v180, 3
      %v286 = vmul.f32 %v284, %v285
      %287 = vmatpush.xpose.msra.mxu0 0.0
      %288 = vmatpush.xpose.msra.mxu0 0.0
      %289 = vmatpush.xpose.msra.mxu0 0.0
      %290 = vmatpush.xpose.msra.mxu0 0.0
      %291 = vmatpush.xpose.msra.mxu0 0.0
      %292 = vmatpush.xpose.msra.mxu0 0.0
      %293 = vmatpush.xpose.msra.mxu0 0.0
      %294 = vmatpush.xpose.msra.mxu0 0.0
      %295 = vmatpush.xpose.msra.mxu0 0.0
      %296 = vmatpush.xpose.msra.mxu0 0.0
      %297 = vmatpush.xpose.msra.mxu0 0.0
      %298 = vmatpush.xpose.msra.mxu0 0.0
      %299 = vmatpush.xpose.msra.mxu0 0.0
      %300 = vmatpush.xpose.msra.mxu0 0.0
      %301 = vmatpush.xpose.msra.mxu0 0.0
      %302 = vmatpush.xpose.msra.mxu0 %v284
      %303 = vmatmul.f32.gmra.mxu0 %v286
      %v304 = vpop.f32.mrf.mxu0
      %v305 = vadd.f32 0.0, %v304
      %306 = vdwg.mxu0
      %v307 = vld [vmem:[%s3 + $0x18] sm:$0xff]
      %v308 = vadd.f32 %v307, %v305
      %309 = vst.msk [vmem:[%s3 + $0x18] sm:$0xff] %vm212, %v308
      // Predicated region
      $region37: #{gmm_est_forward.4} parent=31 // pred_check
        %p310 = pneg %p100
      $region38: #{gmm_est_forward.4} parent=31 // pred_check_branch
        %312 = sbr.rel (%p310) target = $region40
      $region39: #{gmm_est_forward.4} parent=31 // pred_region
        _
      $region40: #{gmm_est_forward.4} parent=31 // pred_fallthru
        _
      // Predicated region
      $region41: #{gmm_est_forward.4} parent=31 // pred_check
        %p313 = pneg %p100
      $region42: #{gmm_est_forward.4} parent=31 // pred_check_branch
        %315 = sbr.rel (%p313) target = $region44
      $region43: #{gmm_est_forward.4} parent=31 // pred_region
        _
      $region44: #{gmm_est_forward.4} parent=31 // pred_fallthru
        _
    $region32: #{gmm_est_forward.4} parent=5 // pred_fallthru
      _
    %p316 = scmp.le.s32.totalorder 2, %s9
    // Predicated region
    $region45: #{gmm_est_forward.4} parent=5 // pred_check
      %p317 = pneg %p316
    $region46: #{gmm_est_forward.4} parent=5 // pred_check_branch
      %319 = sbr.rel (%p317) target = $region48
    $region47: #{gmm_est_forward.4} parent=5 // pred_region
      %s320 = ssub.s32 %s9, 2
    $region48: #{gmm_est_forward.4} parent=5 // pred_fallthru
      _
  $region6: #{gmm_est_forward.4} parent=0 // loop_footer
    %s13 = sadd.s32 1, %s9
  $region7: #{gmm_est_forward.4} parent=0 // loop_footer_branch
    %8 = sbr.rel target = $region3
  $region8: #{gmm_est_forward.4} parent=0 // loop_exit
    _

// kernel: custom-call.15
$region0: #{custom-call.15}
  %s0 = inlined_call_operand.vmem [shape: f32[4,1,8,8], index: 0, kind: input, shape index: {}]
  %s1 = inlined_call_operand.vmem [shape: f32[4,1,8,8], index: 1, kind: output, shape index: {}]
  $region1: #{custom-call.15} parent=0
    #allocation0 [shape = 'u8[8192]{0}', space=vmem, size = 0x2000, scoped, tag = 'operand span for operand 0']
    #allocation1 [shape = 'u8[8192]{0}', space=vmem, size = 0x2000, scoped, tag = 'operand span for operand 1']
    loop: start=0, step=1, limit=6
    $region2: #{custom-call.15} parent=1 // loop_pre_header
      _
    $region3: #{custom-call.15} parent=1 // loop_header
      %s3 = sphi 0, %s7
      %p4 = scmp.ge.s32.totalorder %s3, 6
      %s10 = sphi 0, %s36
      %s11 = sphi 0, %s32
      %s12 = sphi 0, %s28
      %s13 = sphi 0, %s24
      %s14 = sphi 0, %s10
      %s15 = sphi 0, %s11
      %s16 = sphi 0, %s12
      %s17 = sphi 0, %s13
      %s18 = sphi 0, %s14
      %s19 = sphi 0, %s15
      %s20 = sphi 0, %s16
      %s21 = sphi 0, %s17
    $region4: #{custom-call.15} parent=1 // loop_header_branch
      %6 = sbr.rel (%p4) target = $region8
    $region5: #{custom-call.15} parent=1 // loop_body
      %s8 = ssub.s32 %s3, 1
      %s9 = ssub.s32 %s3, 2
      %s22 = sadd.s32 1, %s13
      %p23 = scmp.ge.s32.totalorder %s22, 1
      %s24 = scalar_select %p23, 0, %s22
      %s25 = sadd.s32 1, %s12
      %s26 = scalar_select %p23, %s25, %s12
      %p27 = scmp.ge.s32.totalorder %s26, 1
      %s28 = scalar_select %p27, 0, %s26
      %s29 = sadd.s32 1, %s11
      %s30 = scalar_select %p27, %s29, %s11
      %p31 = scmp.ge.s32.totalorder %s30, 1
      %s32 = scalar_select %p31, 0, %s30
      %s33 = sadd.s32 1, %s10
      %s34 = scalar_select %p31, %s33, %s10
      %p35 = scmp.ge.s32.totalorder %s34, 4
      %s36 = scalar_select %p35, 0, %s34
      %p37 = scmp.le.s32.totalorder 1, %s3
      %p38 = scmp.lt.s32.totalorder %s3, 5
      %p39 = pnand %p37, %p38
      %p40 = pneg %p39
      // Predicated region
      $region9: #{custom-call.15} parent=5 // pred_check
        _
      $region10: #{custom-call.15} parent=5 // pred_check_branch
        %42 = sbr.rel (%p39) target = $region12
      $region11: #{custom-call.15} parent=5 // pred_region
        %s43 = ssub.s32 %s3, 1
      $region12: #{custom-call.15} parent=5 // pred_fallthru
        _
      %p44 = scmp.lt.s32.totalorder %s3, 4
      // Predicated region
      $region13: #{custom-call.15} parent=5 // pred_check
        %p45 = pneg %p44
      $region14: #{custom-call.15} parent=5 // pred_check_branch
        %47 = sbr.rel (%p45) target = $region16
      $region15: #{custom-call.15} parent=5 // pred_region
        %s48 = sand.u32 %s3, 1
        %s49 = sand.u32 %s3, 1
        %s50 = smul.addr %s49, 8
        %s51 = scalar_lea.vmem [#allocation0], %s50
        %s52 = sadd.s32 %s13, %s12
        %s53 = sadd.s32 %s52, %s11
        %s54 = sadd.s32 %s53, %s10
        %s55 = smul.addr %s54, 8
        %s56 = scalar_lea.vmem %s0, %s55
        // Predicated region
        $region17: #{custom-call.15} parent=15 // pred_check
          _
        $region18: #{custom-call.15} parent=15 // pred_check_branch
          %58 = sbr.rel (0) target = $region20
        $region19: #{custom-call.15} parent=15 // pred_region
          // Predicated region
          $region21: #{custom-call.15} parent=19 // pred_check
            _
          $region22: #{custom-call.15} parent=19 // pred_check_branch
            %60 = sbr.rel (0) target = $region24
          $region23: #{custom-call.15} parent=19 // pred_region
            // Predicated region
            $region36: #{custom-call.15} parent=23 // pred_check
              _
            $region37: #{custom-call.15} parent=23 // pred_check_branch
              %76 = sbr.rel (0) target = $region39
            $region38: #{custom-call.15} parent=23 // pred_region
              loop: start=0, step=1, limit=1
              $region40: #{custom-call.15} parent=38 // loop_pre_header
                _
              $region41: #{custom-call.15} parent=38 // loop_header
                %s78 = sphi 0, %s82
                %p79 = scmp.ge.s32.totalorder %s78, 1
                %s83 = sphi %s56, %s56
                %s84 = sphi %s51, %s51
              $region42: #{custom-call.15} parent=38 // loop_header_branch
                %81 = sbr.rel (%p79) target = $region46
              $region43: #{custom-call.15} parent=38 // loop_body
                %v85 = vld [vmem:[%s83] sm:$0xff]
                %86 = vst [vmem:[%s84] sm:$0xff] %v85
              $region44: #{custom-call.15} parent=38 // loop_footer
                %s82 = sadd.s32 1, %s78
              $region45: #{custom-call.15} parent=38 // loop_footer_branch
                %77 = sbr.rel target = $region41
              $region46: #{custom-call.15} parent=38 // loop_exit
                _
            $region39: #{custom-call.15} parent=23 // pred_fallthru
              _
            // Predicated region
            $region47: #{custom-call.15} parent=23 // pred_check
              _
            $region48: #{custom-call.15} parent=23 // pred_check_branch
              %88 = sbr.rel target = $region50
            $region49: #{custom-call.15} parent=23 // pred_region
              _
            $region50: #{custom-call.15} parent=23 // pred_fallthru
              _
          $region24: #{custom-call.15} parent=19 // pred_fallthru
            _
          // Predicated region
          $region25: #{custom-call.15} parent=19 // pred_check
            _
          $region26: #{custom-call.15} parent=19 // pred_check_branch
            %62 = sbr.rel target = $region28
          $region27: #{custom-call.15} parent=19 // pred_region
            %s64 = ssub.s32 256, 1
            loop: start=0, step=1, limit=1
            $region29: #{custom-call.15} parent=27 // loop_pre_header
              _
            $region30: #{custom-call.15} parent=27 // loop_header
              %s66 = sphi 0, %s70
              %p67 = scmp.ge.s32.totalorder %s66, 1
              %s71 = sphi %s56, %s56
              %s72 = sphi %s51, %s51
            $region31: #{custom-call.15} parent=27 // loop_header_branch
              %69 = sbr.rel (%p67) target = $region35
            $region32: #{custom-call.15} parent=27 // loop_body
              %v73 = vld [vmem:[%s71] sm:%s64]
              %74 = vst [vmem:[%s72] sm:%s64] %v73
            $region33: #{custom-call.15} parent=27 // loop_footer
              %s70 = sadd.s32 1, %s66
            $region34: #{custom-call.15} parent=27 // loop_footer_branch
              %65 = sbr.rel target = $region30
            $region35: #{custom-call.15} parent=27 // loop_exit
              _
          $region28: #{custom-call.15} parent=19 // pred_fallthru
            _
        $region20: #{custom-call.15} parent=15 // pred_fallthru
          _
        %89 = vnop
      $region16: #{custom-call.15} parent=5 // pred_fallthru
        _
      %p90 = scmp.le.s32.totalorder 1, %s3
      %p91 = scmp.lt.s32.totalorder %s3, 5
      %p92 = pnand %p90, %p91
      %p93 = pneg %p92
      // Predicated region
      $region51: #{custom-call.15} parent=5 // pred_check
        _
      $region52: #{custom-call.15} parent=5 // pred_check_branch
        %95 = sbr.rel (%p92) target = $region54
      $region53: #{custom-call.15} parent=5 // pred_region
        #allocation2 [shape = 'f32[8,8]{1,0}', space=vmem, size = 0x1000, scoped, tag = 'rescaled input a']
        %s96 = ssub.s32 %s3, 1
        %s97 = sand.u32 %s8, 1
        %s98 = sand.u32 %s8, 1
        %s99 = smul.addr %s98, 8
        %s100 = scalar_lea.vmem [#allocation0], %s99
        %s101 = sand.u32 %s8, 1
        %s102 = sand.u32 %s8, 1
        %s103 = smul.addr %s102, 8
        %s104 = scalar_lea.vmem [#allocation0], %s103
        %s105 = sand.u32 %s8, 1
        %s106 = sand.u32 %s8, 1
        %s107 = smul.addr %s106, 8
        %s108 = scalar_lea.vmem [#allocation1], %s107
        %v109 = vlaneseq
        %v110 = vand.u32 %v109, 127
        %vm111 = vcmp.lt.s32.totalorder %v110, 8
        %v112 = vlaneseq
        %v113 = vshrl.u32 %v112, 7
        %vm115 = vcmp.eq.s32.totalorder %v113, %v110
        %v116 = vld [vmem:[%s100] sm:$0xff]
        %v117 = vsel %vm115, %v116, 0.0
        %118 = vadd.xlane.f32.xlu0 %v117
        %v119 = vpop.xlane.xlu0 %118
        %vm120 = vcmp.ge.s32.totalorder %v113, %v110
        %vm121 = vmand %vm120, %vm111
        %v122 = vsel %vm121, %v116, 0.0
        %v123 = vrcp.pop %v119
        %v124 = vmul.f32 %v119, %v123
        %v125 = vsub.f32 1.0, %v124
        %v126 = vmul.f32 %v123, %v125
        %v127 = vadd.f32 %v123, %v126
        %vm128 = vweird.f32 %v119
        %vm129 = vweird.f32 %v123
        %vm130 = vmor %vm128, %vm129
        %v131 = vsel %vm130, %v123, %v127
        %v132 = vand.u32 2147483647, %v119
        %vm133 = vcmp.eq.f32.partialorder %v132, 8.507059e+37
        %v134 = vand.u32 %v119, 2147483648
        %v135 = vor.u32 1.1754944e-38, %v134
        %v136 = vsel %vm133, %v135, %v131
        %v137 = vmul.f32 %v122, %v136
        %138 = vst [vmem:[#allocation2] sm:$0xff] %v137
        %v139 = vlaneseq
        %v140 = vand.u32 %v139, 127
        %v141 = vlaneseq
        %v142 = vshrl.u32 %v141, 7
        %vm144 = vcmp.eq.s32.totalorder %v140, %v142
        %v145 = vlaneseq
        %v146 = vand.u32 %v145, 127
        %vm147 = vcmp.eq.s32.totalorder %v146, 0
        %v148 = vsel %vm147, 1.0, -1.0
        %v149 = vsel %vm144, %v148, 0.0
        %s150 = scalar_lea.vmem [#allocation2], 1
        %v151 = vld [vmem:[%s150] ss:$0 sm:$0xff]
        %v152 = vxor.u32 %v151, 2147483648
        %v153 = vlaneseq
        %v154 = vand.u32 %v153, 127
        %vm155 = vcmp.eq.s32.totalorder %v154, 1
        %v156 = vmul.f32 %v152, %v149
        %157 = vadd.xlane.f32.xlu0 %v156
        %v158 = vpop.xlane.xlu0 %157
        %v159 = vsel %vm155, %v158, %v149
        %s160 = scalar_lea.vmem [#allocation2], 2
        %v161 = vld [vmem:[%s160] ss:$0 sm:$0xff]
        %v162 = vxor.u32 %v161, 2147483648
        %v163 = vlaneseq
        %v164 = vand.u32 %v163, 127
        %vm165 = vcmp.eq.s32.totalorder %v164, 2
        %v166 = vmul.f32 %v162, %v159
        %167 = vadd.xlane.f32.xlu0 %v166
        %v168 = vpop.xlane.xlu0 %167
        %v169 = vsel %vm165, %v168, %v159
        %s170 = scalar_lea.vmem [#allocation2], 3
        %v171 = vld [vmem:[%s170] ss:$0 sm:$0xff]
        %v172 = vxor.u32 %v171, 2147483648
        %v173 = vlaneseq
        %v174 = vand.u32 %v173, 127
        %vm175 = vcmp.eq.s32.totalorder %v174, 3
        %v176 = vmul.f32 %v172, %v169
        %177 = vadd.xlane.f32.xlu0 %v176
        %v178 = vpop.xlane.xlu0 %177
        %v179 = vsel %vm175, %v178, %v169
        %s180 = scalar_lea.vmem [#allocation2], 4
        %v181 = vld [vmem:[%s180] ss:$0 sm:$0xff]
        %v182 = vxor.u32 %v181, 2147483648
        %v183 = vlaneseq
        %v184 = vand.u32 %v183, 127
        %vm185 = vcmp.eq.s32.totalorder %v184, 4
        %v186 = vmul.f32 %v182, %v179
        %187 = vadd.xlane.f32.xlu0 %v186
        %v188 = vpop.xlane.xlu0 %187
        %v189 = vsel %vm185, %v188, %v179
        %s190 = scalar_lea.vmem [#allocation2], 5
        %v191 = vld [vmem:[%s190] ss:$0 sm:$0xff]
        %v192 = vxor.u32 %v191, 2147483648
        %v193 = vlaneseq
        %v194 = vand.u32 %v193, 127
        %vm195 = vcmp.eq.s32.totalorder %v194, 5
        %v196 = vmul.f32 %v192, %v189
        %197 = vadd.xlane.f32.xlu0 %v196
        %v198 = vpop.xlane.xlu0 %197
        %v199 = vsel %vm195, %v198, %v189
        %s200 = scalar_lea.vmem [#allocation2], 6
        %v201 = vld [vmem:[%s200] ss:$0 sm:$0xff]
        %v202 = vxor.u32 %v201, 2147483648
        %v203 = vlaneseq
        %v204 = vand.u32 %v203, 127
        %vm205 = vcmp.eq.s32.totalorder %v204, 6
        %v206 = vmul.f32 %v202, %v199
        %207 = vadd.xlane.f32.xlu0 %v206
        %v208 = vpop.xlane.xlu0 %207
        %v209 = vsel %vm205, %v208, %v199
        %s210 = scalar_lea.vmem [#allocation2], 7
        %v211 = vld [vmem:[%s210] ss:$0 sm:$0xff]
        %v212 = vxor.u32 %v211, 2147483648
        %v213 = vlaneseq
        %v214 = vand.u32 %v213, 127
        %vm215 = vcmp.eq.s32.totalorder %v214, 7
        %v216 = vmul.f32 %v212, %v209
        %217 = vadd.xlane.f32.xlu0 %v216
        %v218 = vpop.xlane.xlu0 %217
        %v219 = vsel %vm215, %v218, %v209
        %v220 = vrcp.pop %v119
        %v221 = vmul.f32 %v119, %v220
        %v222 = vsub.f32 1.0, %v221
        %v223 = vmul.f32 %v220, %v222
        %v224 = vadd.f32 %v220, %v223
        %vm225 = vweird.f32 %v119
        %vm226 = vweird.f32 %v220
        %vm227 = vmor %vm225, %vm226
        %v228 = vsel %vm227, %v220, %v224
        %v229 = vand.u32 2147483647, %v119
        %vm230 = vcmp.eq.f32.partialorder %v229, 8.507059e+37
        %v231 = vand.u32 %v119, 2147483648
        %v232 = vor.u32 1.1754944e-38, %v231
        %v233 = vsel %vm230, %v232, %v228
        %v234 = vmul.f32 %v219, %v233
        %vm235 = vweird.f32 %v119
        %v236 = vsel %vm235, %v219, %v234
        %237 = vst [vmem:[%s108] sm:$0xff] %v236
        %s238 = sand.u32 %s8, 1
        %s239 = sand.u32 %s8, 1
        %s240 = smul.addr %s239, 8
        %s241 = scalar_lea.vmem [#allocation1], %s240
        %s242 = sadd.s32 %s17, %s16
        %s243 = sadd.s32 %s242, %s15
        %s244 = sadd.s32 %s243, %s14
        %s245 = smul.addr %s244, 8
        %s246 = scalar_lea.vmem %s1, %s245
        // Predicated region
        $region55: #{custom-call.15} parent=53 // pred_check
          _
        $region56: #{custom-call.15} parent=53 // pred_check_branch
          %248 = sbr.rel (0) target = $region58
        $region57: #{custom-call.15} parent=53 // pred_region
          // Predicated region
          $region59: #{custom-call.15} parent=57 // pred_check
            _
          $region60: #{custom-call.15} parent=57 // pred_check_branch
            %250 = sbr.rel (0) target = $region62
          $region61: #{custom-call.15} parent=57 // pred_region
            // Predicated region
            $region74: #{custom-call.15} parent=61 // pred_check
              _
            $region75: #{custom-call.15} parent=61 // pred_check_branch
              %266 = sbr.rel (0) target = $region77
            $region76: #{custom-call.15} parent=61 // pred_region
              loop: start=0, step=1, limit=1
              $region78: #{custom-call.15} parent=76 // loop_pre_header
                _
              $region79: #{custom-call.15} parent=76 // loop_header
                %s268 = sphi 0, %s272
                %p269 = scmp.ge.s32.totalorder %s268, 1
                %s273 = sphi %s241, %s241
                %s274 = sphi %s246, %s246
              $region80: #{custom-call.15} parent=76 // loop_header_branch
                %271 = sbr.rel (%p269) target = $region84
              $region81: #{custom-call.15} parent=76 // loop_body
                %v275 = vld [vmem:[%s273] sm:$0xff]
                %276 = vst [vmem:[%s274] sm:$0xff] %v275
              $region82: #{custom-call.15} parent=76 // loop_footer
                %s272 = sadd.s32 1, %s268
              $region83: #{custom-call.15} parent=76 // loop_footer_branch
                %267 = sbr.rel target = $region79
              $region84: #{custom-call.15} parent=76 // loop_exit
                _
            $region77: #{custom-call.15} parent=61 // pred_fallthru
              _
            // Predicated region
            $region85: #{custom-call.15} parent=61 // pred_check
              _
            $region86: #{custom-call.15} parent=61 // pred_check_branch
              %278 = sbr.rel target = $region88
            $region87: #{custom-call.15} parent=61 // pred_region
              _
            $region88: #{custom-call.15} parent=61 // pred_fallthru
              _
          $region62: #{custom-call.15} parent=57 // pred_fallthru
            _
          // Predicated region
          $region63: #{custom-call.15} parent=57 // pred_check
            _
          $region64: #{custom-call.15} parent=57 // pred_check_branch
            %252 = sbr.rel target = $region66
          $region65: #{custom-call.15} parent=57 // pred_region
            %s254 = ssub.s32 256, 1
            loop: start=0, step=1, limit=1
            $region67: #{custom-call.15} parent=65 // loop_pre_header
              _
            $region68: #{custom-call.15} parent=65 // loop_header
              %s256 = sphi 0, %s260
              %p257 = scmp.ge.s32.totalorder %s256, 1
              %s261 = sphi %s241, %s241
              %s262 = sphi %s246, %s246
            $region69: #{custom-call.15} parent=65 // loop_header_branch
              %259 = sbr.rel (%p257) target = $region73
            $region70: #{custom-call.15} parent=65 // loop_body
              %v263 = vld [vmem:[%s261] sm:%s254]
              %264 = vst [vmem:[%s262] sm:%s254] %v263
            $region71: #{custom-call.15} parent=65 // loop_footer
              %s260 = sadd.s32 1, %s256
            $region72: #{custom-call.15} parent=65 // loop_footer_branch
              %255 = sbr.rel target = $region68
            $region73: #{custom-call.15} parent=65 // loop_exit
              _
          $region66: #{custom-call.15} parent=57 // pred_fallthru
            _
        $region58: #{custom-call.15} parent=53 // pred_fallthru
          _
        %279 = vnop
      $region54: #{custom-call.15} parent=5 // pred_fallthru
        _
      %p280 = scmp.le.s32.totalorder 2, %s3
      // Predicated region
      $region89: #{custom-call.15} parent=5 // pred_check
        %p281 = pneg %p280
      $region90: #{custom-call.15} parent=5 // pred_check_branch
        %283 = sbr.rel (%p281) target = $region92
      $region91: #{custom-call.15} parent=5 // pred_region
        %s284 = ssub.s32 %s3, 2
        %s285 = sand.u32 %s9, 1
        %s286 = sand.u32 %s9, 1
        %s287 = smul.addr %s286, 8
        %s288 = scalar_lea.vmem [#allocation1], %s287
      $region92: #{custom-call.15} parent=5 // pred_fallthru
        _
    $region6: #{custom-call.15} parent=1 // loop_footer
      %s7 = sadd.s32 1, %s3
    $region7: #{custom-call.15} parent=1 // loop_footer_branch
      %2 = sbr.rel target = $region3
    $region8: #{custom-call.15} parent=1 // loop_exit
      _

// kernel: custom-call.14
$region0: #{custom-call.14}
  %s0 = inlined_call_operand.vmem [shape: f32[4,1,8,8], index: 0, kind: input, shape index: {}]
  %s1 = inlined_call_operand.vmem [shape: f32[4,1,8,8], index: 1, kind: output, shape index: {}]
  $region1: #{custom-call.14} parent=0
    #allocation0 [shape = 'u8[8192]{0}', space=vmem, size = 0x2000, scoped, tag = 'operand span for operand 0']
    #allocation1 [shape = 'u8[8192]{0}', space=vmem, size = 0x2000, scoped, tag = 'operand span for operand 1']
    loop: start=0, step=1, limit=6
    $region2: #{custom-call.14} parent=1 // loop_pre_header
      _
    $region3: #{custom-call.14} parent=1 // loop_header
      %s3 = sphi 0, %s7
      %p4 = scmp.ge.s32.totalorder %s3, 6
      %s10 = sphi 0, %s36
      %s11 = sphi 0, %s32
      %s12 = sphi 0, %s28
      %s13 = sphi 0, %s24
      %s14 = sphi 0, %s10
      %s15 = sphi 0, %s11
      %s16 = sphi 0, %s12
      %s17 = sphi 0, %s13
      %s18 = sphi 0, %s14
      %s19 = sphi 0, %s15
      %s20 = sphi 0, %s16
      %s21 = sphi 0, %s17
    $region4: #{custom-call.14} parent=1 // loop_header_branch
      %6 = sbr.rel (%p4) target = $region8
    $region5: #{custom-call.14} parent=1 // loop_body
      %s8 = ssub.s32 %s3, 1
      %s9 = ssub.s32 %s3, 2
      %s22 = sadd.s32 1, %s13
      %p23 = scmp.ge.s32.totalorder %s22, 1
      %s24 = scalar_select %p23, 0, %s22
      %s25 = sadd.s32 1, %s12
      %s26 = scalar_select %p23, %s25, %s12
      %p27 = scmp.ge.s32.totalorder %s26, 1
      %s28 = scalar_select %p27, 0, %s26
      %s29 = sadd.s32 1, %s11
      %s30 = scalar_select %p27, %s29, %s11
      %p31 = scmp.ge.s32.totalorder %s30, 1
      %s32 = scalar_select %p31, 0, %s30
      %s33 = sadd.s32 1, %s10
      %s34 = scalar_select %p31, %s33, %s10
      %p35 = scmp.ge.s32.totalorder %s34, 4
      %s36 = scalar_select %p35, 0, %s34
      %p37 = scmp.le.s32.totalorder 1, %s3
      %p38 = scmp.lt.s32.totalorder %s3, 5
      %p39 = pnand %p37, %p38
      %p40 = pneg %p39
      // Predicated region
      $region9: #{custom-call.14} parent=5 // pred_check
        _
      $region10: #{custom-call.14} parent=5 // pred_check_branch
        %42 = sbr.rel (%p39) target = $region12
      $region11: #{custom-call.14} parent=5 // pred_region
        %s43 = ssub.s32 %s3, 1
      $region12: #{custom-call.14} parent=5 // pred_fallthru
        _
      %p44 = scmp.lt.s32.totalorder %s3, 4
      // Predicated region
      $region13: #{custom-call.14} parent=5 // pred_check
        %p45 = pneg %p44
      $region14: #{custom-call.14} parent=5 // pred_check_branch
        %47 = sbr.rel (%p45) target = $region16
      $region15: #{custom-call.14} parent=5 // pred_region
        %s48 = sand.u32 %s3, 1
        %s49 = sand.u32 %s3, 1
        %s50 = smul.addr %s49, 8
        %s51 = scalar_lea.vmem [#allocation0], %s50
        %s52 = sadd.s32 %s13, %s12
        %s53 = sadd.s32 %s52, %s11
        %s54 = sadd.s32 %s53, %s10
        %s55 = smul.addr %s54, 8
        %s56 = scalar_lea.vmem %s0, %s55
        // Predicated region
        $region17: #{custom-call.14} parent=15 // pred_check
          _
        $region18: #{custom-call.14} parent=15 // pred_check_branch
          %58 = sbr.rel (0) target = $region20
        $region19: #{custom-call.14} parent=15 // pred_region
          // Predicated region
          $region21: #{custom-call.14} parent=19 // pred_check
            _
          $region22: #{custom-call.14} parent=19 // pred_check_branch
            %60 = sbr.rel (0) target = $region24
          $region23: #{custom-call.14} parent=19 // pred_region
            // Predicated region
            $region36: #{custom-call.14} parent=23 // pred_check
              _
            $region37: #{custom-call.14} parent=23 // pred_check_branch
              %76 = sbr.rel (0) target = $region39
            $region38: #{custom-call.14} parent=23 // pred_region
              loop: start=0, step=1, limit=1
              $region40: #{custom-call.14} parent=38 // loop_pre_header
                _
              $region41: #{custom-call.14} parent=38 // loop_header
                %s78 = sphi 0, %s82
                %p79 = scmp.ge.s32.totalorder %s78, 1
                %s83 = sphi %s56, %s56
                %s84 = sphi %s51, %s51
              $region42: #{custom-call.14} parent=38 // loop_header_branch
                %81 = sbr.rel (%p79) target = $region46
              $region43: #{custom-call.14} parent=38 // loop_body
                %v85 = vld [vmem:[%s83] sm:$0xff]
                %86 = vst [vmem:[%s84] sm:$0xff] %v85
              $region44: #{custom-call.14} parent=38 // loop_footer
                %s82 = sadd.s32 1, %s78
              $region45: #{custom-call.14} parent=38 // loop_footer_branch
                %77 = sbr.rel target = $region41
              $region46: #{custom-call.14} parent=38 // loop_exit
                _
            $region39: #{custom-call.14} parent=23 // pred_fallthru
              _
            // Predicated region
            $region47: #{custom-call.14} parent=23 // pred_check
              _
            $region48: #{custom-call.14} parent=23 // pred_check_branch
              %88 = sbr.rel target = $region50
            $region49: #{custom-call.14} parent=23 // pred_region
              _
            $region50: #{custom-call.14} parent=23 // pred_fallthru
              _
          $region24: #{custom-call.14} parent=19 // pred_fallthru
            _
          // Predicated region
          $region25: #{custom-call.14} parent=19 // pred_check
            _
          $region26: #{custom-call.14} parent=19 // pred_check_branch
            %62 = sbr.rel target = $region28
          $region27: #{custom-call.14} parent=19 // pred_region
            %s64 = ssub.s32 256, 1
            loop: start=0, step=1, limit=1
            $region29: #{custom-call.14} parent=27 // loop_pre_header
              _
            $region30: #{custom-call.14} parent=27 // loop_header
              %s66 = sphi 0, %s70
              %p67 = scmp.ge.s32.totalorder %s66, 1
              %s71 = sphi %s56, %s56
              %s72 = sphi %s51, %s51
            $region31: #{custom-call.14} parent=27 // loop_header_branch
              %69 = sbr.rel (%p67) target = $region35
            $region32: #{custom-call.14} parent=27 // loop_body
              %v73 = vld [vmem:[%s71] sm:%s64]
              %74 = vst [vmem:[%s72] sm:%s64] %v73
            $region33: #{custom-call.14} parent=27 // loop_footer
              %s70 = sadd.s32 1, %s66
            $region34: #{custom-call.14} parent=27 // loop_footer_branch
              %65 = sbr.rel target = $region30
            $region35: #{custom-call.14} parent=27 // loop_exit
              _
          $region28: #{custom-call.14} parent=19 // pred_fallthru
            _
        $region20: #{custom-call.14} parent=15 // pred_fallthru
          _
        %89 = vnop
      $region16: #{custom-call.14} parent=5 // pred_fallthru
        _
      %p90 = scmp.le.s32.totalorder 1, %s3
      %p91 = scmp.lt.s32.totalorder %s3, 5
      %p92 = pnand %p90, %p91
      %p93 = pneg %p92
      // Predicated region
      $region51: #{custom-call.14} parent=5 // pred_check
        _
      $region52: #{custom-call.14} parent=5 // pred_check_branch
        %95 = sbr.rel (%p92) target = $region54
      $region53: #{custom-call.14} parent=5 // pred_region
        #allocation2 [shape = 'f32[8,8]{1,0}', space=vmem, size = 0x1000, scoped, tag = 'rescaled input a']
        %s96 = ssub.s32 %s3, 1
        %s97 = sand.u32 %s8, 1
        %s98 = sand.u32 %s8, 1
        %s99 = smul.addr %s98, 8
        %s100 = scalar_lea.vmem [#allocation0], %s99
        %s101 = sand.u32 %s8, 1
        %s102 = sand.u32 %s8, 1
        %s103 = smul.addr %s102, 8
        %s104 = scalar_lea.vmem [#allocation0], %s103
        %s105 = sand.u32 %s8, 1
        %s106 = sand.u32 %s8, 1
        %s107 = smul.addr %s106, 8
        %s108 = scalar_lea.vmem [#allocation1], %s107
        %v109 = vlaneseq
        %v110 = vand.u32 %v109, 127
        %vm111 = vcmp.lt.s32.totalorder %v110, 8
        %v112 = vlaneseq
        %v113 = vshrl.u32 %v112, 7
        %vm115 = vcmp.eq.s32.totalorder %v113, %v110
        %v116 = vld [vmem:[%s100] sm:$0xff]
        %v117 = vsel %vm115, %v116, 0.0
        %118 = vadd.xlane.f32.xlu0 %v117
        %v119 = vpop.xlane.xlu0 %118
        %vm120 = vcmp.le.s32.totalorder %v113, %v110
        %vm121 = vmand %vm120, %vm111
        %v122 = vsel %vm121, %v116, 0.0
        %v123 = vrcp.pop %v119
        %v124 = vmul.f32 %v119, %v123
        %v125 = vsub.f32 1.0, %v124
        %v126 = vmul.f32 %v123, %v125
        %v127 = vadd.f32 %v123, %v126
        %vm128 = vweird.f32 %v119
        %vm129 = vweird.f32 %v123
        %vm130 = vmor %vm128, %vm129
        %v131 = vsel %vm130, %v123, %v127
        %v132 = vand.u32 2147483647, %v119
        %vm133 = vcmp.eq.f32.partialorder %v132, 8.507059e+37
        %v134 = vand.u32 %v119, 2147483648
        %v135 = vor.u32 1.1754944e-38, %v134
        %v136 = vsel %vm133, %v135, %v131
        %v137 = vmul.f32 %v122, %v136
        %138 = vst [vmem:[#allocation2] sm:$0xff] %v137
        %v139 = vlaneseq
        %v140 = vand.u32 %v139, 127
        %v141 = vlaneseq
        %v142 = vshrl.u32 %v141, 7
        %vm144 = vcmp.eq.s32.totalorder %v140, %v142
        %v145 = vlaneseq
        %v146 = vand.u32 %v145, 127
        %vm147 = vcmp.eq.s32.totalorder %v146, 7
        %v148 = vsel %vm147, 1.0, -1.0
        %v149 = vsel %vm144, %v148, 0.0
        %s150 = scalar_lea.vmem [#allocation2], 6
        %v151 = vld [vmem:[%s150] ss:$0 sm:$0xff]
        %v152 = vxor.u32 %v151, 2147483648
        %v153 = vlaneseq
        %v154 = vand.u32 %v153, 127
        %vm155 = vcmp.eq.s32.totalorder %v154, 6
        %v156 = vmul.f32 %v152, %v149
        %157 = vadd.xlane.f32.xlu0 %v156
        %v158 = vpop.xlane.xlu0 %157
        %v159 = vsel %vm155, %v158, %v149
        %s160 = scalar_lea.vmem [#allocation2], 5
        %v161 = vld [vmem:[%s160] ss:$0 sm:$0xff]
        %v162 = vxor.u32 %v161, 2147483648
        %v163 = vlaneseq
        %v164 = vand.u32 %v163, 127
        %vm165 = vcmp.eq.s32.totalorder %v164, 5
        %v166 = vmul.f32 %v162, %v159
        %167 = vadd.xlane.f32.xlu0 %v166
        %v168 = vpop.xlane.xlu0 %167
        %v169 = vsel %vm165, %v168, %v159
        %s170 = scalar_lea.vmem [#allocation2], 4
        %v171 = vld [vmem:[%s170] ss:$0 sm:$0xff]
        %v172 = vxor.u32 %v171, 2147483648
        %v173 = vlaneseq
        %v174 = vand.u32 %v173, 127
        %vm175 = vcmp.eq.s32.totalorder %v174, 4
        %v176 = vmul.f32 %v172, %v169
        %177 = vadd.xlane.f32.xlu0 %v176
        %v178 = vpop.xlane.xlu0 %177
        %v179 = vsel %vm175, %v178, %v169
        %s180 = scalar_lea.vmem [#allocation2], 3
        %v181 = vld [vmem:[%s180] ss:$0 sm:$0xff]
        %v182 = vxor.u32 %v181, 2147483648
        %v183 = vlaneseq
        %v184 = vand.u32 %v183, 127
        %vm185 = vcmp.eq.s32.totalorder %v184, 3
        %v186 = vmul.f32 %v182, %v179
        %187 = vadd.xlane.f32.xlu0 %v186
        %v188 = vpop.xlane.xlu0 %187
        %v189 = vsel %vm185, %v188, %v179
        %s190 = scalar_lea.vmem [#allocation2], 2
        %v191 = vld [vmem:[%s190] ss:$0 sm:$0xff]
        %v192 = vxor.u32 %v191, 2147483648
        %v193 = vlaneseq
        %v194 = vand.u32 %v193, 127
        %vm195 = vcmp.eq.s32.totalorder %v194, 2
        %v196 = vmul.f32 %v192, %v189
        %197 = vadd.xlane.f32.xlu0 %v196
        %v198 = vpop.xlane.xlu0 %197
        %v199 = vsel %vm195, %v198, %v189
        %s200 = scalar_lea.vmem [#allocation2], 1
        %v201 = vld [vmem:[%s200] ss:$0 sm:$0xff]
        %v202 = vxor.u32 %v201, 2147483648
        %v203 = vlaneseq
        %v204 = vand.u32 %v203, 127
        %vm205 = vcmp.eq.s32.totalorder %v204, 1
        %v206 = vmul.f32 %v202, %v199
        %207 = vadd.xlane.f32.xlu0 %v206
        %v208 = vpop.xlane.xlu0 %207
        %v209 = vsel %vm205, %v208, %v199
        %v210 = vld [vmem:[#allocation2] ss:$0 sm:$0xff]
        %v211 = vxor.u32 %v210, 2147483648
        %v212 = vlaneseq
        %v213 = vand.u32 %v212, 127
        %vm214 = vcmp.eq.s32.totalorder %v213, 0
        %v215 = vmul.f32 %v211, %v209
        %216 = vadd.xlane.f32.xlu0 %v215
        %v217 = vpop.xlane.xlu0 %216
        %v218 = vsel %vm214, %v217, %v209
        %v219 = vrcp.pop %v119
        %v220 = vmul.f32 %v119, %v219
        %v221 = vsub.f32 1.0, %v220
        %v222 = vmul.f32 %v219, %v221
        %v223 = vadd.f32 %v219, %v222
        %vm224 = vweird.f32 %v119
        %vm225 = vweird.f32 %v219
        %vm226 = vmor %vm224, %vm225
        %v227 = vsel %vm226, %v219, %v223
        %v228 = vand.u32 2147483647, %v119
        %vm229 = vcmp.eq.f32.partialorder %v228, 8.507059e+37
        %v230 = vand.u32 %v119, 2147483648
        %v231 = vor.u32 1.1754944e-38, %v230
        %v232 = vsel %vm229, %v231, %v227
        %v233 = vmul.f32 %v218, %v232
        %vm234 = vweird.f32 %v119
        %v235 = vsel %vm234, %v218, %v233
        %236 = vst [vmem:[%s108] sm:$0xff] %v235
        %s237 = sand.u32 %s8, 1
        %s238 = sand.u32 %s8, 1
        %s239 = smul.addr %s238, 8
        %s240 = scalar_lea.vmem [#allocation1], %s239
        %s241 = sadd.s32 %s17, %s16
        %s242 = sadd.s32 %s241, %s15
        %s243 = sadd.s32 %s242, %s14
        %s244 = smul.addr %s243, 8
        %s245 = scalar_lea.vmem %s1, %s244
        // Predicated region
        $region55: #{custom-call.14} parent=53 // pred_check
          _
        $region56: #{custom-call.14} parent=53 // pred_check_branch
          %247 = sbr.rel (0) target = $region58
        $region57: #{custom-call.14} parent=53 // pred_region
          // Predicated region
          $region59: #{custom-call.14} parent=57 // pred_check
            _
          $region60: #{custom-call.14} parent=57 // pred_check_branch
            %249 = sbr.rel (0) target = $region62
          $region61: #{custom-call.14} parent=57 // pred_region
            // Predicated region
            $region74: #{custom-call.14} parent=61 // pred_check
              _
            $region75: #{custom-call.14} parent=61 // pred_check_branch
              %265 = sbr.rel (0) target = $region77
            $region76: #{custom-call.14} parent=61 // pred_region
              loop: start=0, step=1, limit=1
              $region78: #{custom-call.14} parent=76 // loop_pre_header
                _
              $region79: #{custom-call.14} parent=76 // loop_header
                %s267 = sphi 0, %s271
                %p268 = scmp.ge.s32.totalorder %s267, 1
                %s272 = sphi %s240, %s240
                %s273 = sphi %s245, %s245
              $region80: #{custom-call.14} parent=76 // loop_header_branch
                %270 = sbr.rel (%p268) target = $region84
              $region81: #{custom-call.14} parent=76 // loop_body
                %v274 = vld [vmem:[%s272] sm:$0xff]
                %275 = vst [vmem:[%s273] sm:$0xff] %v274
              $region82: #{custom-call.14} parent=76 // loop_footer
                %s271 = sadd.s32 1, %s267
              $region83: #{custom-call.14} parent=76 // loop_footer_branch
                %266 = sbr.rel target = $region79
              $region84: #{custom-call.14} parent=76 // loop_exit
                _
            $region77: #{custom-call.14} parent=61 // pred_fallthru
              _
            // Predicated region
            $region85: #{custom-call.14} parent=61 // pred_check
              _
            $region86: #{custom-call.14} parent=61 // pred_check_branch
              %277 = sbr.rel target = $region88
            $region87: #{custom-call.14} parent=61 // pred_region
              _
            $region88: #{custom-call.14} parent=61 // pred_fallthru
              _
          $region62: #{custom-call.14} parent=57 // pred_fallthru
            _
          // Predicated region
          $region63: #{custom-call.14} parent=57 // pred_check
            _
          $region64: #{custom-call.14} parent=57 // pred_check_branch
            %251 = sbr.rel target = $region66
          $region65: #{custom-call.14} parent=57 // pred_region
            %s253 = ssub.s32 256, 1
            loop: start=0, step=1, limit=1
            $region67: #{custom-call.14} parent=65 // loop_pre_header
              _
            $region68: #{custom-call.14} parent=65 // loop_header
              %s255 = sphi 0, %s259
              %p256 = scmp.ge.s32.totalorder %s255, 1
              %s260 = sphi %s240, %s240
              %s261 = sphi %s245, %s245
            $region69: #{custom-call.14} parent=65 // loop_header_branch
              %258 = sbr.rel (%p256) target = $region73
            $region70: #{custom-call.14} parent=65 // loop_body
              %v262 = vld [vmem:[%s260] sm:%s253]
              %263 = vst [vmem:[%s261] sm:%s253] %v262
            $region71: #{custom-call.14} parent=65 // loop_footer
              %s259 = sadd.s32 1, %s255
            $region72: #{custom-call.14} parent=65 // loop_footer_branch
              %254 = sbr.rel target = $region68
            $region73: #{custom-call.14} parent=65 // loop_exit
              _
          $region66: #{custom-call.14} parent=57 // pred_fallthru
            _
        $region58: #{custom-call.14} parent=53 // pred_fallthru
          _
        %278 = vnop
      $region54: #{custom-call.14} parent=5 // pred_fallthru
        _
      %p279 = scmp.le.s32.totalorder 2, %s3
      // Predicated region
      $region89: #{custom-call.14} parent=5 // pred_check
        %p280 = pneg %p279
      $region90: #{custom-call.14} parent=5 // pred_check_branch
        %282 = sbr.rel (%p280) target = $region92
      $region91: #{custom-call.14} parent=5 // pred_region
        %s283 = ssub.s32 %s3, 2
        %s284 = sand.u32 %s9, 1
        %s285 = sand.u32 %s9, 1
        %s286 = smul.addr %s285, 8
        %s287 = scalar_lea.vmem [#allocation1], %s286
      $region92: #{custom-call.14} parent=5 // pred_fallthru
        _
    $region6: #{custom-call.14} parent=1 // loop_footer
      %s7 = sadd.s32 1, %s3
    $region7: #{custom-call.14} parent=1 // loop_footer_branch
      %2 = sbr.rel target = $region3
    $region8: #{custom-call.14} parent=1 // loop_exit
      _

// kernel: gmm_est_forward.5
$region0: #{gmm_est_forward.5}
  #allocation0 [shape = 'u32[]', space=smem, size = 0x4, offset = 0x4, fixed_abs, tag = 'smem constant byte address 0x4 - core index']
  #allocation1 [shape = 'u32[72,128]{1,0:T(1,128)}', space=vmem, size = 0x9000, scoped, tag = 'internal scratch']
  #allocation2 [shape = 'f32[1,1]{1,0:T(1,128)S(1)}', space=vmem, size = 0x200, scoped, tag = 'scoped memory for gmm_est_forward.5']
  %s0 = inlined_call_operand.vmem [shape: f32[8,384], index: 0, kind: input, shape index: {}]
  %s1 = inlined_call_operand.vmem [shape: f32[8,4], index: 1, kind: input, shape index: {}]
  %s2 = inlined_call_operand.vmem [shape: f32[32,8], index: 2, kind: input, shape index: {}]
  %s3 = inlined_call_operand.vmem [shape: f32[4,1], index: 3, kind: input, shape index: {}]
  %s4 = inlined_call_operand.<no memory space> [shape: f32[1,1], index: 4, kind: input, shape index: {}]
  %s5 = inlined_call_operand.vmem [shape: f32[1,384], index: 5, kind: output, shape index: {}]
  %s6 = sld [smem:[#allocation0]]
  $region53: #{gmm_est_forward.5} parent=0
    _
  %s8 = ssub.s32 1, %s6
  %s9 = scalar_select 0, %s8, %s6
  %v10 = vstv %s4
  %11 = vst [vmem:[#allocation2] sm:$0x1] %v10
  loop: start=0, step=1, limit=5
  $region2: #{gmm_est_forward.5} parent=0 // loop_pre_header
    _
  $region3: #{gmm_est_forward.5} parent=0 // loop_header
    %s13 = sphi 0, %s17
    %p14 = scmp.ge.s32.totalorder %s13, 5
    %s23 = sphi 0, %s25
    %s26 = sphi 0, %s23
    %s27 = sphi 0, %s26
    %s43 = sphi 0, %s27
    %s47 = sphi 0, %s47
    %s49 = sphi 0, %s47
    %s50 = sphi 0, %s49
    %s64 = sphi 0, %s50
    %s68 = sphi 0, %s68
    %s70 = sphi 0, %s68
    %s71 = sphi 0, %s70
    %s85 = sphi 0, %s71
    %s89 = sphi 0, %s89
    %s91 = sphi 0, %s89
    %s92 = sphi 0, %s91
    %s106 = sphi 0, %s92
    %s110 = sphi 0, %s110
    %s112 = sphi 0, %s110
    %s113 = sphi 0, %s112
    %s127 = sphi 0, %s113
    %s133 = sphi 0, %s135
    %s136 = sphi 0, %s133
    %s137 = sphi 0, %s136
    %s153 = sphi 0, %s137
  $region4: #{gmm_est_forward.5} parent=0 // loop_header_branch
    %16 = sbr.rel (%p14) target = $region8
  $region5: #{gmm_est_forward.5} parent=0 // loop_body
    %s18 = ssub.s32 %s13, 1
    %s19 = ssub.s32 %s13, 2
    %s20 = sadd.s32 %s13, 1
    %s21 = ssub.s32 %s13, %s20
    %p22 = scmp.eq.s32.totalorder %s21, 0
    %s24 = sadd.s32 %s23, 1
    %s25 = scalar_select %p22, %s23, %s24
    %p28 = pneg %p22
    %p29 = scmp.eq.s32.totalorder %s13, 2
    %p30 = por %p28, %p29
    %p31 = scmp.ne.s32.totalorder %s23, %s26
    %p32 = scmp.eq.s32.totalorder %s13, 0
    %p33 = por %p31, %p32
    %p34 = scmp.ne.s32.totalorder %s23, %s26
    %p35 = scmp.eq.s32.totalorder %s18, 2
    %p36 = por %p34, %p35
    %p37 = scmp.ne.s32.totalorder %s26, %s27
    %p38 = scmp.eq.s32.totalorder %s18, 0
    %p39 = por %p37, %p38
    %p40 = scmp.ne.s32.totalorder %s26, %s27
    %p41 = scmp.eq.s32.totalorder %s19, 2
    %p42 = por %p40, %p41
    %p44 = scmp.ne.s32.totalorder %s27, %s43
    %p45 = scmp.eq.s32.totalorder %s19, 0
    %p46 = por %p44, %p45
    %s48 = sadd.s32 %s47, 1
    %p51 = scmp.eq.s32.totalorder %s13, 2
    %p52 = scmp.ne.s32.totalorder %s47, %s49
    %p53 = scmp.eq.s32.totalorder %s13, 0
    %p54 = por %p52, %p53
    %p55 = scmp.ne.s32.totalorder %s47, %s49
    %p56 = scmp.eq.s32.totalorder %s18, 2
    %p57 = por %p55, %p56
    %p58 = scmp.ne.s32.totalorder %s49, %s50
    %p59 = scmp.eq.s32.totalorder %s18, 0
    %p60 = por %p58, %p59
    %p61 = scmp.ne.s32.totalorder %s49, %s50
    %p62 = scmp.eq.s32.totalorder %s19, 2
    %p63 = por %p61, %p62
    %p65 = scmp.ne.s32.totalorder %s50, %s64
    %p66 = scmp.eq.s32.totalorder %s19, 0
    %p67 = por %p65, %p66
    %s69 = sadd.s32 %s68, 1
    %p72 = scmp.eq.s32.totalorder %s13, 2
    %p73 = scmp.ne.s32.totalorder %s68, %s70
    %p74 = scmp.eq.s32.totalorder %s13, 0
    %p75 = por %p73, %p74
    %p76 = scmp.ne.s32.totalorder %s68, %s70
    %p77 = scmp.eq.s32.totalorder %s18, 2
    %p78 = por %p76, %p77
    %p79 = scmp.ne.s32.totalorder %s70, %s71
    %p80 = scmp.eq.s32.totalorder %s18, 0
    %p81 = por %p79, %p80
    %p82 = scmp.ne.s32.totalorder %s70, %s71
    %p83 = scmp.eq.s32.totalorder %s19, 2
    %p84 = por %p82, %p83
    %p86 = scmp.ne.s32.totalorder %s71, %s85
    %p87 = scmp.eq.s32.totalorder %s19, 0
    %p88 = por %p86, %p87
    %s90 = sadd.s32 %s89, 1
    %p93 = scmp.eq.s32.totalorder %s13, 2
    %p94 = scmp.ne.s32.totalorder %s89, %s91
    %p95 = scmp.eq.s32.totalorder %s13, 0
    %p96 = por %p94, %p95
    %p97 = scmp.ne.s32.totalorder %s89, %s91
    %p98 = scmp.eq.s32.totalorder %s18, 2
    %p99 = por %p97, %p98
    %p100 = scmp.ne.s32.totalorder %s91, %s92
    %p101 = scmp.eq.s32.totalorder %s18, 0
    %p102 = por %p100, %p101
    %p103 = scmp.ne.s32.totalorder %s91, %s92
    %p104 = scmp.eq.s32.totalorder %s19, 2
    %p105 = por %p103, %p104
    %p107 = scmp.ne.s32.totalorder %s92, %s106
    %p108 = scmp.eq.s32.totalorder %s19, 0
    %p109 = por %p107, %p108
    %s111 = sadd.s32 %s110, 1
    %p114 = scmp.eq.s32.totalorder %s13, 2
    %p115 = scmp.ne.s32.totalorder %s110, %s112
    %p116 = scmp.eq.s32.totalorder %s13, 0
    %p117 = por %p115, %p116
    %p118 = scmp.ne.s32.totalorder %s110, %s112
    %p119 = scmp.eq.s32.totalorder %s18, 2
    %p120 = por %p118, %p119
    %p121 = scmp.ne.s32.totalorder %s112, %s113
    %p122 = scmp.eq.s32.totalorder %s18, 0
    %p123 = por %p121, %p122
    %p124 = scmp.ne.s32.totalorder %s112, %s113
    %p125 = scmp.eq.s32.totalorder %s19, 2
    %p126 = por %p124, %p125
    %p128 = scmp.ne.s32.totalorder %s113, %s127
    %p129 = scmp.eq.s32.totalorder %s19, 0
    %p130 = por %p128, %p129
    %s131 = ssub.s32 %s13, %s20
    %p132 = scmp.eq.s32.totalorder %s131, 0
    %s134 = sadd.s32 %s133, 1
    %s135 = scalar_select %p132, %s133, %s134
    %p138 = pneg %p132
    %p139 = scmp.eq.s32.totalorder %s13, 2
    %p140 = por %p138, %p139
    %p141 = scmp.ne.s32.totalorder %s133, %s136
    %p142 = scmp.eq.s32.totalorder %s13, 0
    %p143 = por %p141, %p142
    %p144 = scmp.ne.s32.totalorder %s133, %s136
    %p145 = scmp.eq.s32.totalorder %s18, 2
    %p146 = por %p144, %p145
    %p147 = scmp.ne.s32.totalorder %s136, %s137
    %p148 = scmp.eq.s32.totalorder %s18, 0
    %p149 = por %p147, %p148
    %p150 = scmp.ne.s32.totalorder %s136, %s137
    %p151 = scmp.eq.s32.totalorder %s19, 2
    %p152 = por %p150, %p151
    %p154 = scmp.ne.s32.totalorder %s137, %s153
    %p155 = scmp.eq.s32.totalorder %s19, 0
    %p156 = por %p154, %p155
    %p157 = scmp.le.s32.totalorder 1, %s13
    %p158 = scmp.lt.s32.totalorder %s13, 4
    %p159 = pnand %p157, %p158
    %p160 = pneg %p159
    // Predicated region
    $region9: #{gmm_est_forward.5} parent=5 // pred_check
      _
    $region10: #{gmm_est_forward.5} parent=5 // pred_check_branch
      %162 = sbr.rel (%p159) target = $region12
    $region11: #{gmm_est_forward.5} parent=5 // pred_region
      %s163 = ssub.s32 %s13, 1
      // Predicated region
      $region13: #{gmm_est_forward.5} parent=11 // pred_check
        %p164 = pneg %p60
      $region14: #{gmm_est_forward.5} parent=11 // pred_check_branch
        %166 = sbr.rel (%p164) target = $region16
      $region15: #{gmm_est_forward.5} parent=11 // pred_region
        _
      $region16: #{gmm_est_forward.5} parent=11 // pred_fallthru
        _
      // Predicated region
      $region17: #{gmm_est_forward.5} parent=11 // pred_check
        %p167 = pneg %p81
      $region18: #{gmm_est_forward.5} parent=11 // pred_check_branch
        %169 = sbr.rel (%p167) target = $region20
      $region19: #{gmm_est_forward.5} parent=11 // pred_region
        _
      $region20: #{gmm_est_forward.5} parent=11 // pred_fallthru
        _
      // Predicated region
      $region21: #{gmm_est_forward.5} parent=11 // pred_check
        %p170 = pneg %p102
      $region22: #{gmm_est_forward.5} parent=11 // pred_check_branch
        %172 = sbr.rel (%p170) target = $region24
      $region23: #{gmm_est_forward.5} parent=11 // pred_region
        _
      $region24: #{gmm_est_forward.5} parent=11 // pred_fallthru
        _
      // Predicated region
      $region25: #{gmm_est_forward.5} parent=11 // pred_check
        %p173 = pneg %p123
      $region26: #{gmm_est_forward.5} parent=11 // pred_check_branch
        %175 = sbr.rel (%p173) target = $region28
      $region27: #{gmm_est_forward.5} parent=11 // pred_region
        _
      $region28: #{gmm_est_forward.5} parent=11 // pred_fallthru
        _
    $region12: #{gmm_est_forward.5} parent=5 // pred_fallthru
      _
    %p176 = scmp.lt.s32.totalorder %s13, 3
    // Predicated region
    $region29: #{gmm_est_forward.5} parent=5 // pred_check
      %p177 = pneg %p176
    $region30: #{gmm_est_forward.5} parent=5 // pred_check_branch
      %179 = sbr.rel (%p177) target = $region32
    $region31: #{gmm_est_forward.5} parent=5 // pred_region
      // Predicated region
      $region33: #{gmm_est_forward.5} parent=31 // pred_check
        %p180 = pneg %p33
      $region34: #{gmm_est_forward.5} parent=31 // pred_check_branch
        %182 = sbr.rel (%p180) target = $region36
      $region35: #{gmm_est_forward.5} parent=31 // pred_region
        %p183 = scmp.lt.s32.totalorder %s13, 2
        %s184 = scalar_select %p183, %s13, 2
        %s185 = smul.addr %s184, 8
        %s186 = scalar_lea.vmem %s0, %s185
      $region36: #{gmm_est_forward.5} parent=31 // pred_fallthru
        _
    $region32: #{gmm_est_forward.5} parent=5 // pred_fallthru
      _
    %p187 = scmp.le.s32.totalorder 1, %s13
    %p188 = scmp.lt.s32.totalorder %s13, 4
    %p189 = pnand %p187, %p188
    %p190 = pneg %p189
    // Predicated region
    $region37: #{gmm_est_forward.5} parent=5 // pred_check
      _
    $region38: #{gmm_est_forward.5} parent=5 // pred_check_branch
      %192 = sbr.rel (%p189) target = $region40
    $region39: #{gmm_est_forward.5} parent=5 // pred_region
      %s193 = ssub.s32 %s13, 1
      %p194 = scmp.lt.s32.totalorder %s18, 2
      %s195 = scalar_select %p194, %s18, 2
      %s196 = smul.addr %s195, 8
      %s197 = scalar_lea.vmem %s0, %s196
      %p198 = pneg %p39
      %p199 = pneg %p36
      %p200 = pneg %p60
      %p201 = pneg %p57
      %p202 = pneg %p81
      %p203 = pneg %p78
      %p204 = pneg %p102
      %p205 = pneg %p99
      %p206 = pneg %p123
      %p207 = pneg %p120
      %p208 = pneg %p149
      %p209 = pneg %p146
      %p210 = scmp.lt.s32.totalorder %s18, 2
      %s211 = scalar_select %p210, %s18, 2
      %s212 = scalar_lea.vmem %s5, %s211
      %p213 = scmp.lt.s32.totalorder %s18, 2
      %s214 = scalar_select %p213, %s18, 2
      %s215 = smul.addr %s214, 8
      %s216 = scalar_lea.vmem %s0, %s215
      %p217 = scmp.lt.s32.totalorder %s18, 2
      %s218 = scalar_select %p217, %s18, 2
      %s219 = scalar_lea.vmem %s5, %s218
      %v220 = vld [vmem:[%s216] sm:$0xff]
      %v221 = vld [vmem:[%s1] sm:$0xff]
      %223 = vset.pattern.permute.xlu0 0
      %224 = vperm.xlu0 %223, %v221
      %v225 = vpop.permute.xlu0 %224
      %v227 = vsub.f32 %v220, %v225
      %v228 = vld [vmem:[%s2] sm:$0xff]
      %vm229 = vcmask 64512
      %v231 = vsel %vm229, %v228, 0
      %233 = vmatpush.msra.mxu0 0.0
      %234 = vmatpush.msra.mxu0 0.0
      %235 = vmatpush.msra.mxu0 0.0
      %236 = vmatpush.msra.mxu0 0.0
      %237 = vmatpush.msra.mxu0 0.0
      %238 = vmatpush.msra.mxu0 0.0
      %239 = vmatpush.msra.mxu0 0.0
      %240 = vmatpush.msra.mxu0 0.0
      %241 = vmatpush.msra.mxu0 0.0
      %242 = vmatpush.msra.mxu0 0.0
      %243 = vmatpush.msra.mxu0 0.0
      %244 = vmatpush.msra.mxu0 0.0
      %245 = vmatpush.msra.mxu0 0.0
      %246 = vmatpush.msra.mxu0 0.0
      %247 = vmatpush.msra.mxu0 0.0
      %248 = vmatpush.msra.mxu0 %v227
      %249 = vmatmul.f32.gmra.mxu0 %v231
      %v250 = vpop.f32.mrf.mxu0
      %v251 = vadd.f32 0.0, %v250
      %252 = vdwg.mxu0
      %v253 = vmul.f32 %v251, %v227
      %v254 = vrot.slane %v253, 4
      %v255 = vadd.f32 %v253, %v254
      %v256 = vrot.slane %v255, 2
      %v257 = vadd.f32 %v255, %v256
      %v258 = vrot.slane %v257, 1
      %v259 = vadd.f32 %v257, %v258
      %v260 = vmul.f32 %v259, -0.5
      %261 = vset.pattern.permute.xlu0 1
      %262 = vperm.xlu0 %261, %v221
      %v263 = vpop.permute.xlu0 %262
      %v265 = vsub.f32 %v220, %v263
      %v266 = vld [vmem:[%s2 + $0x8] sm:$0xff]
      %v268 = vsel %vm229, %v266, 0
      %270 = vmatpush.msra.mxu0 0.0
      %271 = vmatpush.msra.mxu0 0.0
      %272 = vmatpush.msra.mxu0 0.0
      %273 = vmatpush.msra.mxu0 0.0
      %274 = vmatpush.msra.mxu0 0.0
      %275 = vmatpush.msra.mxu0 0.0
      %276 = vmatpush.msra.mxu0 0.0
      %277 = vmatpush.msra.mxu0 0.0
      %278 = vmatpush.msra.mxu0 0.0
      %279 = vmatpush.msra.mxu0 0.0
      %280 = vmatpush.msra.mxu0 0.0
      %281 = vmatpush.msra.mxu0 0.0
      %282 = vmatpush.msra.mxu0 0.0
      %283 = vmatpush.msra.mxu0 0.0
      %284 = vmatpush.msra.mxu0 0.0
      %285 = vmatpush.msra.mxu0 %v265
      %286 = vmatmul.f32.gmra.mxu0 %v268
      %v287 = vpop.f32.mrf.mxu0
      %v288 = vadd.f32 0.0, %v287
      %289 = vdwg.mxu0
      %v290 = vmul.f32 %v288, %v265
      %v291 = vrot.slane %v290, 4
      %v292 = vadd.f32 %v290, %v291
      %v293 = vrot.slane %v292, 2
      %v294 = vadd.f32 %v292, %v293
      %v295 = vrot.slane %v294, 1
      %v296 = vadd.f32 %v294, %v295
      %v297 = vmul.f32 %v296, -0.5
      %298 = vset.pattern.permute.xlu0 2
      %299 = vperm.xlu0 %298, %v221
      %v300 = vpop.permute.xlu0 %299
      %v302 = vsub.f32 %v220, %v300
      %v303 = vld [vmem:[%s2 + $0x10] sm:$0xff]
      %v305 = vsel %vm229, %v303, 0
      %307 = vmatpush.msra.mxu0 0.0
      %308 = vmatpush.msra.mxu0 0.0
      %309 = vmatpush.msra.mxu0 0.0
      %310 = vmatpush.msra.mxu0 0.0
      %311 = vmatpush.msra.mxu0 0.0
      %312 = vmatpush.msra.mxu0 0.0
      %313 = vmatpush.msra.mxu0 0.0
      %314 = vmatpush.msra.mxu0 0.0
      %315 = vmatpush.msra.mxu0 0.0
      %316 = vmatpush.msra.mxu0 0.0
      %317 = vmatpush.msra.mxu0 0.0
      %318 = vmatpush.msra.mxu0 0.0
      %319 = vmatpush.msra.mxu0 0.0
      %320 = vmatpush.msra.mxu0 0.0
      %321 = vmatpush.msra.mxu0 0.0
      %322 = vmatpush.msra.mxu0 %v302
      %323 = vmatmul.f32.gmra.mxu0 %v305
      %v324 = vpop.f32.mrf.mxu0
      %v325 = vadd.f32 0.0, %v324
      %326 = vdwg.mxu0
      %v327 = vmul.f32 %v325, %v302
      %v328 = vrot.slane %v327, 4
      %v329 = vadd.f32 %v327, %v328
      %v330 = vrot.slane %v329, 2
      %v331 = vadd.f32 %v329, %v330
      %v332 = vrot.slane %v331, 1
      %v333 = vadd.f32 %v331, %v332
      %v334 = vmul.f32 %v333, -0.5
      %335 = vset.pattern.permute.xlu0 3
      %336 = vperm.xlu0 %335, %v221
      %v337 = vpop.permute.xlu0 %336
      %v339 = vsub.f32 %v220, %v337
      %v340 = vld [vmem:[%s2 + $0x18] sm:$0xff]
      %v342 = vsel %vm229, %v340, 0
      %344 = vmatpush.msra.mxu0 0.0
      %345 = vmatpush.msra.mxu0 0.0
      %346 = vmatpush.msra.mxu0 0.0
      %347 = vmatpush.msra.mxu0 0.0
      %348 = vmatpush.msra.mxu0 0.0
      %349 = vmatpush.msra.mxu0 0.0
      %350 = vmatpush.msra.mxu0 0.0
      %351 = vmatpush.msra.mxu0 0.0
      %352 = vmatpush.msra.mxu0 0.0
      %353 = vmatpush.msra.mxu0 0.0
      %354 = vmatpush.msra.mxu0 0.0
      %355 = vmatpush.msra.mxu0 0.0
      %356 = vmatpush.msra.mxu0 0.0
      %357 = vmatpush.msra.mxu0 0.0
      %358 = vmatpush.msra.mxu0 0.0
      %359 = vmatpush.msra.mxu0 %v339
      %360 = vmatmul.f32.gmra.mxu0 %v342
      %v361 = vpop.f32.mrf.mxu0
      %v362 = vadd.f32 0.0, %v361
      %363 = vdwg.mxu0
      %v364 = vmul.f32 %v362, %v339
      %v365 = vrot.slane %v364, 4
      %v366 = vadd.f32 %v364, %v365
      %v367 = vrot.slane %v366, 2
      %v368 = vadd.f32 %v366, %v367
      %v369 = vrot.slane %v368, 1
      %v370 = vadd.f32 %v368, %v369
      %v371 = vmul.f32 %v370, -0.5
      %v372 = vmax.f32 %v260, 0.0
      %v373 = vmax.f32 %v372, %v297
      %v374 = vmax.f32 %v373, %v334
      %v375 = vmax.f32 %v374, %v371
      %v376 = vld [vmem:[%s3] sm:$0x1]
      %v377 = vsub.f32 %v260, %v375
      %v378 = vmul.f32 %v377, 1.442695
      %v379 = vpow.pop %v378
      %381 = vset.pattern.permute.xlu0 0
      %382 = vperm.xlu0 %381, %v376
      %v383 = vpop.permute.xlu0 %382
      %v385 = vmul.f32 %v383, %v379
      %v386 = vadd.f32 %v385, 0.0
      %v387 = vld [vmem:[%s3 + $0x1] sm:$0x1]
      %v388 = vsub.f32 %v297, %v375
      %v389 = vmul.f32 %v388, 1.442695
      %v390 = vpow.pop %v389
      %392 = vset.pattern.permute.xlu0 0
      %393 = vperm.xlu0 %392, %v387
      %v394 = vpop.permute.xlu0 %393
      %v396 = vmul.f32 %v394, %v390
      %v397 = vadd.f32 %v386, %v396
      %v398 = vld [vmem:[%s3 + $0x2] sm:$0x1]
      %v399 = vsub.f32 %v334, %v375
      %v400 = vmul.f32 %v399, 1.442695
      %v401 = vpow.pop %v400
      %403 = vset.pattern.permute.xlu0 0
      %404 = vperm.xlu0 %403, %v398
      %v405 = vpop.permute.xlu0 %404
      %v407 = vmul.f32 %v405, %v401
      %v408 = vadd.f32 %v397, %v407
      %v409 = vld [vmem:[%s3 + $0x3] sm:$0x1]
      %v410 = vsub.f32 %v371, %v375
      %v411 = vmul.f32 %v410, 1.442695
      %v412 = vpow.pop %v411
      %414 = vset.pattern.permute.xlu0 0
      %415 = vperm.xlu0 %414, %v409
      %v416 = vpop.permute.xlu0 %415
      %v418 = vmul.f32 %v416, %v412
      %v419 = vadd.f32 %v408, %v418
      %v420 = vsub.f32 0.0, %v375
      %v421 = vadd.f32 %v419, 1e-12
      %v422 = vlog2.pop %v421
      %v423 = vmul.f32 %v422, 0.6931472
      %v424 = vsub.f32 %v420, %v423
      %v425 = vmul.f32 %v424, 0.2
      %v426 = vld [vmem:[#allocation2] sm:$0x1]
      %428 = vset.pattern.permute.xlu0 0
      %429 = vperm.xlu0 %428, %v426
      %v430 = vpop.permute.xlu0 %429
      %v432 = vperm.slane %v430, 0
      %v433 = vadd.f32 %v425, %v432
      %434 = vst [vmem:[%s219] sm:$0x1] %v433
      %p435 = scmp.lt.s32.totalorder %s18, 2
      %s436 = scalar_select %p435, %s18, 2
      %s437 = scalar_lea.vmem %s5, %s436
      // Predicated region
      $region41: #{gmm_est_forward.5} parent=39 // pred_check
        %p438 = pneg %p146
      $region42: #{gmm_est_forward.5} parent=39 // pred_check_branch
        %440 = sbr.rel (%p438) target = $region44
      $region43: #{gmm_est_forward.5} parent=39 // pred_region
        _
      $region44: #{gmm_est_forward.5} parent=39 // pred_fallthru
        _
    $region40: #{gmm_est_forward.5} parent=5 // pred_fallthru
      _
    %p441 = scmp.le.s32.totalorder 2, %s13
    // Predicated region
    $region45: #{gmm_est_forward.5} parent=5 // pred_check
      %p442 = pneg %p441
    $region46: #{gmm_est_forward.5} parent=5 // pred_check_branch
      %444 = sbr.rel (%p442) target = $region48
    $region47: #{gmm_est_forward.5} parent=5 // pred_region
      %s445 = ssub.s32 %s13, 2
      // Predicated region
      $region49: #{gmm_est_forward.5} parent=47 // pred_check
        %p446 = pneg %p152
      $region50: #{gmm_est_forward.5} parent=47 // pred_check_branch
        %448 = sbr.rel (%p446) target = $region52
      $region51: #{gmm_est_forward.5} parent=47 // pred_region
        %p449 = scmp.lt.s32.totalorder %s19, 2
        %s450 = scalar_select %p449, %s19, 2
        %s451 = scalar_lea.vmem %s5, %s450
      $region52: #{gmm_est_forward.5} parent=47 // pred_fallthru
        _
    $region48: #{gmm_est_forward.5} parent=5 // pred_fallthru
      _
  $region6: #{gmm_est_forward.5} parent=0 // loop_footer
    %s17 = sadd.s32 1, %s13
  $region7: #{gmm_est_forward.5} parent=0 // loop_footer_branch
    %12 = sbr.rel target = $region3
  $region8: #{gmm_est_forward.5} parent=0 // loop_exit
    _

</llo_original>
